<compile_context>
chip_gen: v7x
topology: tpu7x:2x2x1
jax: 0.10.0
libtpu: 0.0.40
codegen_flags: <defaults>
</compile_context>

<pallas_src>
import functools

import jax
import jax.numpy as jnp
from jax.experimental import pallas as pl
from jax.experimental.pallas import tpu as pltpu

ALPHA = 0.1      # LeakyReLU negative slope
BN_EPS = 1e-5


def _round_up(x, m):
    return (x + m - 1) // m * m


# --------------------------- fused DarkUnit Pallas kernel ---------------------------

def _dark_unit_kernel(x_ref, mask_ref, w1_ref, b1_ref, w2_ref, b2_ref, o_ref,
                      tall_ref, z_ref, *, row_stride, mid_c, cout):
    """One grid step == one image, spatial dims padded to (Hp, Wp) and flattened to rows.

      x_ref   : (1, Mp, Cin)             f32   padded+flattened input (exact residual copy)
      mask_ref: (Mp, 1)                  f32   1.0 at interior pixels, 0.0 on the halo
      w1_ref  : (Cin, 3*Mid)             bf16  1x1 weights (BN folded), tiled 3x along N
      b1_ref  : (1, 3*Mid)               f32
      w2_ref  : (3*Mid, 3*Cout)          bf16  3x3 weights: rows (ky,ci), cols (kx,co), BN folded
      b2_ref  : (1, Cout)                f32
      o_ref   : (1, H*Wp, Cout)          bf16  output rows (top/bottom halo rows not written)
      tall_ref: (Mp + 2*Wp, 3*Mid)       bf16  row q, lanes [k*Mid:(k+1)*Mid) hold the masked
                                               conv1 output at flat index q - (2-k)*Wp
                                               (i.e. the three ky taps folded into K)
      z_ref   : (H*Wp + 16, 3*Cout)      f32   per-kx partial sums of the 3x3 conv
    """
    m = x_ref.shape[1]                 # Mp = Hp * Wp
    mo = o_ref.shape[1]                # H  * Wp
    ws = row_stride                    # Wp, a multiple of 16 (bf16 native tile)
    g2 = 8                             # z_ref guard rows (top & bottom)

    x32 = x_ref[0]                                            # (Mp, Cin) f32
    xb = x32.astype(jnp.bfloat16)                             # MXU operand only

    # ---- conv1x1 (+ folded BN) + LeakyReLU: bf16 MXU operands, f32 accumulation ----
    # Weights are tiled 3x along N so the three (identical) ky lane blocks fall straight
    # out of one matmul (N = 3*Mid <= 128 costs no extra MXU passes and no lane rotates).
    y1 = jnp.dot(xb, w1_ref[...], preferred_element_type=jnp.float32) + b1_ref[...]
    y1 = jnp.maximum(y1, ALPHA * y1)
    y1 = (y1 * mask_ref[...]).astype(jnp.bfloat16)            # (Mp, 3*Mid); halo pixels -> 0

    # ---- scatter the ky taps into the contraction dim (all offsets 16-row aligned) ----
    # tall[q, ky*Mid:(ky+1)*Mid] = mid_masked[q + (ky - 2)*ws]
    tall_ref[2 * ws:2 * ws + m, 0:mid_c] = y1[:, 0:mid_c]                  # ky = 0
    tall_ref[ws:ws + m, mid_c:2 * mid_c] = y1[:, mid_c:2 * mid_c]          # ky = 1
    tall_ref[0:m, 2 * mid_c:3 * mid_c] = y1[:, 2 * mid_c:3 * mid_c]        # ky = 2
    # Every row read below is rewritten above on every grid step -> no zeroing needed.

    # ---- conv3x3 (+ folded BN) as ONE MXU matmul: K = 3*Mid, N = 3*Cout ----
    # Z[p, kx*Cout + co] = sum_{ky,ci} mid[p + (ky-1)*ws, ci] * W2[ky,kx,ci,co]
    t = tall_ref[2 * ws:2 * ws + mo, :]                       # aligned bf16 read
    z_ref[g2:g2 + mo, :] = jnp.dot(t, w2_ref[...], preferred_element_type=jnp.float32)

    # Guard rows only feed the discarded halo output rows; zero them so they stay finite.
    zeros_g = jnp.zeros((g2, z_ref.shape[1]), z_ref.dtype)
    z_ref[0:g2, :] = zeros_g
    z_ref[g2 + mo:g2 + mo + g2, :] = zeros_g

    # ---- recombine the kx taps on the output side: out[p] = z0[p-1] + z1[p] + z2[p+1] ----
    acc = (z_ref[g2 - 1:g2 - 1 + mo, 0:cout]
           + z_ref[g2:g2 + mo, cout:2 * cout]
           + z_ref[g2 + 1:g2 + 1 + mo, 2 * cout:3 * cout]
           + b2_ref[...])
    acc = jnp.maximum(acc, ALPHA * acc)

    # ---- residual add with the untouched f32 input; single bf16 rounding at the store ----
    acc = acc + x32[ws:ws + mo, :]
    o_ref[0] = acc.astype(o_ref.dtype)


# --------------------------------- JAX wrapper ---------------------------------

def dark_unit_forward(params, x_nchw):
    """DarkUnit forward.  x_nchw: (N, C, H, W) float32 (PyTorch layout)."""
    w1, w2 = params["w1"], params["w2"]          # torch layouts: (Mid,Cin,1,1), (Cout,Mid,3,3)
    mid_c, cin = w1.shape[0], w1.shape[1]
    cout = w2.shape[0]
    N, C, H, W = x_nchw.shape
    assert C == cin and cin == cout, "DarkUnit residual needs in_channels == out_channels"

    # Fold BN (inference) into per-channel scale/bias, then the scale into the weights.
    s1 = params["gamma1"] * jax.lax.rsqrt(params["var1"] + BN_EPS)
    b1 = (params["beta1"] - params["mean1"] * s1).reshape(1, mid_c).astype(jnp.float32)
    s2 = params["gamma2"] * jax.lax.rsqrt(params["var2"] + BN_EPS)
    b2 = (params["beta2"] - params["mean2"] * s2).reshape(1, cout).astype(jnp.float32)

    w1_mat = w1[:, :, 0, 0].T * s1[None, :]                                # (Cin, Mid)
    w1_wide = jnp.tile(w1_mat, (1, 3)).astype(jnp.bfloat16)                # (Cin, 3*Mid)
    b1_wide = jnp.tile(b1, (1, 3))                                         # (1, 3*Mid)

    w2_hwio = jnp.transpose(w2, (2, 3, 1, 0)) * s2[None, None, None, :]    # (3,3,Mid,Cout) [ky,kx,ci,co]
    w2_fold = jnp.transpose(w2_hwio, (0, 2, 1, 3)).reshape(3 * mid_c, 3 * cout)
    w2_fold = w2_fold.astype(jnp.bfloat16)                                 # rows (ky,ci), cols (kx,co)

    # Spatial 1-pixel halo pad; the padded row stride is rounded up to 16 rows so every
    # ky shift (+-Wp) of the bf16 scratch is native-tile aligned.  No im2col.
    Hp = H + 2
    Wp = _round_up(W + 2, 16)
    m = Hp * Wp                        # flattened rows incl. halo
    mo = H * Wp                        # output rows actually written (halo rows skipped)

    x_nhwc = jnp.transpose(x_nchw, (0, 2, 3, 1)).astype(jnp.float32)
    xp = jnp.pad(x_nhwc, ((0, 0), (1, 1), (1, Wp - 1 - W), (0, 0)))
    x_flat = xp.reshape(N, m, cin)     # kept f32: exact residual inside the kernel

    hh = jnp.arange(Hp)
    ww = jnp.arange(Wp)
    interior = ((hh >= 1) & (hh <= H))[:, None] & ((ww >= 1) & (ww <= W))[None, :]
    mask = interior.astype(jnp.float32).reshape(m, 1)

    kernel = functools.partial(_dark_unit_kernel, row_stride=Wp, mid_c=mid_c, cout=cout)

    out_flat = pl.pallas_call(
        kernel,
        out_shape=jax.ShapeDtypeStruct((N, mo, cout), jnp.bfloat16),
        grid=(N,),
        in_specs=[
            pl.BlockSpec((1, m, cin), lambda n: (n, 0, 0)),        # streamed per image
            pl.BlockSpec((m, 1), lambda n: (0, 0)),                # grid-constant blocks
            pl.BlockSpec((cin, 3 * mid_c), lambda n: (0, 0)),
            pl.BlockSpec((1, 3 * mid_c), lambda n: (0, 0)),
            pl.BlockSpec((3 * mid_c, 3 * cout), lambda n: (0, 0)),
            pl.BlockSpec((1, cout), lambda n: (0, 0)),
        ],
        out_specs=pl.BlockSpec((1, mo, cout), lambda n: (n, 0, 0)),
        scratch_shapes=[
            pltpu.VMEM((m + 2 * Wp, 3 * mid_c), jnp.bfloat16),     # ky-folded mid activation
            pltpu.VMEM((mo + 16, 3 * cout), jnp.float32),          # per-kx partial sums
        ],
        compiler_params=pltpu.CompilerParams(dimension_semantics=("parallel",)),
    )(x_flat, mask, w1_wide, b1_wide, w2_fold, b2)

    out = out_flat.reshape(N, H, Wp, cout)[:, :, 1:W + 1, :].astype(jnp.float32)
    return jnp.transpose(out, (0, 3, 1, 2))      # back to NCHW, matching the PyTorch module


# --------------------------- parameters & f32 reference ---------------------------

def init_dark_unit_params(key, in_channels, out_channels):
    assert out_channels % 2 == 0
    mid = out_channels // 2
    kw1, kw2, kbn1, kbn2 = jax.random.split(key, 4)

    def conv_w(k, cout, cin, ksz):
        fan_in = cin * ksz * ksz
        bound = (6.0 / fan_in) ** 0.5
        return jax.random.uniform(k, (cout, cin, ksz, ksz), jnp.float32, -bound, bound)

    def bn(k, c):
        kg, kb, km, kv = jax.random.split(k, 4)
        return (jax.random.uniform(kg, (c,), jnp.float32, 0.5, 1.5),
                0.1 * jax.random.normal(kb, (c,), jnp.float32),
                0.1 * jax.random.normal(km, (c,), jnp.float32),
                jax.random.uniform(kv, (c,), jnp.float32, 0.5, 1.5))

    g1, be1, m1, v1 = bn(kbn1, mid)
    g2, be2, m2, v2 = bn(kbn2, out_channels)
    return dict(w1=conv_w(kw1, mid, in_channels, 1),
                w2=conv_w(kw2, out_channels, mid, 3),
                gamma1=g1, beta1=be1, mean1=m1, var1=v1,
                gamma2=g2, beta2=be2, mean2=m2, var2=v2)


def dark_unit_reference(params, x_nchw):
    """Pure-JAX f32 reference: Conv2d(bias=False) + BatchNorm2d(eval) + LeakyReLU, + identity."""
    x = jnp.transpose(x_nchw, (0, 2, 3, 1))

    def block(y, w, gamma, beta, mean, var, pad):
        w_hwio = jnp.transpose(w, (2, 3, 1, 0))
        y = jax.lax.conv_general_dilated(
            y, w_hwio, window_strides=(1, 1), padding=((pad, pad), (pad, pad)),
            dimension_numbers=("NHWC", "HWIO", "NHWC"))
        y = (y - mean) * jax.lax.rsqrt(var + BN_EPS) * gamma + beta
        return jnp.maximum(y, ALPHA * y)

    y = block(x, params["w1"], params["gamma1"], params["beta1"],
              params["mean1"], params["var1"], pad=0)
    y = block(y, params["w2"], params["gamma2"], params["beta2"],
              params["mean2"], params["var2"], pad=1)
    y = y + x
    return jnp.transpose(y, (0, 3, 1, 2))


if __name__ == "__main__":
    # DarkUnit needs in_channels == out_channels (residual add); the smallest real
    # DarkNet-53 unit uses 64 channels, kept small here: batch=2, 64 ch, 16x16 spatial.
    N, C, H, W = 2, 64, 16, 16

    key = jax.random.PRNGKey(0)
    pkey, xkey = jax.random.split(key)
    params = init_dark_unit_params(pkey, C, C)
    x = jax.random.normal(xkey, (N, C, H, W), jnp.float32)

    fwd = jax.jit(functools.partial(dark_unit_forward, params))
    out = jax.block_until_ready(fwd(x))

    assert out.shape == (N, C, H, W), out.shape
    assert bool(jnp.all(jnp.isfinite(out)))

    # sanity check vs. an f32 XLA reference (kernel uses bf16 MXU operands + bf16 writeback)
    ref = dark_unit_reference(params, x)
    max_err = float(jnp.max(jnp.abs(out - ref)))
    scale = float(jnp.max(jnp.abs(ref)))
    assert max_err <= 3e-2 * scale + 3e-2, (max_err, scale)

    print("KERNEL_OK")
</pallas_src>

<mosaic_0001>
module attributes {stable_mosaic.version = 11 : i64} {
  func.func @_dark_unit_kernel(%arg0: i32, %arg1: memref<1x576x64xf32, #tpu.memory_space<vmem>>, %arg2: memref<576x1xf32, #tpu.memory_space<vmem>>, %arg3: memref<64x96xbf16, #tpu.memory_space<vmem>>, %arg4: memref<1x96xf32, #tpu.memory_space<vmem>>, %arg5: memref<96x192xbf16, #tpu.memory_space<vmem>>, %arg6: memref<1x64xf32, #tpu.memory_space<vmem>>, %arg7: memref<1x512x64xbf16, #tpu.memory_space<vmem>>, %arg8: memref<640x96xbf16, #tpu.memory_space<vmem>>, %arg9: memref<528x192xf32, #tpu.memory_space<vmem>>) attributes {dimension_semantics = [#tpu.dimension_semantics<parallel>], iteration_bounds = array<i64: 2>, scalar_prefetch = 0 : i64, scratch_operands = 2 : i64, tpu.core_type = #tpu.core_type<tc>, window_params = [{transform_indices = @transform_0, window_bounds = array<i64: 1, 576, 64>}, {pipeline_mode = #tpu.pipeline_mode<synchronous>, transform_indices = @transform_1, window_bounds = array<i64: 576, 1>}, {pipeline_mode = #tpu.pipeline_mode<synchronous>, transform_indices = @transform_2, window_bounds = array<i64: 64, 96>}, {pipeline_mode = #tpu.pipeline_mode<synchronous>, transform_indices = @transform_3, window_bounds = array<i64: 1, 96>}, {pipeline_mode = #tpu.pipeline_mode<synchronous>, transform_indices = @transform_4, window_bounds = array<i64: 96, 192>}, {pipeline_mode = #tpu.pipeline_mode<synchronous>, transform_indices = @transform_5, window_bounds = array<i64: 1, 64>}, {transform_indices = @transform_6, window_bounds = array<i64: 1, 512, 64>}]} {
    %c0 = arith.constant 0 : index
    %c0_0 = arith.constant 0 : index
    %c0_1 = arith.constant 0 : index
    %0 = vector.load %arg1[%c0, %c0_0, %c0_1] : memref<1x576x64xf32, #tpu.memory_space<vmem>>, vector<1x576x64xf32>
    %1 = vector.shape_cast %0 : vector<1x576x64xf32> to vector<576x64xf32>
    %2 = arith.truncf %1 : vector<576x64xf32> to vector<576x64xbf16>
    %c0_2 = arith.constant 0 : index
    %c0_3 = arith.constant 0 : index
    %3 = vector.load %arg3[%c0_2, %c0_3] : memref<64x96xbf16, #tpu.memory_space<vmem>>, vector<64x96xbf16>
    %cst = arith.constant dense<0.000000e+00> : vector<576x96xf32>
    %4 = tpu.matmul %2, %3, %cst {dimension_numbers = #tpu.dot_dimension_numbers<[1], [0], [0], [1], [0, 0, 1, 1], [], []>} : vector<576x64xbf16>, vector<64x96xbf16>, vector<576x96xf32> -> vector<576x96xf32>
    %c0_4 = arith.constant 0 : index
    %c0_5 = arith.constant 0 : index
    %5 = vector.load %arg4[%c0_4, %c0_5] : memref<1x96xf32, #tpu.memory_space<vmem>>, vector<1x96xf32>
    %6 = vector.broadcast %5 : vector<1x96xf32> to vector<576x96xf32>
    %7 = arith.addf %4, %6 : vector<576x96xf32>
    %cst_6 = arith.constant 1.000000e-01 : f32
    %8 = vector.broadcast %cst_6 : f32 to vector<576x96xf32>
    %9 = arith.mulf %8, %7 : vector<576x96xf32>
    %10 = arith.maximumf %7, %9 : vector<576x96xf32>
    %c0_7 = arith.constant 0 : index
    %c0_8 = arith.constant 0 : index
    %11 = vector.load %arg2[%c0_7, %c0_8] : memref<576x1xf32, #tpu.memory_space<vmem>>, vector<576x1xf32>
    %12 = vector.broadcast %11 : vector<576x1xf32> to vector<576x96xf32>
    %13 = arith.mulf %10, %12 : vector<576x96xf32>
    %14 = arith.truncf %13 : vector<576x96xf32> to vector<576x96xbf16>
    %15 = vector.extract_strided_slice %14 {offsets = [0, 0], sizes = [576, 32], strides = [1, 1]} : vector<576x96xbf16> to vector<576x32xbf16>
    %c64 = arith.constant 64 : index
    %c0_9 = arith.constant 0 : index
    %16 = vector.load %arg8[%c64, %c0_9] : memref<640x96xbf16, #tpu.memory_space<vmem>>, vector<576x32xbf16>
    tpu.vector_store %arg8[%c64, %c0_9], %15 {strides = array<i32>} : memref<640x96xbf16, #tpu.memory_space<vmem>>, vector<576x32xbf16>,
    %17 = vector.extract_strided_slice %14 {offsets = [0, 32], sizes = [576, 32], strides = [1, 1]} : vector<576x96xbf16> to vector<576x32xbf16>
    %c32 = arith.constant 32 : index
    %c32_10 = arith.constant 32 : index
    %18 = vector.load %arg8[%c32, %c32_10] : memref<640x96xbf16, #tpu.memory_space<vmem>>, vector<576x32xbf16>
    tpu.vector_store %arg8[%c32, %c32_10], %17 {strides = array<i32>} : memref<640x96xbf16, #tpu.memory_space<vmem>>, vector<576x32xbf16>,
    %19 = vector.extract_strided_slice %14 {offsets = [0, 64], sizes = [576, 32], strides = [1, 1]} : vector<576x96xbf16> to vector<576x32xbf16>
    %c0_11 = arith.constant 0 : index
    %c64_12 = arith.constant 64 : index
    %20 = vector.load %arg8[%c0_11, %c64_12] : memref<640x96xbf16, #tpu.memory_space<vmem>>, vector<576x32xbf16>
    tpu.vector_store %arg8[%c0_11, %c64_12], %19 {strides = array<i32>} : memref<640x96xbf16, #tpu.memory_space<vmem>>, vector<576x32xbf16>,
    %c64_13 = arith.constant 64 : index
    %c0_14 = arith.constant 0 : index
    %21 = vector.load %arg8[%c64_13, %c0_14] : memref<640x96xbf16, #tpu.memory_space<vmem>>, vector<512x96xbf16>
    %c0_15 = arith.constant 0 : index
    %c0_16 = arith.constant 0 : index
    %22 = vector.load %arg5[%c0_15, %c0_16] : memref<96x192xbf16, #tpu.memory_space<vmem>>, vector<96x192xbf16>
    %cst_17 = arith.constant dense<0.000000e+00> : vector<512x192xf32>
    %23 = tpu.matmul %21, %22, %cst_17 {dimension_numbers = #tpu.dot_dimension_numbers<[1], [0], [0], [1], [0, 0, 1, 1], [], []>} : vector<512x96xbf16>, vector<96x192xbf16>, vector<512x192xf32> -> vector<512x192xf32>
    %c8 = arith.constant 8 : index
    %c0_18 = arith.constant 0 : index
    %24 = vector.load %arg9[%c8, %c0_18] : memref<528x192xf32, #tpu.memory_space<vmem>>, vector<512x192xf32>
    tpu.vector_store %arg9[%c8, %c0_18], %23 {strides = array<i32>} : memref<528x192xf32, #tpu.memory_space<vmem>>, vector<512x192xf32>,
    %cst_19 = arith.constant 0.000000e+00 : f32
    %25 = vector.broadcast %cst_19 : f32 to vector<8x192xf32>
    %c0_20 = arith.constant 0 : index
    %c0_21 = arith.constant 0 : index
    %26 = vector.load %arg9[%c0_20, %c0_21] : memref<528x192xf32, #tpu.memory_space<vmem>>, vector<8x192xf32>
    tpu.vector_store %arg9[%c0_20, %c0_21], %25 {strides = array<i32>} : memref<528x192xf32, #tpu.memory_space<vmem>>, vector<8x192xf32>,
    %c520 = arith.constant 520 : index
    %c0_22 = arith.constant 0 : index
    %27 = vector.load %arg9[%c520, %c0_22] : memref<528x192xf32, #tpu.memory_space<vmem>>, vector<8x192xf32>
    tpu.vector_store %arg9[%c520, %c0_22], %25 {strides = array<i32>} : memref<528x192xf32, #tpu.memory_space<vmem>>, vector<8x192xf32>,
    %c7 = arith.constant 7 : index
    %c0_23 = arith.constant 0 : index
    %28 = vector.load %arg9[%c7, %c0_23] : memref<528x192xf32, #tpu.memory_space<vmem>>, vector<512x64xf32>
    %c8_24 = arith.constant 8 : index
    %c64_25 = arith.constant 64 : index
    %29 = vector.load %arg9[%c8_24, %c64_25] : memref<528x192xf32, #tpu.memory_space<vmem>>, vector<512x64xf32>
    %30 = arith.addf %28, %29 : vector<512x64xf32>
    %c9 = arith.constant 9 : index
    %c128 = arith.constant 128 : index
    %31 = vector.load %arg9[%c9, %c128] : memref<528x192xf32, #tpu.memory_space<vmem>>, vector<512x64xf32>
    %32 = arith.addf %30, %31 : vector<512x64xf32>
    %c0_26 = arith.constant 0 : index
    %c0_27 = arith.constant 0 : index
    %33 = vector.load %arg6[%c0_26, %c0_27] : memref<1x64xf32, #tpu.memory_space<vmem>>, vector<1x64xf32>
    %34 = vector.broadcast %33 : vector<1x64xf32> to vector<512x64xf32>
    %35 = arith.addf %32, %34 : vector<512x64xf32>
    %cst_28 = arith.constant 1.000000e-01 : f32
    %36 = vector.broadcast %cst_28 : f32 to vector<512x64xf32>
    %37 = arith.mulf %36, %35 : vector<512x64xf32>
    %38 = arith.maximumf %35, %37 : vector<512x64xf32>
    %39 = vector.extract_strided_slice %1 {offsets = [32, 0], sizes = [512, 64], strides = [1, 1]} : vector<576x64xf32> to vector<512x64xf32>
    %40 = arith.addf %38, %39 : vector<512x64xf32>
    %41 = arith.truncf %40 : vector<512x64xf32> to vector<512x64xbf16>
    %c0_29 = arith.constant 0 : index
    %c0_30 = arith.constant 0 : index
    %c0_31 = arith.constant 0 : index
    %42 = vector.load %arg7[%c0_29, %c0_30, %c0_31] : memref<1x512x64xbf16, #tpu.memory_space<vmem>>, vector<1x512x64xbf16>
    %43 = vector.shape_cast %42 : vector<1x512x64xbf16> to vector<512x64xbf16>
    %44 = vector.shape_cast %41 : vector<512x64xbf16> to vector<1x512x64xbf16>
    tpu.vector_store %arg7[%c0_29, %c0_30, %c0_31], %44 {strides = array<i32>} : memref<1x512x64xbf16, #tpu.memory_space<vmem>>, vector<1x512x64xbf16>,
    return
  }
  func.func @transform_0(%arg0: i32) -> (i32, i32, i32) {
    %c0_i32 = arith.constant 0 : i32
    %c0_i32_0 = arith.constant 0 : i32
    %c0_i32_1 = arith.constant 0 : i32
    return %arg0, %c0_i32, %c0_i32_0 : i32, i32, i32
  }
  func.func @transform_1(%arg0: i32) -> (i32, i32) {
    %c0_i32 = arith.constant 0 : i32
    %c0_i32_0 = arith.constant 0 : i32
    %c0_i32_1 = arith.constant 0 : i32
    return %c0_i32, %c0_i32_0 : i32, i32
  }
  func.func @transform_2(%arg0: i32) -> (i32, i32) {
    %c0_i32 = arith.constant 0 : i32
    %c0_i32_0 = arith.constant 0 : i32
    %c0_i32_1 = arith.constant 0 : i32
    return %c0_i32, %c0_i32_0 : i32, i32
  }
  func.func @transform_3(%arg0: i32) -> (i32, i32) {
    %c0_i32 = arith.constant 0 : i32
    %c0_i32_0 = arith.constant 0 : i32
    %c0_i32_1 = arith.constant 0 : i32
    return %c0_i32, %c0_i32_0 : i32, i32
  }
  func.func @transform_4(%arg0: i32) -> (i32, i32) {
    %c0_i32 = arith.constant 0 : i32
    %c0_i32_0 = arith.constant 0 : i32
    %c0_i32_1 = arith.constant 0 : i32
    return %c0_i32, %c0_i32_0 : i32, i32
  }
  func.func @transform_5(%arg0: i32) -> (i32, i32) {
    %c0_i32 = arith.constant 0 : i32
    %c0_i32_0 = arith.constant 0 : i32
    %c0_i32_1 = arith.constant 0 : i32
    return %c0_i32, %c0_i32_0 : i32, i32
  }
  func.func @transform_6(%arg0: i32) -> (i32, i32, i32) {
    %c0_i32 = arith.constant 0 : i32
    %c0_i32_0 = arith.constant 0 : i32
    %c0_i32_1 = arith.constant 0 : i32
    return %arg0, %c0_i32, %c0_i32_0 : i32, i32, i32
  }
}

</mosaic_0001>

<llo_original>
// kernel: dark_unit_forward.1
$region0: #{dark_unit_forward.1}
  #allocation0 [shape = 'u32[]', space=smem, size = 0x4, offset = 0x4, fixed_abs, tag = 'smem constant byte address 0x4 - core index']
  #allocation1 [shape = 'u32[144,128]{1,0:T(1,128)}', space=vmem, size = 0x12000, scoped, tag = 'internal scratch']
  #allocation2 [shape = 'bf16[640,96]{1,0:T(16,128)(2,1)}', space=vmem, size = 0x28000, scoped, tag = 'scratch operand']
  #allocation3 [shape = 'f32[528,192]{1,0:T(8,128)}', space=vmem, size = 0x84000, scoped, tag = 'scratch operand']
  %s0 = inlined_call_operand.vmem [shape: f32[2,576,64], index: 0, kind: input, shape index: {}]
  %s1 = inlined_call_operand.vmem [shape: f32[576,1], index: 1, kind: input, shape index: {}]
  %s2 = inlined_call_operand.vmem [shape: bf16[64,96], index: 2, kind: input, shape index: {}]
  %s3 = inlined_call_operand.vmem [shape: f32[1,96], index: 3, kind: input, shape index: {}]
  %s4 = inlined_call_operand.vmem [shape: bf16[96,192], index: 4, kind: input, shape index: {}]
  %s5 = inlined_call_operand.vmem [shape: f32[1,64], index: 5, kind: input, shape index: {}]
  %s6 = inlined_call_operand.vmem [shape: bf16[2,512,64], index: 6, kind: output, shape index: {}]
  %s7 = sld [smem:[#allocation0]]
  $region57: #{dark_unit_forward.1} parent=0
    _
  %s9 = ssub.s32 1, %s7
  %s10 = scalar_select 0, %s9, %s7
  loop: start=0, step=1, limit=4
  $region2: #{dark_unit_forward.1} parent=0 // loop_pre_header
    _
  $region3: #{dark_unit_forward.1} parent=0 // loop_header
    %s12 = sphi 0, %s16
    %p13 = scmp.ge.s32.totalorder %s12, 4
    %s22 = sphi 0, %s24
    %s25 = sphi 0, %s22
    %s26 = sphi 0, %s25
    %s42 = sphi 0, %s26
    %s46 = sphi 0, %s46
    %s48 = sphi 0, %s46
    %s49 = sphi 0, %s48
    %s63 = sphi 0, %s49
    %s67 = sphi 0, %s67
    %s69 = sphi 0, %s67
    %s70 = sphi 0, %s69
    %s84 = sphi 0, %s70
    %s88 = sphi 0, %s88
    %s90 = sphi 0, %s88
    %s91 = sphi 0, %s90
    %s105 = sphi 0, %s91
    %s109 = sphi 0, %s109
    %s111 = sphi 0, %s109
    %s112 = sphi 0, %s111
    %s126 = sphi 0, %s112
    %s130 = sphi 0, %s130
    %s132 = sphi 0, %s130
    %s133 = sphi 0, %s132
    %s147 = sphi 0, %s133
    %s153 = sphi 0, %s155
    %s156 = sphi 0, %s153
    %s157 = sphi 0, %s156
    %s173 = sphi 0, %s157
  $region4: #{dark_unit_forward.1} parent=0 // loop_header_branch
    %15 = sbr.rel (%p13) target = $region8
  $region5: #{dark_unit_forward.1} parent=0 // loop_body
    %s17 = ssub.s32 %s12, 1
    %s18 = ssub.s32 %s12, 2
    %s19 = sadd.s32 %s12, 1
    %s20 = ssub.s32 %s12, %s19
    %p21 = scmp.eq.s32.totalorder %s20, 0
    %s23 = sadd.s32 %s22, 1
    %s24 = scalar_select %p21, %s22, %s23
    %p27 = pneg %p21
    %p28 = scmp.eq.s32.totalorder %s12, 1
    %p29 = por %p27, %p28
    %p30 = scmp.ne.s32.totalorder %s22, %s25
    %p31 = scmp.eq.s32.totalorder %s12, 0
    %p32 = por %p30, %p31
    %p33 = scmp.ne.s32.totalorder %s22, %s25
    %p34 = scmp.eq.s32.totalorder %s17, 1
    %p35 = por %p33, %p34
    %p36 = scmp.ne.s32.totalorder %s25, %s26
    %p37 = scmp.eq.s32.totalorder %s17, 0
    %p38 = por %p36, %p37
    %p39 = scmp.ne.s32.totalorder %s25, %s26
    %p40 = scmp.eq.s32.totalorder %s18, 1
    %p41 = por %p39, %p40
    %p43 = scmp.ne.s32.totalorder %s26, %s42
    %p44 = scmp.eq.s32.totalorder %s18, 0
    %p45 = por %p43, %p44
    %s47 = sadd.s32 %s46, 1
    %p50 = scmp.eq.s32.totalorder %s12, 1
    %p51 = scmp.ne.s32.totalorder %s46, %s48
    %p52 = scmp.eq.s32.totalorder %s12, 0
    %p53 = por %p51, %p52
    %p54 = scmp.ne.s32.totalorder %s46, %s48
    %p55 = scmp.eq.s32.totalorder %s17, 1
    %p56 = por %p54, %p55
    %p57 = scmp.ne.s32.totalorder %s48, %s49
    %p58 = scmp.eq.s32.totalorder %s17, 0
    %p59 = por %p57, %p58
    %p60 = scmp.ne.s32.totalorder %s48, %s49
    %p61 = scmp.eq.s32.totalorder %s18, 1
    %p62 = por %p60, %p61
    %p64 = scmp.ne.s32.totalorder %s49, %s63
    %p65 = scmp.eq.s32.totalorder %s18, 0
    %p66 = por %p64, %p65
    %s68 = sadd.s32 %s67, 1
    %p71 = scmp.eq.s32.totalorder %s12, 1
    %p72 = scmp.ne.s32.totalorder %s67, %s69
    %p73 = scmp.eq.s32.totalorder %s12, 0
    %p74 = por %p72, %p73
    %p75 = scmp.ne.s32.totalorder %s67, %s69
    %p76 = scmp.eq.s32.totalorder %s17, 1
    %p77 = por %p75, %p76
    %p78 = scmp.ne.s32.totalorder %s69, %s70
    %p79 = scmp.eq.s32.totalorder %s17, 0
    %p80 = por %p78, %p79
    %p81 = scmp.ne.s32.totalorder %s69, %s70
    %p82 = scmp.eq.s32.totalorder %s18, 1
    %p83 = por %p81, %p82
    %p85 = scmp.ne.s32.totalorder %s70, %s84
    %p86 = scmp.eq.s32.totalorder %s18, 0
    %p87 = por %p85, %p86
    %s89 = sadd.s32 %s88, 1
    %p92 = scmp.eq.s32.totalorder %s12, 1
    %p93 = scmp.ne.s32.totalorder %s88, %s90
    %p94 = scmp.eq.s32.totalorder %s12, 0
    %p95 = por %p93, %p94
    %p96 = scmp.ne.s32.totalorder %s88, %s90
    %p97 = scmp.eq.s32.totalorder %s17, 1
    %p98 = por %p96, %p97
    %p99 = scmp.ne.s32.totalorder %s90, %s91
    %p100 = scmp.eq.s32.totalorder %s17, 0
    %p101 = por %p99, %p100
    %p102 = scmp.ne.s32.totalorder %s90, %s91
    %p103 = scmp.eq.s32.totalorder %s18, 1
    %p104 = por %p102, %p103
    %p106 = scmp.ne.s32.totalorder %s91, %s105
    %p107 = scmp.eq.s32.totalorder %s18, 0
    %p108 = por %p106, %p107
    %s110 = sadd.s32 %s109, 1
    %p113 = scmp.eq.s32.totalorder %s12, 1
    %p114 = scmp.ne.s32.totalorder %s109, %s111
    %p115 = scmp.eq.s32.totalorder %s12, 0
    %p116 = por %p114, %p115
    %p117 = scmp.ne.s32.totalorder %s109, %s111
    %p118 = scmp.eq.s32.totalorder %s17, 1
    %p119 = por %p117, %p118
    %p120 = scmp.ne.s32.totalorder %s111, %s112
    %p121 = scmp.eq.s32.totalorder %s17, 0
    %p122 = por %p120, %p121
    %p123 = scmp.ne.s32.totalorder %s111, %s112
    %p124 = scmp.eq.s32.totalorder %s18, 1
    %p125 = por %p123, %p124
    %p127 = scmp.ne.s32.totalorder %s112, %s126
    %p128 = scmp.eq.s32.totalorder %s18, 0
    %p129 = por %p127, %p128
    %s131 = sadd.s32 %s130, 1
    %p134 = scmp.eq.s32.totalorder %s12, 1
    %p135 = scmp.ne.s32.totalorder %s130, %s132
    %p136 = scmp.eq.s32.totalorder %s12, 0
    %p137 = por %p135, %p136
    %p138 = scmp.ne.s32.totalorder %s130, %s132
    %p139 = scmp.eq.s32.totalorder %s17, 1
    %p140 = por %p138, %p139
    %p141 = scmp.ne.s32.totalorder %s132, %s133
    %p142 = scmp.eq.s32.totalorder %s17, 0
    %p143 = por %p141, %p142
    %p144 = scmp.ne.s32.totalorder %s132, %s133
    %p145 = scmp.eq.s32.totalorder %s18, 1
    %p146 = por %p144, %p145
    %p148 = scmp.ne.s32.totalorder %s133, %s147
    %p149 = scmp.eq.s32.totalorder %s18, 0
    %p150 = por %p148, %p149
    %s151 = ssub.s32 %s12, %s19
    %p152 = scmp.eq.s32.totalorder %s151, 0
    %s154 = sadd.s32 %s153, 1
    %s155 = scalar_select %p152, %s153, %s154
    %p158 = pneg %p152
    %p159 = scmp.eq.s32.totalorder %s12, 1
    %p160 = por %p158, %p159
    %p161 = scmp.ne.s32.totalorder %s153, %s156
    %p162 = scmp.eq.s32.totalorder %s12, 0
    %p163 = por %p161, %p162
    %p164 = scmp.ne.s32.totalorder %s153, %s156
    %p165 = scmp.eq.s32.totalorder %s17, 1
    %p166 = por %p164, %p165
    %p167 = scmp.ne.s32.totalorder %s156, %s157
    %p168 = scmp.eq.s32.totalorder %s17, 0
    %p169 = por %p167, %p168
    %p170 = scmp.ne.s32.totalorder %s156, %s157
    %p171 = scmp.eq.s32.totalorder %s18, 1
    %p172 = por %p170, %p171
    %p174 = scmp.ne.s32.totalorder %s157, %s173
    %p175 = scmp.eq.s32.totalorder %s18, 0
    %p176 = por %p174, %p175
    %p177 = scmp.le.s32.totalorder 1, %s12
    %p178 = scmp.lt.s32.totalorder %s12, 3
    %p179 = pnand %p177, %p178
    %p180 = pneg %p179
    // Predicated region
    $region9: #{dark_unit_forward.1} parent=5 // pred_check
      _
    $region10: #{dark_unit_forward.1} parent=5 // pred_check_branch
      %182 = sbr.rel (%p179) target = $region12
    $region11: #{dark_unit_forward.1} parent=5 // pred_region
      %s183 = ssub.s32 %s12, 1
      // Predicated region
      $region13: #{dark_unit_forward.1} parent=11 // pred_check
        %p184 = pneg %p59
      $region14: #{dark_unit_forward.1} parent=11 // pred_check_branch
        %186 = sbr.rel (%p184) target = $region16
      $region15: #{dark_unit_forward.1} parent=11 // pred_region
        _
      $region16: #{dark_unit_forward.1} parent=11 // pred_fallthru
        _
      // Predicated region
      $region17: #{dark_unit_forward.1} parent=11 // pred_check
        %p187 = pneg %p80
      $region18: #{dark_unit_forward.1} parent=11 // pred_check_branch
        %189 = sbr.rel (%p187) target = $region20
      $region19: #{dark_unit_forward.1} parent=11 // pred_region
        _
      $region20: #{dark_unit_forward.1} parent=11 // pred_fallthru
        _
      // Predicated region
      $region21: #{dark_unit_forward.1} parent=11 // pred_check
        %p190 = pneg %p101
      $region22: #{dark_unit_forward.1} parent=11 // pred_check_branch
        %192 = sbr.rel (%p190) target = $region24
      $region23: #{dark_unit_forward.1} parent=11 // pred_region
        _
      $region24: #{dark_unit_forward.1} parent=11 // pred_fallthru
        _
      // Predicated region
      $region25: #{dark_unit_forward.1} parent=11 // pred_check
        %p193 = pneg %p122
      $region26: #{dark_unit_forward.1} parent=11 // pred_check_branch
        %195 = sbr.rel (%p193) target = $region28
      $region27: #{dark_unit_forward.1} parent=11 // pred_region
        _
      $region28: #{dark_unit_forward.1} parent=11 // pred_fallthru
        _
      // Predicated region
      $region29: #{dark_unit_forward.1} parent=11 // pred_check
        %p196 = pneg %p143
      $region30: #{dark_unit_forward.1} parent=11 // pred_check_branch
        %198 = sbr.rel (%p196) target = $region32
      $region31: #{dark_unit_forward.1} parent=11 // pred_region
        _
      $region32: #{dark_unit_forward.1} parent=11 // pred_fallthru
        _
    $region12: #{dark_unit_forward.1} parent=5 // pred_fallthru
      _
    %p199 = scmp.lt.s32.totalorder %s12, 2
    // Predicated region
    $region33: #{dark_unit_forward.1} parent=5 // pred_check
      %p200 = pneg %p199
    $region34: #{dark_unit_forward.1} parent=5 // pred_check_branch
      %202 = sbr.rel (%p200) target = $region36
    $region35: #{dark_unit_forward.1} parent=5 // pred_region
      // Predicated region
      $region37: #{dark_unit_forward.1} parent=35 // pred_check
        %p203 = pneg %p32
      $region38: #{dark_unit_forward.1} parent=35 // pred_check_branch
        %205 = sbr.rel (%p203) target = $region40
      $region39: #{dark_unit_forward.1} parent=35 // pred_region
        %p206 = scmp.lt.s32.totalorder %s12, 1
        %s207 = scalar_select %p206, %s12, 1
        %s208 = smul.addr %s207, 72
        %s209 = smul.addr %s208, 8
        %s210 = scalar_lea.vmem %s0, %s209
      $region40: #{dark_unit_forward.1} parent=35 // pred_fallthru
        _
    $region36: #{dark_unit_forward.1} parent=5 // pred_fallthru
      _
    %p211 = scmp.le.s32.totalorder 1, %s12
    %p212 = scmp.lt.s32.totalorder %s12, 3
    %p213 = pnand %p211, %p212
    %p214 = pneg %p213
    // Predicated region
    $region41: #{dark_unit_forward.1} parent=5 // pred_check
      _
    $region42: #{dark_unit_forward.1} parent=5 // pred_check_branch
      %216 = sbr.rel (%p213) target = $region44
    $region43: #{dark_unit_forward.1} parent=5 // pred_region
      %s217 = ssub.s32 %s12, 1
      %p218 = scmp.lt.s32.totalorder %s17, 1
      %s219 = scalar_select %p218, %s17, 1
      %s220 = smul.addr %s219, 72
      %s221 = smul.addr %s220, 8
      %s222 = scalar_lea.vmem %s0, %s221
      %p223 = pneg %p38
      %p224 = pneg %p35
      %p225 = pneg %p59
      %p226 = pneg %p56
      %p227 = pneg %p80
      %p228 = pneg %p77
      %p229 = pneg %p101
      %p230 = pneg %p98
      %p231 = pneg %p122
      %p232 = pneg %p119
      %p233 = pneg %p143
      %p234 = pneg %p140
      %p235 = pneg %p169
      %p236 = pneg %p166
      %p237 = scmp.lt.s32.totalorder %s17, 1
      %s238 = scalar_select %p237, %s17, 1
      %s239 = smul.addr %s238, 64
      %s240 = smul.addr %s239, 4
      %s241 = scalar_lea.vmem %s6, %s240
      %p242 = scmp.lt.s32.totalorder %s17, 1
      %s243 = scalar_select %p242, %s17, 1
      %s244 = smul.addr %s243, 72
      %s245 = smul.addr %s244, 8
      %s246 = scalar_lea.vmem %s0, %s245
      %p247 = scmp.lt.s32.totalorder %s17, 1
      %s248 = scalar_select %p247, %s17, 1
      %s249 = smul.addr %s248, 64
      %s250 = smul.addr %s249, 4
      %s251 = scalar_lea.vmem %s6, %s250
      %v253 = vld [vmem:[%s246] sm:$0xff]
      %v254 = vld [vmem:[%s246 + $0x8] sm:$0xff]
      %v255 = vld [vmem:[%s246 + $0x10] sm:$0xff]
      %v256 = vld [vmem:[%s246 + $0x18] sm:$0xff]
      %v257 = vld [vmem:[%s246 + $0x20] sm:$0xff]
      %v258 = vld [vmem:[%s246 + $0x28] sm:$0xff]
      %v259 = vld [vmem:[%s246 + $0x30] sm:$0xff]
      %v260 = vld [vmem:[%s246 + $0x38] sm:$0xff]
      %v261 = vld [vmem:[%s246 + $0x40] sm:$0xff]
      %v262 = vld [vmem:[%s246 + $0x48] sm:$0xff]
      %v263 = vld [vmem:[%s246 + $0x50] sm:$0xff]
      %v264 = vld [vmem:[%s246 + $0x58] sm:$0xff]
      %v265 = vld [vmem:[%s246 + $0x60] sm:$0xff]
      %v266 = vld [vmem:[%s246 + $0x68] sm:$0xff]
      %v267 = vld [vmem:[%s246 + $0x70] sm:$0xff]
      %v268 = vld [vmem:[%s246 + $0x78] sm:$0xff]
      %v269 = vld [vmem:[%s246 + $0x80] sm:$0xff]
      %v270 = vld [vmem:[%s246 + $0x88] sm:$0xff]
      %v271 = vld [vmem:[%s246 + $0x90] sm:$0xff]
      %v272 = vld [vmem:[%s246 + $0x98] sm:$0xff]
      %v273 = vld [vmem:[%s246 + $0xa0] sm:$0xff]
      %v274 = vld [vmem:[%s246 + $0xa8] sm:$0xff]
      %v275 = vld [vmem:[%s246 + $0xb0] sm:$0xff]
      %v276 = vld [vmem:[%s246 + $0xb8] sm:$0xff]
      %v277 = vld [vmem:[%s246 + $0xc0] sm:$0xff]
      %v278 = vld [vmem:[%s246 + $0xc8] sm:$0xff]
      %v279 = vld [vmem:[%s246 + $0xd0] sm:$0xff]
      %v280 = vld [vmem:[%s246 + $0xd8] sm:$0xff]
      %v281 = vld [vmem:[%s246 + $0xe0] sm:$0xff]
      %v282 = vld [vmem:[%s246 + $0xe8] sm:$0xff]
      %v283 = vld [vmem:[%s246 + $0xf0] sm:$0xff]
      %v284 = vld [vmem:[%s246 + $0xf8] sm:$0xff]
      %v285 = vld [vmem:[%s246 + $0x100] sm:$0xff]
      %v286 = vld [vmem:[%s246 + $0x108] sm:$0xff]
      %v287 = vld [vmem:[%s246 + $0x110] sm:$0xff]
      %v288 = vld [vmem:[%s246 + $0x118] sm:$0xff]
      %v289 = vld [vmem:[%s246 + $0x120] sm:$0xff]
      %v290 = vld [vmem:[%s246 + $0x128] sm:$0xff]
      %v291 = vld [vmem:[%s246 + $0x130] sm:$0xff]
      %v292 = vld [vmem:[%s246 + $0x138] sm:$0xff]
      %v293 = vld [vmem:[%s246 + $0x140] sm:$0xff]
      %v294 = vld [vmem:[%s246 + $0x148] sm:$0xff]
      %v295 = vld [vmem:[%s246 + $0x150] sm:$0xff]
      %v296 = vld [vmem:[%s246 + $0x158] sm:$0xff]
      %v297 = vld [vmem:[%s246 + $0x160] sm:$0xff]
      %v298 = vld [vmem:[%s246 + $0x168] sm:$0xff]
      %v299 = vld [vmem:[%s246 + $0x170] sm:$0xff]
      %v300 = vld [vmem:[%s246 + $0x178] sm:$0xff]
      %v301 = vld [vmem:[%s246 + $0x180] sm:$0xff]
      %v302 = vld [vmem:[%s246 + $0x188] sm:$0xff]
      %v303 = vld [vmem:[%s246 + $0x190] sm:$0xff]
      %v304 = vld [vmem:[%s246 + $0x198] sm:$0xff]
      %v305 = vld [vmem:[%s246 + $0x1a0] sm:$0xff]
      %v306 = vld [vmem:[%s246 + $0x1a8] sm:$0xff]
      %v307 = vld [vmem:[%s246 + $0x1b0] sm:$0xff]
      %v308 = vld [vmem:[%s246 + $0x1b8] sm:$0xff]
      %v309 = vld [vmem:[%s246 + $0x1c0] sm:$0xff]
      %v310 = vld [vmem:[%s246 + $0x1c8] sm:$0xff]
      %v311 = vld [vmem:[%s246 + $0x1d0] sm:$0xff]
      %v312 = vld [vmem:[%s246 + $0x1d8] sm:$0xff]
      %v313 = vld [vmem:[%s246 + $0x1e0] sm:$0xff]
      %v314 = vld [vmem:[%s246 + $0x1e8] sm:$0xff]
      %v315 = vld [vmem:[%s246 + $0x1f0] sm:$0xff]
      %v316 = vld [vmem:[%s246 + $0x1f8] sm:$0xff]
      %v317 = vld [vmem:[%s246 + $0x200] sm:$0xff]
      %v318 = vld [vmem:[%s246 + $0x208] sm:$0xff]
      %v319 = vld [vmem:[%s246 + $0x210] sm:$0xff]
      %v320 = vld [vmem:[%s246 + $0x218] sm:$0xff]
      %v321 = vld [vmem:[%s246 + $0x220] sm:$0xff]
      %v322 = vld [vmem:[%s246 + $0x228] sm:$0xff]
      %v323 = vld [vmem:[%s246 + $0x230] sm:$0xff]
      %v324 = vld [vmem:[%s246 + $0x238] sm:$0xff]
      %v325 = vpack.c.bf16 %v254, %v253
      %v326 = vpack.c.bf16 %v256, %v255
      %v327 = vpack.c.bf16 %v258, %v257
      %v328 = vpack.c.bf16 %v260, %v259
      %v329 = vpack.c.bf16 %v262, %v261
      %v330 = vpack.c.bf16 %v264, %v263
      %v331 = vpack.c.bf16 %v266, %v265
      %v332 = vpack.c.bf16 %v268, %v267
      %v333 = vpack.c.bf16 %v270, %v269
      %v334 = vpack.c.bf16 %v272, %v271
      %v335 = vpack.c.bf16 %v274, %v273
      %v336 = vpack.c.bf16 %v276, %v275
      %v337 = vpack.c.bf16 %v278, %v277
      %v338 = vpack.c.bf16 %v280, %v279
      %v339 = vpack.c.bf16 %v282, %v281
      %v340 = vpack.c.bf16 %v284, %v283
      %v341 = vpack.c.bf16 %v286, %v285
      %v342 = vpack.c.bf16 %v288, %v287
      %v343 = vpack.c.bf16 %v290, %v289
      %v344 = vpack.c.bf16 %v292, %v291
      %v345 = vpack.c.bf16 %v294, %v293
      %v346 = vpack.c.bf16 %v296, %v295
      %v347 = vpack.c.bf16 %v298, %v297
      %v348 = vpack.c.bf16 %v300, %v299
      %v349 = vpack.c.bf16 %v302, %v301
      %v350 = vpack.c.bf16 %v304, %v303
      %v351 = vpack.c.bf16 %v306, %v305
      %v352 = vpack.c.bf16 %v308, %v307
      %v353 = vpack.c.bf16 %v310, %v309
      %v354 = vpack.c.bf16 %v312, %v311
      %v355 = vpack.c.bf16 %v314, %v313
      %v356 = vpack.c.bf16 %v316, %v315
      %v357 = vpack.c.bf16 %v318, %v317
      %v358 = vpack.c.bf16 %v320, %v319
      %v359 = vpack.c.bf16 %v322, %v321
      %v360 = vpack.c.bf16 %v324, %v323
      %v361 = vld [vmem:[%s2] sm:$0xf]
      %v362 = vld [vmem:[%s2 + $0x4] sm:$0xf]
      %v363 = vld [vmem:[%s2 + $0x8] sm:$0xf]
      %v364 = vld [vmem:[%s2 + $0xc] sm:$0xf]
      %v365 = vld [vmem:[%s2 + $0x10] sm:$0xf]
      %v366 = vld [vmem:[%s2 + $0x14] sm:$0xf]
      %v367 = vld [vmem:[%s2 + $0x18] sm:$0xf]
      %v368 = vld [vmem:[%s2 + $0x1c] sm:$0xf]
      %v369 = vld [vmem:[%s3] sm:$0x1]
      %v371 = vlaneseq
      %v372 = vshrl.u32 %v371, 7
      %v373 = vsub.s32 0, %v372
      %v374 = vrot.slane %v369, %v373
      %v384 = vunpack.c.l.b16 %v361
      %v385 = vunpack.c.l.b16 %v362
      %v386 = vunpack.c.l.b16 %v363
      %v387 = vunpack.c.l.b16 %v364
      %v388 = vunpack.c.l.b16 %v365
      %v389 = vunpack.c.l.b16 %v366
      %v390 = vunpack.c.l.b16 %v367
      %v391 = vunpack.c.l.b16 %v368
      %v392 = vpack.c.b16 %v385, %v384
      %v393 = vpack.c.b16 %v387, %v386
      %v394 = vpack.c.b16 %v389, %v388
      %v395 = vpack.c.b16 %v391, %v390
      %vm400 = vcmask 523264
      %v402 = vsel %vm400, %v325, 0
      %v405 = vsel %vm400, %v326, 0
      %v408 = vsel %vm400, %v327, 0
      %v411 = vsel %vm400, %v328, 0
      %v414 = vsel %vm400, %v329, 0
      %v417 = vsel %vm400, %v330, 0
      %v420 = vsel %vm400, %v331, 0
      %v423 = vsel %vm400, %v332, 0
      %v426 = vsel %vm400, %v333, 0
      %v429 = vsel %vm400, %v334, 0
      %v432 = vsel %vm400, %v335, 0
      %v435 = vsel %vm400, %v336, 0
      %v438 = vsel %vm400, %v337, 0
      %v441 = vsel %vm400, %v338, 0
      %v444 = vsel %vm400, %v339, 0
      %v447 = vsel %vm400, %v340, 0
      %v450 = vsel %vm400, %v341, 0
      %v453 = vsel %vm400, %v342, 0
      %v456 = vsel %vm400, %v343, 0
      %v459 = vsel %vm400, %v344, 0
      %v462 = vsel %vm400, %v345, 0
      %v465 = vsel %vm400, %v346, 0
      %v468 = vsel %vm400, %v347, 0
      %v471 = vsel %vm400, %v348, 0
      %v474 = vsel %vm400, %v349, 0
      %v477 = vsel %vm400, %v350, 0
      %v480 = vsel %vm400, %v351, 0
      %v483 = vsel %vm400, %v352, 0
      %v486 = vsel %vm400, %v353, 0
      %v489 = vsel %vm400, %v354, 0
      %v492 = vsel %vm400, %v355, 0
      %v495 = vsel %vm400, %v356, 0
      %v498 = vsel %vm400, %v357, 0
      %v501 = vsel %vm400, %v358, 0
      %v504 = vsel %vm400, %v359, 0
      %v507 = vsel %vm400, %v360, 0
      %509 = vmatprep.subr.bf16.mxu0 0
      %510 = vmatpush1.bf16.msra.mxu0 %v392
      %511 = vmatprep.subr.bf16.mxu0 0
      %512 = vmatpush1.bf16.msra.mxu0 %v393
      %513 = vmatprep.subr.bf16.mxu0 0
      %514 = vmatpush1.bf16.msra.mxu0 %v394
      %515 = vmatprep.subr.bf16.mxu0 0
      %516 = vmatpush1.bf16.msra.mxu0 %v395
      %517 = vmatprep.subr.bf16.mxu0 0
      %518 = vmatpush1.bf16.msra.mxu0 0
      %519 = vmatprep.subr.bf16.mxu0 0
      %520 = vmatpush1.bf16.msra.mxu0 0
      %521 = vmatprep.subr.bf16.mxu0 0
      %522 = vmatpush1.bf16.msra.mxu0 0
      %523 = vmatprep.subr.bf16.mxu0 0
      %524 = vmatpush1.bf16.msra.mxu0 0
      %525 = vmatprep.subr.bf16.mxu0 0
      %526 = vmatpush1.bf16.msra.mxu0 0
      %527 = vmatprep.subr.bf16.mxu0 0
      %528 = vmatpush1.bf16.msra.mxu0 0
      %529 = vmatprep.subr.bf16.mxu0 0
      %530 = vmatpush1.bf16.msra.mxu0 0
      %531 = vmatprep.subr.bf16.mxu0 0
      %532 = vmatpush1.bf16.msra.mxu0 0
      %533 = vmatprep.subr.bf16.mxu0 0
      %534 = vmatpush1.bf16.msra.mxu0 0
      %535 = vmatprep.subr.bf16.mxu0 0
      %536 = vmatpush1.bf16.msra.mxu0 0
      %537 = vmatprep.subr.bf16.mxu0 0
      %538 = vmatpush1.bf16.msra.mxu0 0
      %539 = vmatprep.subr.bf16.mxu0 0
      %540 = vmatpush1.bf16.msra.mxu0 0
      %541 = vmatprep.mubr.bf16.mxu0 0
      %542 = vmatmul.mubr.bf16.gmra.mrb[0].mxu0 %v402
      %v543 = vpop.f32.mrb[0].mxu0
      %v544 = vadd.f32 %v374, %v543
      %v545 = vpop.f32.mrb[0].mxu0
      %v546 = vpop.f32.mrb[0].mxu0
      %v547 = vadd.f32 %v374, %v546
      %v548 = vpop.f32.mrb[0].mxu0
      %549 = vmatprep.mubr.bf16.mxu0 0
      %550 = vmatmul.mubr.bf16.gmra.mrb[0].mxu0 %v405
      %v551 = vpop.f32.mrb[0].mxu0
      %v552 = vadd.f32 %v374, %v551
      %v553 = vpop.f32.mrb[0].mxu0
      %v554 = vpop.f32.mrb[0].mxu0
      %v555 = vadd.f32 %v374, %v554
      %v556 = vpop.f32.mrb[0].mxu0
      %557 = vmatprep.mubr.bf16.mxu0 0
      %558 = vmatmul.mubr.bf16.gmra.mrb[0].mxu0 %v408
      %v559 = vpop.f32.mrb[0].mxu0
      %v560 = vadd.f32 %v374, %v559
      %v561 = vpop.f32.mrb[0].mxu0
      %v562 = vpop.f32.mrb[0].mxu0
      %v563 = vadd.f32 %v374, %v562
      %v564 = vpop.f32.mrb[0].mxu0
      %565 = vmatprep.mubr.bf16.mxu0 0
      %566 = vmatmul.mubr.bf16.gmra.mrb[0].mxu0 %v411
      %v567 = vpop.f32.mrb[0].mxu0
      %v568 = vadd.f32 %v374, %v567
      %v569 = vpop.f32.mrb[0].mxu0
      %v570 = vpop.f32.mrb[0].mxu0
      %v571 = vadd.f32 %v374, %v570
      %v572 = vpop.f32.mrb[0].mxu0
      %573 = vmatprep.mubr.bf16.mxu0 0
      %574 = vmatmul.mubr.bf16.gmra.mrb[0].mxu0 %v414
      %v575 = vpop.f32.mrb[0].mxu0
      %v576 = vadd.f32 %v374, %v575
      %v577 = vpop.f32.mrb[0].mxu0
      %v578 = vpop.f32.mrb[0].mxu0
      %v579 = vadd.f32 %v374, %v578
      %v580 = vpop.f32.mrb[0].mxu0
      %581 = vmatprep.mubr.bf16.mxu0 0
      %582 = vmatmul.mubr.bf16.gmra.mrb[0].mxu0 %v417
      %v583 = vpop.f32.mrb[0].mxu0
      %v584 = vadd.f32 %v374, %v583
      %v585 = vpop.f32.mrb[0].mxu0
      %v586 = vpop.f32.mrb[0].mxu0
      %v587 = vadd.f32 %v374, %v586
      %v588 = vpop.f32.mrb[0].mxu0
      %589 = vmatprep.mubr.bf16.mxu0 0
      %590 = vmatmul.mubr.bf16.gmra.mrb[0].mxu0 %v420
      %v591 = vpop.f32.mrb[0].mxu0
      %v592 = vadd.f32 %v374, %v591
      %v593 = vpop.f32.mrb[0].mxu0
      %v594 = vpop.f32.mrb[0].mxu0
      %v595 = vadd.f32 %v374, %v594
      %v596 = vpop.f32.mrb[0].mxu0
      %597 = vmatprep.mubr.bf16.mxu0 0
      %598 = vmatmul.mubr.bf16.gmra.mrb[0].mxu0 %v423
      %v599 = vpop.f32.mrb[0].mxu0
      %v600 = vadd.f32 %v374, %v599
      %v601 = vpop.f32.mrb[0].mxu0
      %v602 = vpop.f32.mrb[0].mxu0
      %v603 = vadd.f32 %v374, %v602
      %v604 = vpop.f32.mrb[0].mxu0
      %605 = vmatprep.mubr.bf16.mxu0 0
      %606 = vmatmul.mubr.bf16.gmra.mrb[0].mxu0 %v426
      %v607 = vpop.f32.mrb[0].mxu0
      %v608 = vadd.f32 %v374, %v607
      %v609 = vpop.f32.mrb[0].mxu0
      %v610 = vpop.f32.mrb[0].mxu0
      %v611 = vadd.f32 %v374, %v610
      %v612 = vpop.f32.mrb[0].mxu0
      %613 = vmatprep.mubr.bf16.mxu0 0
      %614 = vmatmul.mubr.bf16.gmra.mrb[0].mxu0 %v429
      %v615 = vpop.f32.mrb[0].mxu0
      %v616 = vadd.f32 %v374, %v615
      %v617 = vpop.f32.mrb[0].mxu0
      %v618 = vpop.f32.mrb[0].mxu0
      %v619 = vadd.f32 %v374, %v618
      %v620 = vpop.f32.mrb[0].mxu0
      %621 = vmatprep.mubr.bf16.mxu0 0
      %622 = vmatmul.mubr.bf16.gmra.mrb[0].mxu0 %v432
      %v623 = vpop.f32.mrb[0].mxu0
      %v624 = vadd.f32 %v374, %v623
      %v625 = vpop.f32.mrb[0].mxu0
      %v626 = vpop.f32.mrb[0].mxu0
      %v627 = vadd.f32 %v374, %v626
      %v628 = vpop.f32.mrb[0].mxu0
      %629 = vmatprep.mubr.bf16.mxu0 0
      %630 = vmatmul.mubr.bf16.gmra.mrb[0].mxu0 %v435
      %v631 = vpop.f32.mrb[0].mxu0
      %v632 = vadd.f32 %v374, %v631
      %v633 = vpop.f32.mrb[0].mxu0
      %v634 = vpop.f32.mrb[0].mxu0
      %v635 = vadd.f32 %v374, %v634
      %v636 = vpop.f32.mrb[0].mxu0
      %637 = vmatprep.mubr.bf16.mxu0 0
      %638 = vmatmul.mubr.bf16.gmra.mrb[0].mxu0 %v438
      %v639 = vpop.f32.mrb[0].mxu0
      %v640 = vadd.f32 %v374, %v639
      %v641 = vpop.f32.mrb[0].mxu0
      %v642 = vpop.f32.mrb[0].mxu0
      %v643 = vadd.f32 %v374, %v642
      %v644 = vpop.f32.mrb[0].mxu0
      %645 = vmatprep.mubr.bf16.mxu0 0
      %646 = vmatmul.mubr.bf16.gmra.mrb[0].mxu0 %v441
      %v647 = vpop.f32.mrb[0].mxu0
      %v648 = vadd.f32 %v374, %v647
      %v649 = vpop.f32.mrb[0].mxu0
      %v650 = vpop.f32.mrb[0].mxu0
      %v651 = vadd.f32 %v374, %v650
      %v652 = vpop.f32.mrb[0].mxu0
      %653 = vmatprep.mubr.bf16.mxu0 0
      %654 = vmatmul.mubr.bf16.gmra.mrb[0].mxu0 %v444
      %v655 = vpop.f32.mrb[0].mxu0
      %v656 = vadd.f32 %v374, %v655
      %v657 = vpop.f32.mrb[0].mxu0
      %v658 = vpop.f32.mrb[0].mxu0
      %v659 = vadd.f32 %v374, %v658
      %v660 = vpop.f32.mrb[0].mxu0
      %661 = vmatprep.mubr.bf16.mxu0 0
      %662 = vmatmul.mubr.bf16.gmra.mrb[0].mxu0 %v447
      %v663 = vpop.f32.mrb[0].mxu0
      %v664 = vadd.f32 %v374, %v663
      %v665 = vpop.f32.mrb[0].mxu0
      %v666 = vpop.f32.mrb[0].mxu0
      %v667 = vadd.f32 %v374, %v666
      %v668 = vpop.f32.mrb[0].mxu0
      %669 = vmatprep.mubr.bf16.mxu0 0
      %670 = vmatmul.mubr.bf16.gmra.mrb[0].mxu0 %v450
      %v671 = vpop.f32.mrb[0].mxu0
      %v672 = vadd.f32 %v374, %v671
      %v673 = vpop.f32.mrb[0].mxu0
      %v674 = vpop.f32.mrb[0].mxu0
      %v675 = vadd.f32 %v374, %v674
      %v676 = vpop.f32.mrb[0].mxu0
      %677 = vmatprep.mubr.bf16.mxu0 0
      %678 = vmatmul.mubr.bf16.gmra.mrb[0].mxu0 %v453
      %v679 = vpop.f32.mrb[0].mxu0
      %v680 = vadd.f32 %v374, %v679
      %v681 = vpop.f32.mrb[0].mxu0
      %v682 = vpop.f32.mrb[0].mxu0
      %v683 = vadd.f32 %v374, %v682
      %v684 = vpop.f32.mrb[0].mxu0
      %685 = vmatprep.mubr.bf16.mxu0 0
      %686 = vmatmul.mubr.bf16.gmra.mrb[0].mxu0 %v456
      %v687 = vpop.f32.mrb[0].mxu0
      %v688 = vadd.f32 %v374, %v687
      %v689 = vpop.f32.mrb[0].mxu0
      %v690 = vpop.f32.mrb[0].mxu0
      %v691 = vadd.f32 %v374, %v690
      %v692 = vpop.f32.mrb[0].mxu0
      %693 = vmatprep.mubr.bf16.mxu0 0
      %694 = vmatmul.mubr.bf16.gmra.mrb[0].mxu0 %v459
      %v695 = vpop.f32.mrb[0].mxu0
      %v696 = vadd.f32 %v374, %v695
      %v697 = vpop.f32.mrb[0].mxu0
      %v698 = vpop.f32.mrb[0].mxu0
      %v699 = vadd.f32 %v374, %v698
      %v700 = vpop.f32.mrb[0].mxu0
      %701 = vmatprep.mubr.bf16.mxu0 0
      %702 = vmatmul.mubr.bf16.gmra.mrb[0].mxu0 %v462
      %v703 = vpop.f32.mrb[0].mxu0
      %v704 = vadd.f32 %v374, %v703
      %v705 = vpop.f32.mrb[0].mxu0
      %v706 = vpop.f32.mrb[0].mxu0
      %v707 = vadd.f32 %v374, %v706
      %v708 = vpop.f32.mrb[0].mxu0
      %709 = vmatprep.mubr.bf16.mxu0 0
      %710 = vmatmul.mubr.bf16.gmra.mrb[0].mxu0 %v465
      %v711 = vpop.f32.mrb[0].mxu0
      %v712 = vadd.f32 %v374, %v711
      %v713 = vpop.f32.mrb[0].mxu0
      %v714 = vpop.f32.mrb[0].mxu0
      %v715 = vadd.f32 %v374, %v714
      %v716 = vpop.f32.mrb[0].mxu0
      %717 = vmatprep.mubr.bf16.mxu0 0
      %718 = vmatmul.mubr.bf16.gmra.mrb[0].mxu0 %v468
      %v719 = vpop.f32.mrb[0].mxu0
      %v720 = vadd.f32 %v374, %v719
      %v721 = vpop.f32.mrb[0].mxu0
      %v722 = vpop.f32.mrb[0].mxu0
      %v723 = vadd.f32 %v374, %v722
      %v724 = vpop.f32.mrb[0].mxu0
      %725 = vmatprep.mubr.bf16.mxu0 0
      %726 = vmatmul.mubr.bf16.gmra.mrb[0].mxu0 %v471
      %v727 = vpop.f32.mrb[0].mxu0
      %v728 = vadd.f32 %v374, %v727
      %v729 = vpop.f32.mrb[0].mxu0
      %v730 = vpop.f32.mrb[0].mxu0
      %v731 = vadd.f32 %v374, %v730
      %v732 = vpop.f32.mrb[0].mxu0
      %733 = vmatprep.mubr.bf16.mxu0 0
      %734 = vmatmul.mubr.bf16.gmra.mrb[0].mxu0 %v474
      %v735 = vpop.f32.mrb[0].mxu0
      %v736 = vadd.f32 %v374, %v735
      %v737 = vpop.f32.mrb[0].mxu0
      %v738 = vpop.f32.mrb[0].mxu0
      %v739 = vadd.f32 %v374, %v738
      %v740 = vpop.f32.mrb[0].mxu0
      %741 = vmatprep.mubr.bf16.mxu0 0
      %742 = vmatmul.mubr.bf16.gmra.mrb[0].mxu0 %v477
      %v743 = vpop.f32.mrb[0].mxu0
      %v744 = vadd.f32 %v374, %v743
      %v745 = vpop.f32.mrb[0].mxu0
      %v746 = vpop.f32.mrb[0].mxu0
      %v747 = vadd.f32 %v374, %v746
      %v748 = vpop.f32.mrb[0].mxu0
      %749 = vmatprep.mubr.bf16.mxu0 0
      %750 = vmatmul.mubr.bf16.gmra.mrb[0].mxu0 %v480
      %v751 = vpop.f32.mrb[0].mxu0
      %v752 = vadd.f32 %v374, %v751
      %v753 = vpop.f32.mrb[0].mxu0
      %v754 = vpop.f32.mrb[0].mxu0
      %v755 = vadd.f32 %v374, %v754
      %v756 = vpop.f32.mrb[0].mxu0
      %757 = vmatprep.mubr.bf16.mxu0 0
      %758 = vmatmul.mubr.bf16.gmra.mrb[0].mxu0 %v483
      %v759 = vpop.f32.mrb[0].mxu0
      %v760 = vadd.f32 %v374, %v759
      %v761 = vpop.f32.mrb[0].mxu0
      %v762 = vpop.f32.mrb[0].mxu0
      %v763 = vadd.f32 %v374, %v762
      %v764 = vpop.f32.mrb[0].mxu0
      %765 = vmatprep.mubr.bf16.mxu0 0
      %766 = vmatmul.mubr.bf16.gmra.mrb[0].mxu0 %v486
      %v767 = vpop.f32.mrb[0].mxu0
      %v768 = vadd.f32 %v374, %v767
      %v769 = vpop.f32.mrb[0].mxu0
      %v770 = vpop.f32.mrb[0].mxu0
      %v771 = vadd.f32 %v374, %v770
      %v772 = vpop.f32.mrb[0].mxu0
      %773 = vmatprep.mubr.bf16.mxu0 0
      %774 = vmatmul.mubr.bf16.gmra.mrb[0].mxu0 %v489
      %v775 = vpop.f32.mrb[0].mxu0
      %v776 = vadd.f32 %v374, %v775
      %v777 = vpop.f32.mrb[0].mxu0
      %v778 = vpop.f32.mrb[0].mxu0
      %v779 = vadd.f32 %v374, %v778
      %v780 = vpop.f32.mrb[0].mxu0
      %781 = vmatprep.mubr.bf16.mxu0 0
      %782 = vmatmul.mubr.bf16.gmra.mrb[0].mxu0 %v492
      %v783 = vpop.f32.mrb[0].mxu0
      %v784 = vadd.f32 %v374, %v783
      %v785 = vpop.f32.mrb[0].mxu0
      %v786 = vpop.f32.mrb[0].mxu0
      %v787 = vadd.f32 %v374, %v786
      %v788 = vpop.f32.mrb[0].mxu0
      %789 = vmatprep.mubr.bf16.mxu0 0
      %790 = vmatmul.mubr.bf16.gmra.mrb[0].mxu0 %v495
      %v791 = vpop.f32.mrb[0].mxu0
      %v792 = vadd.f32 %v374, %v791
      %v793 = vpop.f32.mrb[0].mxu0
      %v794 = vpop.f32.mrb[0].mxu0
      %v795 = vadd.f32 %v374, %v794
      %v796 = vpop.f32.mrb[0].mxu0
      %797 = vmatprep.mubr.bf16.mxu0 0
      %798 = vmatmul.mubr.bf16.gmra.mrb[0].mxu0 %v498
      %v799 = vpop.f32.mrb[0].mxu0
      %v800 = vadd.f32 %v374, %v799
      %v801 = vpop.f32.mrb[0].mxu0
      %v802 = vpop.f32.mrb[0].mxu0
      %v803 = vadd.f32 %v374, %v802
      %v804 = vpop.f32.mrb[0].mxu0
      %805 = vmatprep.mubr.bf16.mxu0 0
      %806 = vmatmul.mubr.bf16.gmra.mrb[0].mxu0 %v501
      %v807 = vpop.f32.mrb[0].mxu0
      %v808 = vadd.f32 %v374, %v807
      %v809 = vpop.f32.mrb[0].mxu0
      %v810 = vpop.f32.mrb[0].mxu0
      %v811 = vadd.f32 %v374, %v810
      %v812 = vpop.f32.mrb[0].mxu0
      %813 = vmatprep.mubr.bf16.mxu0 0
      %814 = vmatmul.mubr.bf16.gmra.mrb[0].mxu0 %v504
      %v815 = vpop.f32.mrb[0].mxu0
      %v816 = vadd.f32 %v374, %v815
      %v817 = vpop.f32.mrb[0].mxu0
      %v818 = vpop.f32.mrb[0].mxu0
      %v819 = vadd.f32 %v374, %v818
      %v820 = vpop.f32.mrb[0].mxu0
      %821 = vmatprep.mubr.bf16.mxu0 0
      %822 = vmatmul.mubr.bf16.gmra.mrb[0].mxu0 %v507
      %v823 = vpop.f32.mrb[0].mxu0
      %v824 = vadd.f32 %v374, %v823
      %v825 = vpop.f32.mrb[0].mxu0
      %v826 = vpop.f32.mrb[0].mxu0
      %v827 = vadd.f32 %v374, %v826
      %v828 = vpop.f32.mrb[0].mxu0
      %829 = vdwg.mxu0
      %v830 = vmul.f32 %v544, 0.1
      %v831 = vmul.f32 %v547, 0.1
      %v832 = vmul.f32 %v552, 0.1
      %v833 = vmul.f32 %v555, 0.1
      %v834 = vmul.f32 %v560, 0.1
      %v835 = vmul.f32 %v563, 0.1
      %v836 = vmul.f32 %v568, 0.1
      %v837 = vmul.f32 %v571, 0.1
      %v838 = vmul.f32 %v576, 0.1
      %v839 = vmul.f32 %v579, 0.1
      %v840 = vmul.f32 %v584, 0.1
      %v841 = vmul.f32 %v587, 0.1
      %v842 = vmul.f32 %v592, 0.1
      %v843 = vmul.f32 %v595, 0.1
      %v844 = vmul.f32 %v600, 0.1
      %v845 = vmul.f32 %v603, 0.1
      %v846 = vmul.f32 %v608, 0.1
      %v847 = vmul.f32 %v611, 0.1
      %v848 = vmul.f32 %v616, 0.1
      %v849 = vmul.f32 %v619, 0.1
      %v850 = vmul.f32 %v624, 0.1
      %v851 = vmul.f32 %v627, 0.1
      %v852 = vmul.f32 %v632, 0.1
      %v853 = vmul.f32 %v635, 0.1
      %v854 = vmul.f32 %v640, 0.1
      %v855 = vmul.f32 %v643, 0.1
      %v856 = vmul.f32 %v648, 0.1
      %v857 = vmul.f32 %v651, 0.1
      %v858 = vmul.f32 %v656, 0.1
      %v859 = vmul.f32 %v659, 0.1
      %v860 = vmul.f32 %v664, 0.1
      %v861 = vmul.f32 %v667, 0.1
      %v862 = vmul.f32 %v672, 0.1
      %v863 = vmul.f32 %v675, 0.1
      %v864 = vmul.f32 %v680, 0.1
      %v865 = vmul.f32 %v683, 0.1
      %v866 = vmul.f32 %v688, 0.1
      %v867 = vmul.f32 %v691, 0.1
      %v868 = vmul.f32 %v696, 0.1
      %v869 = vmul.f32 %v699, 0.1
      %v870 = vmul.f32 %v704, 0.1
      %v871 = vmul.f32 %v707, 0.1
      %v872 = vmul.f32 %v712, 0.1
      %v873 = vmul.f32 %v715, 0.1
      %v874 = vmul.f32 %v720, 0.1
      %v875 = vmul.f32 %v723, 0.1
      %v876 = vmul.f32 %v728, 0.1
      %v877 = vmul.f32 %v731, 0.1
      %v878 = vmul.f32 %v736, 0.1
      %v879 = vmul.f32 %v739, 0.1
      %v880 = vmul.f32 %v744, 0.1
      %v881 = vmul.f32 %v747, 0.1
      %v882 = vmul.f32 %v752, 0.1
      %v883 = vmul.f32 %v755, 0.1
      %v884 = vmul.f32 %v760, 0.1
      %v885 = vmul.f32 %v763, 0.1
      %v886 = vmul.f32 %v768, 0.1
      %v887 = vmul.f32 %v771, 0.1
      %v888 = vmul.f32 %v776, 0.1
      %v889 = vmul.f32 %v779, 0.1
      %v890 = vmul.f32 %v784, 0.1
      %v891 = vmul.f32 %v787, 0.1
      %v892 = vmul.f32 %v792, 0.1
      %v893 = vmul.f32 %v795, 0.1
      %v894 = vmul.f32 %v800, 0.1
      %v895 = vmul.f32 %v803, 0.1
      %v896 = vmul.f32 %v808, 0.1
      %v897 = vmul.f32 %v811, 0.1
      %v898 = vmul.f32 %v816, 0.1
      %v899 = vmul.f32 %v819, 0.1
      %v900 = vmul.f32 %v824, 0.1
      %v901 = vmul.f32 %v827, 0.1
      %v902 = vmax.f32 %v544, %v830
      %v903 = vmax.f32 %v547, %v831
      %v904 = vmax.f32 %v552, %v832
      %v905 = vmax.f32 %v555, %v833
      %v906 = vmax.f32 %v560, %v834
      %v907 = vmax.f32 %v563, %v835
      %v908 = vmax.f32 %v568, %v836
      %v909 = vmax.f32 %v571, %v837
      %v910 = vmax.f32 %v576, %v838
      %v911 = vmax.f32 %v579, %v839
      %v912 = vmax.f32 %v584, %v840
      %v913 = vmax.f32 %v587, %v841
      %v914 = vmax.f32 %v592, %v842
      %v915 = vmax.f32 %v595, %v843
      %v916 = vmax.f32 %v600, %v844
      %v917 = vmax.f32 %v603, %v845
      %v918 = vmax.f32 %v608, %v846
      %v919 = vmax.f32 %v611, %v847
      %v920 = vmax.f32 %v616, %v848
      %v921 = vmax.f32 %v619, %v849
      %v922 = vmax.f32 %v624, %v850
      %v923 = vmax.f32 %v627, %v851
      %v924 = vmax.f32 %v632, %v852
      %v925 = vmax.f32 %v635, %v853
      %v926 = vmax.f32 %v640, %v854
      %v927 = vmax.f32 %v643, %v855
      %v928 = vmax.f32 %v648, %v856
      %v929 = vmax.f32 %v651, %v857
      %v930 = vmax.f32 %v656, %v858
      %v931 = vmax.f32 %v659, %v859
      %v932 = vmax.f32 %v664, %v860
      %v933 = vmax.f32 %v667, %v861
      %v934 = vmax.f32 %v672, %v862
      %v935 = vmax.f32 %v675, %v863
      %v936 = vmax.f32 %v680, %v864
      %v937 = vmax.f32 %v683, %v865
      %v938 = vmax.f32 %v688, %v866
      %v939 = vmax.f32 %v691, %v867
      %v940 = vmax.f32 %v696, %v868
      %v941 = vmax.f32 %v699, %v869
      %v942 = vmax.f32 %v704, %v870
      %v943 = vmax.f32 %v707, %v871
      %v944 = vmax.f32 %v712, %v872
      %v945 = vmax.f32 %v715, %v873
      %v946 = vmax.f32 %v720, %v874
      %v947 = vmax.f32 %v723, %v875
      %v948 = vmax.f32 %v728, %v876
      %v949 = vmax.f32 %v731, %v877
      %v950 = vmax.f32 %v736, %v878
      %v951 = vmax.f32 %v739, %v879
      %v952 = vmax.f32 %v744, %v880
      %v953 = vmax.f32 %v747, %v881
      %v954 = vmax.f32 %v752, %v882
      %v955 = vmax.f32 %v755, %v883
      %v956 = vmax.f32 %v760, %v884
      %v957 = vmax.f32 %v763, %v885
      %v958 = vmax.f32 %v768, %v886
      %v959 = vmax.f32 %v771, %v887
      %v960 = vmax.f32 %v776, %v888
      %v961 = vmax.f32 %v779, %v889
      %v962 = vmax.f32 %v784, %v890
      %v963 = vmax.f32 %v787, %v891
      %v964 = vmax.f32 %v792, %v892
      %v965 = vmax.f32 %v795, %v893
      %v966 = vmax.f32 %v800, %v894
      %v967 = vmax.f32 %v803, %v895
      %v968 = vmax.f32 %v808, %v896
      %v969 = vmax.f32 %v811, %v897
      %v970 = vmax.f32 %v816, %v898
      %v971 = vmax.f32 %v819, %v899
      %v972 = vmax.f32 %v824, %v900
      %v973 = vmax.f32 %v827, %v901
      %v974 = vld [vmem:[%s1] sm:$0xff]
      %v975 = vld [vmem:[%s1 + $0x8] sm:$0xff]
      %v976 = vld [vmem:[%s1 + $0x10] sm:$0xff]
      %v977 = vld [vmem:[%s1 + $0x18] sm:$0xff]
      %v978 = vld [vmem:[%s1 + $0x20] sm:$0xff]
      %v979 = vld [vmem:[%s1 + $0x28] sm:$0xff]
      %v980 = vld [vmem:[%s1 + $0x30] sm:$0xff]
      %v981 = vld [vmem:[%s1 + $0x38] sm:$0xff]
      %v982 = vld [vmem:[%s1 + $0x40] sm:$0xff]
      %v983 = vld [vmem:[%s1 + $0x48] sm:$0xff]
      %v984 = vld [vmem:[%s1 + $0x50] sm:$0xff]
      %v985 = vld [vmem:[%s1 + $0x58] sm:$0xff]
      %v986 = vld [vmem:[%s1 + $0x60] sm:$0xff]
      %v987 = vld [vmem:[%s1 + $0x68] sm:$0xff]
      %v988 = vld [vmem:[%s1 + $0x70] sm:$0xff]
      %v989 = vld [vmem:[%s1 + $0x78] sm:$0xff]
      %v990 = vld [vmem:[%s1 + $0x80] sm:$0xff]
      %v991 = vld [vmem:[%s1 + $0x88] sm:$0xff]
      %v992 = vld [vmem:[%s1 + $0x90] sm:$0xff]
      %v993 = vld [vmem:[%s1 + $0x98] sm:$0xff]
      %v994 = vld [vmem:[%s1 + $0xa0] sm:$0xff]
      %v995 = vld [vmem:[%s1 + $0xa8] sm:$0xff]
      %v996 = vld [vmem:[%s1 + $0xb0] sm:$0xff]
      %v997 = vld [vmem:[%s1 + $0xb8] sm:$0xff]
      %v998 = vld [vmem:[%s1 + $0xc0] sm:$0xff]
      %v999 = vld [vmem:[%s1 + $0xc8] sm:$0xff]
      %v1000 = vld [vmem:[%s1 + $0xd0] sm:$0xff]
      %v1001 = vld [vmem:[%s1 + $0xd8] sm:$0xff]
      %v1002 = vld [vmem:[%s1 + $0xe0] sm:$0xff]
      %v1003 = vld [vmem:[%s1 + $0xe8] sm:$0xff]
      %v1004 = vld [vmem:[%s1 + $0xf0] sm:$0xff]
      %v1005 = vld [vmem:[%s1 + $0xf8] sm:$0xff]
      %v1006 = vld [vmem:[%s1 + $0x100] sm:$0xff]
      %v1007 = vld [vmem:[%s1 + $0x108] sm:$0xff]
      %v1008 = vld [vmem:[%s1 + $0x110] sm:$0xff]
      %v1009 = vld [vmem:[%s1 + $0x118] sm:$0xff]
      %v1010 = vld [vmem:[%s1 + $0x120] sm:$0xff]
      %v1011 = vld [vmem:[%s1 + $0x128] sm:$0xff]
      %v1012 = vld [vmem:[%s1 + $0x130] sm:$0xff]
      %v1013 = vld [vmem:[%s1 + $0x138] sm:$0xff]
      %v1014 = vld [vmem:[%s1 + $0x140] sm:$0xff]
      %v1015 = vld [vmem:[%s1 + $0x148] sm:$0xff]
      %v1016 = vld [vmem:[%s1 + $0x150] sm:$0xff]
      %v1017 = vld [vmem:[%s1 + $0x158] sm:$0xff]
      %v1018 = vld [vmem:[%s1 + $0x160] sm:$0xff]
      %v1019 = vld [vmem:[%s1 + $0x168] sm:$0xff]
      %v1020 = vld [vmem:[%s1 + $0x170] sm:$0xff]
      %v1021 = vld [vmem:[%s1 + $0x178] sm:$0xff]
      %v1022 = vld [vmem:[%s1 + $0x180] sm:$0xff]
      %v1023 = vld [vmem:[%s1 + $0x188] sm:$0xff]
      %v1024 = vld [vmem:[%s1 + $0x190] sm:$0xff]
      %v1025 = vld [vmem:[%s1 + $0x198] sm:$0xff]
      %v1026 = vld [vmem:[%s1 + $0x1a0] sm:$0xff]
      %v1027 = vld [vmem:[%s1 + $0x1a8] sm:$0xff]
      %v1028 = vld [vmem:[%s1 + $0x1b0] sm:$0xff]
      %v1029 = vld [vmem:[%s1 + $0x1b8] sm:$0xff]
      %v1030 = vld [vmem:[%s1 + $0x1c0] sm:$0xff]
      %v1031 = vld [vmem:[%s1 + $0x1c8] sm:$0xff]
      %v1032 = vld [vmem:[%s1 + $0x1d0] sm:$0xff]
      %v1033 = vld [vmem:[%s1 + $0x1d8] sm:$0xff]
      %v1034 = vld [vmem:[%s1 + $0x1e0] sm:$0xff]
      %v1035 = vld [vmem:[%s1 + $0x1e8] sm:$0xff]
      %v1036 = vld [vmem:[%s1 + $0x1f0] sm:$0xff]
      %v1037 = vld [vmem:[%s1 + $0x1f8] sm:$0xff]
      %v1038 = vld [vmem:[%s1 + $0x200] sm:$0xff]
      %v1039 = vld [vmem:[%s1 + $0x208] sm:$0xff]
      %v1040 = vld [vmem:[%s1 + $0x210] sm:$0xff]
      %v1041 = vld [vmem:[%s1 + $0x218] sm:$0xff]
      %v1042 = vld [vmem:[%s1 + $0x220] sm:$0xff]
      %v1043 = vld [vmem:[%s1 + $0x228] sm:$0xff]
      %v1044 = vld [vmem:[%s1 + $0x230] sm:$0xff]
      %v1045 = vld [vmem:[%s1 + $0x238] sm:$0xff]
      %1047 = vset.pattern.permute.xlu0 0
      %1048 = vperm.xlu0 %1047, %v974
      %v1049 = vpop.permute.xlu0 %1048
      %1052 = vset.pattern.permute.xlu0 0
      %1053 = vperm.xlu0 %1052, %v975
      %v1054 = vpop.permute.xlu0 %1053
      %1057 = vset.pattern.permute.xlu0 0
      %1058 = vperm.xlu0 %1057, %v976
      %v1059 = vpop.permute.xlu0 %1058
      %1062 = vset.pattern.permute.xlu0 0
      %1063 = vperm.xlu0 %1062, %v977
      %v1064 = vpop.permute.xlu0 %1063
      %1067 = vset.pattern.permute.xlu0 0
      %1068 = vperm.xlu0 %1067, %v978
      %v1069 = vpop.permute.xlu0 %1068
      %1072 = vset.pattern.permute.xlu0 0
      %1073 = vperm.xlu0 %1072, %v979
      %v1074 = vpop.permute.xlu0 %1073
      %1077 = vset.pattern.permute.xlu0 0
      %1078 = vperm.xlu0 %1077, %v980
      %v1079 = vpop.permute.xlu0 %1078
      %1082 = vset.pattern.permute.xlu0 0
      %1083 = vperm.xlu0 %1082, %v981
      %v1084 = vpop.permute.xlu0 %1083
      %1087 = vset.pattern.permute.xlu0 0
      %1088 = vperm.xlu0 %1087, %v982
      %v1089 = vpop.permute.xlu0 %1088
      %1092 = vset.pattern.permute.xlu0 0
      %1093 = vperm.xlu0 %1092, %v983
      %v1094 = vpop.permute.xlu0 %1093
      %1097 = vset.pattern.permute.xlu0 0
      %1098 = vperm.xlu0 %1097, %v984
      %v1099 = vpop.permute.xlu0 %1098
      %1102 = vset.pattern.permute.xlu0 0
      %1103 = vperm.xlu0 %1102, %v985
      %v1104 = vpop.permute.xlu0 %1103
      %1107 = vset.pattern.permute.xlu0 0
      %1108 = vperm.xlu0 %1107, %v986
      %v1109 = vpop.permute.xlu0 %1108
      %1112 = vset.pattern.permute.xlu0 0
      %1113 = vperm.xlu0 %1112, %v987
      %v1114 = vpop.permute.xlu0 %1113
      %1117 = vset.pattern.permute.xlu0 0
      %1118 = vperm.xlu0 %1117, %v988
      %v1119 = vpop.permute.xlu0 %1118
      %1122 = vset.pattern.permute.xlu0 0
      %1123 = vperm.xlu0 %1122, %v989
      %v1124 = vpop.permute.xlu0 %1123
      %1127 = vset.pattern.permute.xlu0 0
      %1128 = vperm.xlu0 %1127, %v990
      %v1129 = vpop.permute.xlu0 %1128
      %1132 = vset.pattern.permute.xlu0 0
      %1133 = vperm.xlu0 %1132, %v991
      %v1134 = vpop.permute.xlu0 %1133
      %1137 = vset.pattern.permute.xlu0 0
      %1138 = vperm.xlu0 %1137, %v992
      %v1139 = vpop.permute.xlu0 %1138
      %1142 = vset.pattern.permute.xlu0 0
      %1143 = vperm.xlu0 %1142, %v993
      %v1144 = vpop.permute.xlu0 %1143
      %1147 = vset.pattern.permute.xlu0 0
      %1148 = vperm.xlu0 %1147, %v994
      %v1149 = vpop.permute.xlu0 %1148
      %1152 = vset.pattern.permute.xlu0 0
      %1153 = vperm.xlu0 %1152, %v995
      %v1154 = vpop.permute.xlu0 %1153
      %1157 = vset.pattern.permute.xlu0 0
      %1158 = vperm.xlu0 %1157, %v996
      %v1159 = vpop.permute.xlu0 %1158
      %1162 = vset.pattern.permute.xlu0 0
      %1163 = vperm.xlu0 %1162, %v997
      %v1164 = vpop.permute.xlu0 %1163
      %1167 = vset.pattern.permute.xlu0 0
      %1168 = vperm.xlu0 %1167, %v998
      %v1169 = vpop.permute.xlu0 %1168
      %1172 = vset.pattern.permute.xlu0 0
      %1173 = vperm.xlu0 %1172, %v999
      %v1174 = vpop.permute.xlu0 %1173
      %1177 = vset.pattern.permute.xlu0 0
      %1178 = vperm.xlu0 %1177, %v1000
      %v1179 = vpop.permute.xlu0 %1178
      %1182 = vset.pattern.permute.xlu0 0
      %1183 = vperm.xlu0 %1182, %v1001
      %v1184 = vpop.permute.xlu0 %1183
      %1187 = vset.pattern.permute.xlu0 0
      %1188 = vperm.xlu0 %1187, %v1002
      %v1189 = vpop.permute.xlu0 %1188
      %1192 = vset.pattern.permute.xlu0 0
      %1193 = vperm.xlu0 %1192, %v1003
      %v1194 = vpop.permute.xlu0 %1193
      %1197 = vset.pattern.permute.xlu0 0
      %1198 = vperm.xlu0 %1197, %v1004
      %v1199 = vpop.permute.xlu0 %1198
      %1202 = vset.pattern.permute.xlu0 0
      %1203 = vperm.xlu0 %1202, %v1005
      %v1204 = vpop.permute.xlu0 %1203
      %1207 = vset.pattern.permute.xlu0 0
      %1208 = vperm.xlu0 %1207, %v1006
      %v1209 = vpop.permute.xlu0 %1208
      %1212 = vset.pattern.permute.xlu0 0
      %1213 = vperm.xlu0 %1212, %v1007
      %v1214 = vpop.permute.xlu0 %1213
      %1217 = vset.pattern.permute.xlu0 0
      %1218 = vperm.xlu0 %1217, %v1008
      %v1219 = vpop.permute.xlu0 %1218
      %1222 = vset.pattern.permute.xlu0 0
      %1223 = vperm.xlu0 %1222, %v1009
      %v1224 = vpop.permute.xlu0 %1223
      %1227 = vset.pattern.permute.xlu0 0
      %1228 = vperm.xlu0 %1227, %v1010
      %v1229 = vpop.permute.xlu0 %1228
      %1232 = vset.pattern.permute.xlu0 0
      %1233 = vperm.xlu0 %1232, %v1011
      %v1234 = vpop.permute.xlu0 %1233
      %1237 = vset.pattern.permute.xlu0 0
      %1238 = vperm.xlu0 %1237, %v1012
      %v1239 = vpop.permute.xlu0 %1238
      %1242 = vset.pattern.permute.xlu0 0
      %1243 = vperm.xlu0 %1242, %v1013
      %v1244 = vpop.permute.xlu0 %1243
      %1247 = vset.pattern.permute.xlu0 0
      %1248 = vperm.xlu0 %1247, %v1014
      %v1249 = vpop.permute.xlu0 %1248
      %1252 = vset.pattern.permute.xlu0 0
      %1253 = vperm.xlu0 %1252, %v1015
      %v1254 = vpop.permute.xlu0 %1253
      %1257 = vset.pattern.permute.xlu0 0
      %1258 = vperm.xlu0 %1257, %v1016
      %v1259 = vpop.permute.xlu0 %1258
      %1262 = vset.pattern.permute.xlu0 0
      %1263 = vperm.xlu0 %1262, %v1017
      %v1264 = vpop.permute.xlu0 %1263
      %1267 = vset.pattern.permute.xlu0 0
      %1268 = vperm.xlu0 %1267, %v1018
      %v1269 = vpop.permute.xlu0 %1268
      %1272 = vset.pattern.permute.xlu0 0
      %1273 = vperm.xlu0 %1272, %v1019
      %v1274 = vpop.permute.xlu0 %1273
      %1277 = vset.pattern.permute.xlu0 0
      %1278 = vperm.xlu0 %1277, %v1020
      %v1279 = vpop.permute.xlu0 %1278
      %1282 = vset.pattern.permute.xlu0 0
      %1283 = vperm.xlu0 %1282, %v1021
      %v1284 = vpop.permute.xlu0 %1283
      %1287 = vset.pattern.permute.xlu0 0
      %1288 = vperm.xlu0 %1287, %v1022
      %v1289 = vpop.permute.xlu0 %1288
      %1292 = vset.pattern.permute.xlu0 0
      %1293 = vperm.xlu0 %1292, %v1023
      %v1294 = vpop.permute.xlu0 %1293
      %1297 = vset.pattern.permute.xlu0 0
      %1298 = vperm.xlu0 %1297, %v1024
      %v1299 = vpop.permute.xlu0 %1298
      %1302 = vset.pattern.permute.xlu0 0
      %1303 = vperm.xlu0 %1302, %v1025
      %v1304 = vpop.permute.xlu0 %1303
      %1307 = vset.pattern.permute.xlu0 0
      %1308 = vperm.xlu0 %1307, %v1026
      %v1309 = vpop.permute.xlu0 %1308
      %1312 = vset.pattern.permute.xlu0 0
      %1313 = vperm.xlu0 %1312, %v1027
      %v1314 = vpop.permute.xlu0 %1313
      %1317 = vset.pattern.permute.xlu0 0
      %1318 = vperm.xlu0 %1317, %v1028
      %v1319 = vpop.permute.xlu0 %1318
      %1322 = vset.pattern.permute.xlu0 0
      %1323 = vperm.xlu0 %1322, %v1029
      %v1324 = vpop.permute.xlu0 %1323
      %1327 = vset.pattern.permute.xlu0 0
      %1328 = vperm.xlu0 %1327, %v1030
      %v1329 = vpop.permute.xlu0 %1328
      %1332 = vset.pattern.permute.xlu0 0
      %1333 = vperm.xlu0 %1332, %v1031
      %v1334 = vpop.permute.xlu0 %1333
      %1337 = vset.pattern.permute.xlu0 0
      %1338 = vperm.xlu0 %1337, %v1032
      %v1339 = vpop.permute.xlu0 %1338
      %1342 = vset.pattern.permute.xlu0 0
      %1343 = vperm.xlu0 %1342, %v1033
      %v1344 = vpop.permute.xlu0 %1343
      %1347 = vset.pattern.permute.xlu0 0
      %1348 = vperm.xlu0 %1347, %v1034
      %v1349 = vpop.permute.xlu0 %1348
      %1352 = vset.pattern.permute.xlu0 0
      %1353 = vperm.xlu0 %1352, %v1035
      %v1354 = vpop.permute.xlu0 %1353
      %1357 = vset.pattern.permute.xlu0 0
      %1358 = vperm.xlu0 %1357, %v1036
      %v1359 = vpop.permute.xlu0 %1358
      %1362 = vset.pattern.permute.xlu0 0
      %1363 = vperm.xlu0 %1362, %v1037
      %v1364 = vpop.permute.xlu0 %1363
      %1367 = vset.pattern.permute.xlu0 0
      %1368 = vperm.xlu0 %1367, %v1038
      %v1369 = vpop.permute.xlu0 %1368
      %1372 = vset.pattern.permute.xlu0 0
      %1373 = vperm.xlu0 %1372, %v1039
      %v1374 = vpop.permute.xlu0 %1373
      %1377 = vset.pattern.permute.xlu0 0
      %1378 = vperm.xlu0 %1377, %v1040
      %v1379 = vpop.permute.xlu0 %1378
      %1382 = vset.pattern.permute.xlu0 0
      %1383 = vperm.xlu0 %1382, %v1041
      %v1384 = vpop.permute.xlu0 %1383
      %1387 = vset.pattern.permute.xlu0 0
      %1388 = vperm.xlu0 %1387, %v1042
      %v1389 = vpop.permute.xlu0 %1388
      %1392 = vset.pattern.permute.xlu0 0
      %1393 = vperm.xlu0 %1392, %v1043
      %v1394 = vpop.permute.xlu0 %1393
      %1397 = vset.pattern.permute.xlu0 0
      %1398 = vperm.xlu0 %1397, %v1044
      %v1399 = vpop.permute.xlu0 %1398
      %1402 = vset.pattern.permute.xlu0 0
      %1403 = vperm.xlu0 %1402, %v1045
      %v1404 = vpop.permute.xlu0 %1403
      %v1406 = vmul.f32 %v902, %v1049
      %v1407 = vmul.f32 %v903, %v1054
      %v1408 = vmul.f32 %v904, %v1059
      %v1409 = vmul.f32 %v905, %v1064
      %v1410 = vmul.f32 %v906, %v1069
      %v1411 = vmul.f32 %v907, %v1074
      %v1412 = vmul.f32 %v908, %v1079
      %v1413 = vmul.f32 %v909, %v1084
      %v1414 = vmul.f32 %v910, %v1089
      %v1415 = vmul.f32 %v911, %v1094
      %v1416 = vmul.f32 %v912, %v1099
      %v1417 = vmul.f32 %v913, %v1104
      %v1418 = vmul.f32 %v914, %v1109
      %v1419 = vmul.f32 %v915, %v1114
      %v1420 = vmul.f32 %v916, %v1119
      %v1421 = vmul.f32 %v917, %v1124
      %v1422 = vmul.f32 %v918, %v1129
      %v1423 = vmul.f32 %v919, %v1134
      %v1424 = vmul.f32 %v920, %v1139
      %v1425 = vmul.f32 %v921, %v1144
      %v1426 = vmul.f32 %v922, %v1149
      %v1427 = vmul.f32 %v923, %v1154
      %v1428 = vmul.f32 %v924, %v1159
      %v1429 = vmul.f32 %v925, %v1164
      %v1430 = vmul.f32 %v926, %v1169
      %v1431 = vmul.f32 %v927, %v1174
      %v1432 = vmul.f32 %v928, %v1179
      %v1433 = vmul.f32 %v929, %v1184
      %v1434 = vmul.f32 %v930, %v1189
      %v1435 = vmul.f32 %v931, %v1194
      %v1436 = vmul.f32 %v932, %v1199
      %v1437 = vmul.f32 %v933, %v1204
      %v1438 = vmul.f32 %v934, %v1209
      %v1439 = vmul.f32 %v935, %v1214
      %v1440 = vmul.f32 %v936, %v1219
      %v1441 = vmul.f32 %v937, %v1224
      %v1442 = vmul.f32 %v938, %v1229
      %v1443 = vmul.f32 %v939, %v1234
      %v1444 = vmul.f32 %v940, %v1239
      %v1445 = vmul.f32 %v941, %v1244
      %v1446 = vmul.f32 %v942, %v1249
      %v1447 = vmul.f32 %v943, %v1254
      %v1448 = vmul.f32 %v944, %v1259
      %v1449 = vmul.f32 %v945, %v1264
      %v1450 = vmul.f32 %v946, %v1269
      %v1451 = vmul.f32 %v947, %v1274
      %v1452 = vmul.f32 %v948, %v1279
      %v1453 = vmul.f32 %v949, %v1284
      %v1454 = vmul.f32 %v950, %v1289
      %v1455 = vmul.f32 %v951, %v1294
      %v1456 = vmul.f32 %v952, %v1299
      %v1457 = vmul.f32 %v953, %v1304
      %v1458 = vmul.f32 %v954, %v1309
      %v1459 = vmul.f32 %v955, %v1314
      %v1460 = vmul.f32 %v956, %v1319
      %v1461 = vmul.f32 %v957, %v1324
      %v1462 = vmul.f32 %v958, %v1329
      %v1463 = vmul.f32 %v959, %v1334
      %v1464 = vmul.f32 %v960, %v1339
      %v1465 = vmul.f32 %v961, %v1344
      %v1466 = vmul.f32 %v962, %v1349
      %v1467 = vmul.f32 %v963, %v1354
      %v1468 = vmul.f32 %v964, %v1359
      %v1469 = vmul.f32 %v965, %v1364
      %v1470 = vmul.f32 %v966, %v1369
      %v1471 = vmul.f32 %v967, %v1374
      %v1472 = vmul.f32 %v968, %v1379
      %v1473 = vmul.f32 %v969, %v1384
      %v1474 = vmul.f32 %v970, %v1389
      %v1475 = vmul.f32 %v971, %v1394
      %v1476 = vmul.f32 %v972, %v1399
      %v1477 = vmul.f32 %v973, %v1404
      %v1478 = vpack.c.bf16 %v1407, %v1406
      %v1479 = vpack.c.bf16 %v1409, %v1408
      %v1480 = vpack.c.bf16 %v1411, %v1410
      %v1481 = vpack.c.bf16 %v1413, %v1412
      %v1482 = vpack.c.bf16 %v1415, %v1414
      %v1483 = vpack.c.bf16 %v1417, %v1416
      %v1484 = vpack.c.bf16 %v1419, %v1418
      %v1485 = vpack.c.bf16 %v1421, %v1420
      %v1486 = vpack.c.bf16 %v1423, %v1422
      %v1487 = vpack.c.bf16 %v1425, %v1424
      %v1488 = vpack.c.bf16 %v1427, %v1426
      %v1489 = vpack.c.bf16 %v1429, %v1428
      %v1490 = vpack.c.bf16 %v1431, %v1430
      %v1491 = vpack.c.bf16 %v1433, %v1432
      %v1492 = vpack.c.bf16 %v1435, %v1434
      %v1493 = vpack.c.bf16 %v1437, %v1436
      %v1494 = vpack.c.bf16 %v1439, %v1438
      %v1495 = vpack.c.bf16 %v1441, %v1440
      %v1496 = vpack.c.bf16 %v1443, %v1442
      %v1497 = vpack.c.bf16 %v1445, %v1444
      %v1498 = vpack.c.bf16 %v1447, %v1446
      %v1499 = vpack.c.bf16 %v1449, %v1448
      %v1500 = vpack.c.bf16 %v1451, %v1450
      %v1501 = vpack.c.bf16 %v1453, %v1452
      %v1502 = vpack.c.bf16 %v1455, %v1454
      %v1503 = vpack.c.bf16 %v1457, %v1456
      %v1504 = vpack.c.bf16 %v1459, %v1458
      %v1505 = vpack.c.bf16 %v1461, %v1460
      %v1506 = vpack.c.bf16 %v1463, %v1462
      %v1507 = vpack.c.bf16 %v1465, %v1464
      %v1508 = vpack.c.bf16 %v1467, %v1466
      %v1509 = vpack.c.bf16 %v1469, %v1468
      %v1510 = vpack.c.bf16 %v1471, %v1470
      %v1511 = vpack.c.bf16 %v1473, %v1472
      %v1512 = vpack.c.bf16 %v1475, %v1474
      %v1513 = vpack.c.bf16 %v1477, %v1476
      %vm1514 = vcmask 261120
      %1515 = vst.msk [vmem:[#allocation2 + $0x20] sm:$0xff] %vm1514, %v1478
      %1516 = vst.msk [vmem:[#allocation2 + $0x28] sm:$0xff] %vm1514, %v1479
      %1517 = vst.msk [vmem:[#allocation2 + $0x30] sm:$0xff] %vm1514, %v1480
      %1518 = vst.msk [vmem:[#allocation2 + $0x38] sm:$0xff] %vm1514, %v1481
      %1519 = vst.msk [vmem:[#allocation2 + $0x40] sm:$0xff] %vm1514, %v1482
      %1520 = vst.msk [vmem:[#allocation2 + $0x48] sm:$0xff] %vm1514, %v1483
      %1521 = vst.msk [vmem:[#allocation2 + $0x50] sm:$0xff] %vm1514, %v1484
      %1522 = vst.msk [vmem:[#allocation2 + $0x58] sm:$0xff] %vm1514, %v1485
      %1523 = vst.msk [vmem:[#allocation2 + $0x60] sm:$0xff] %vm1514, %v1486
      %1524 = vst.msk [vmem:[#allocation2 + $0x68] sm:$0xff] %vm1514, %v1487
      %1525 = vst.msk [vmem:[#allocation2 + $0x70] sm:$0xff] %vm1514, %v1488
      %1526 = vst.msk [vmem:[#allocation2 + $0x78] sm:$0xff] %vm1514, %v1489
      %1527 = vst.msk [vmem:[#allocation2 + $0x80] sm:$0xff] %vm1514, %v1490
      %1528 = vst.msk [vmem:[#allocation2 + $0x88] sm:$0xff] %vm1514, %v1491
      %1529 = vst.msk [vmem:[#allocation2 + $0x90] sm:$0xff] %vm1514, %v1492
      %1530 = vst.msk [vmem:[#allocation2 + $0x98] sm:$0xff] %vm1514, %v1493
      %1531 = vst.msk [vmem:[#allocation2 + $0xa0] sm:$0xff] %vm1514, %v1494
      %1532 = vst.msk [vmem:[#allocation2 + $0xa8] sm:$0xff] %vm1514, %v1495
      %1533 = vst.msk [vmem:[#allocation2 + $0xb0] sm:$0xff] %vm1514, %v1496
      %1534 = vst.msk [vmem:[#allocation2 + $0xb8] sm:$0xff] %vm1514, %v1497
      %1535 = vst.msk [vmem:[#allocation2 + $0xc0] sm:$0xff] %vm1514, %v1498
      %1536 = vst.msk [vmem:[#allocation2 + $0xc8] sm:$0xff] %vm1514, %v1499
      %1537 = vst.msk [vmem:[#allocation2 + $0xd0] sm:$0xff] %vm1514, %v1500
      %1538 = vst.msk [vmem:[#allocation2 + $0xd8] sm:$0xff] %vm1514, %v1501
      %1539 = vst.msk [vmem:[#allocation2 + $0xe0] sm:$0xff] %vm1514, %v1502
      %1540 = vst.msk [vmem:[#allocation2 + $0xe8] sm:$0xff] %vm1514, %v1503
      %1541 = vst.msk [vmem:[#allocation2 + $0xf0] sm:$0xff] %vm1514, %v1504
      %1542 = vst.msk [vmem:[#allocation2 + $0xf8] sm:$0xff] %vm1514, %v1505
      %1543 = vst.msk [vmem:[#allocation2 + $0x100] sm:$0xff] %vm1514, %v1506
      %1544 = vst.msk [vmem:[#allocation2 + $0x108] sm:$0xff] %vm1514, %v1507
      %1545 = vst.msk [vmem:[#allocation2 + $0x110] sm:$0xff] %vm1514, %v1508
      %1546 = vst.msk [vmem:[#allocation2 + $0x118] sm:$0xff] %vm1514, %v1509
      %1547 = vst.msk [vmem:[#allocation2 + $0x120] sm:$0xff] %vm1514, %v1510
      %1548 = vst.msk [vmem:[#allocation2 + $0x128] sm:$0xff] %vm1514, %v1511
      %1549 = vst.msk [vmem:[#allocation2 + $0x130] sm:$0xff] %vm1514, %v1512
      %1550 = vst.msk [vmem:[#allocation2 + $0x138] sm:$0xff] %vm1514, %v1513
      %vm1551 = vcmask 523520
      %1552 = vst.msk [vmem:[#allocation2 + $0x10] sm:$0xff] %vm1551, %v1478
      %1553 = vst.msk [vmem:[#allocation2 + $0x18] sm:$0xff] %vm1551, %v1479
      %1554 = vst.msk [vmem:[#allocation2 + $0x20] sm:$0xff] %vm1551, %v1480
      %1555 = vst.msk [vmem:[#allocation2 + $0x28] sm:$0xff] %vm1551, %v1481
      %1556 = vst.msk [vmem:[#allocation2 + $0x30] sm:$0xff] %vm1551, %v1482
      %1557 = vst.msk [vmem:[#allocation2 + $0x38] sm:$0xff] %vm1551, %v1483
      %1558 = vst.msk [vmem:[#allocation2 + $0x40] sm:$0xff] %vm1551, %v1484
      %1559 = vst.msk [vmem:[#allocation2 + $0x48] sm:$0xff] %vm1551, %v1485
      %1560 = vst.msk [vmem:[#allocation2 + $0x50] sm:$0xff] %vm1551, %v1486
      %1561 = vst.msk [vmem:[#allocation2 + $0x58] sm:$0xff] %vm1551, %v1487
      %1562 = vst.msk [vmem:[#allocation2 + $0x60] sm:$0xff] %vm1551, %v1488
      %1563 = vst.msk [vmem:[#allocation2 + $0x68] sm:$0xff] %vm1551, %v1489
      %1564 = vst.msk [vmem:[#allocation2 + $0x70] sm:$0xff] %vm1551, %v1490
      %1565 = vst.msk [vmem:[#allocation2 + $0x78] sm:$0xff] %vm1551, %v1491
      %1566 = vst.msk [vmem:[#allocation2 + $0x80] sm:$0xff] %vm1551, %v1492
      %1567 = vst.msk [vmem:[#allocation2 + $0x88] sm:$0xff] %vm1551, %v1493
      %1568 = vst.msk [vmem:[#allocation2 + $0x90] sm:$0xff] %vm1551, %v1494
      %1569 = vst.msk [vmem:[#allocation2 + $0x98] sm:$0xff] %vm1551, %v1495
      %1570 = vst.msk [vmem:[#allocation2 + $0xa0] sm:$0xff] %vm1551, %v1496
      %1571 = vst.msk [vmem:[#allocation2 + $0xa8] sm:$0xff] %vm1551, %v1497
      %1572 = vst.msk [vmem:[#allocation2 + $0xb0] sm:$0xff] %vm1551, %v1498
      %1573 = vst.msk [vmem:[#allocation2 + $0xb8] sm:$0xff] %vm1551, %v1499
      %1574 = vst.msk [vmem:[#allocation2 + $0xc0] sm:$0xff] %vm1551, %v1500
      %1575 = vst.msk [vmem:[#allocation2 + $0xc8] sm:$0xff] %vm1551, %v1501
      %1576 = vst.msk [vmem:[#allocation2 + $0xd0] sm:$0xff] %vm1551, %v1502
      %1577 = vst.msk [vmem:[#allocation2 + $0xd8] sm:$0xff] %vm1551, %v1503
      %1578 = vst.msk [vmem:[#allocation2 + $0xe0] sm:$0xff] %vm1551, %v1504
      %1579 = vst.msk [vmem:[#allocation2 + $0xe8] sm:$0xff] %vm1551, %v1505
      %1580 = vst.msk [vmem:[#allocation2 + $0xf0] sm:$0xff] %vm1551, %v1506
      %1581 = vst.msk [vmem:[#allocation2 + $0xf8] sm:$0xff] %vm1551, %v1507
      %1582 = vst.msk [vmem:[#allocation2 + $0x100] sm:$0xff] %vm1551, %v1508
      %1583 = vst.msk [vmem:[#allocation2 + $0x108] sm:$0xff] %vm1551, %v1509
      %1584 = vst.msk [vmem:[#allocation2 + $0x110] sm:$0xff] %vm1551, %v1510
      %1585 = vst.msk [vmem:[#allocation2 + $0x118] sm:$0xff] %vm1551, %v1511
      %1586 = vst.msk [vmem:[#allocation2 + $0x120] sm:$0xff] %vm1551, %v1512
      %1587 = vst.msk [vmem:[#allocation2 + $0x128] sm:$0xff] %vm1551, %v1513
      %vm1588 = vcmask 785920
      %1589 = vst.msk [vmem:[#allocation2] sm:$0xff] %vm1588, %v1478
      %1590 = vst.msk [vmem:[#allocation2 + $0x8] sm:$0xff] %vm1588, %v1479
      %1591 = vst.msk [vmem:[#allocation2 + $0x10] sm:$0xff] %vm1588, %v1480
      %1592 = vst.msk [vmem:[#allocation2 + $0x18] sm:$0xff] %vm1588, %v1481
      %1593 = vst.msk [vmem:[#allocation2 + $0x20] sm:$0xff] %vm1588, %v1482
      %1594 = vst.msk [vmem:[#allocation2 + $0x28] sm:$0xff] %vm1588, %v1483
      %1595 = vst.msk [vmem:[#allocation2 + $0x30] sm:$0xff] %vm1588, %v1484
      %1596 = vst.msk [vmem:[#allocation2 + $0x38] sm:$0xff] %vm1588, %v1485
      %1597 = vst.msk [vmem:[#allocation2 + $0x40] sm:$0xff] %vm1588, %v1486
      %1598 = vst.msk [vmem:[#allocation2 + $0x48] sm:$0xff] %vm1588, %v1487
      %1599 = vst.msk [vmem:[#allocation2 + $0x50] sm:$0xff] %vm1588, %v1488
      %1600 = vst.msk [vmem:[#allocation2 + $0x58] sm:$0xff] %vm1588, %v1489
      %1601 = vst.msk [vmem:[#allocation2 + $0x60] sm:$0xff] %vm1588, %v1490
      %1602 = vst.msk [vmem:[#allocation2 + $0x68] sm:$0xff] %vm1588, %v1491
      %1603 = vst.msk [vmem:[#allocation2 + $0x70] sm:$0xff] %vm1588, %v1492
      %1604 = vst.msk [vmem:[#allocation2 + $0x78] sm:$0xff] %vm1588, %v1493
      %1605 = vst.msk [vmem:[#allocation2 + $0x80] sm:$0xff] %vm1588, %v1494
      %1606 = vst.msk [vmem:[#allocation2 + $0x88] sm:$0xff] %vm1588, %v1495
      %1607 = vst.msk [vmem:[#allocation2 + $0x90] sm:$0xff] %vm1588, %v1496
      %1608 = vst.msk [vmem:[#allocation2 + $0x98] sm:$0xff] %vm1588, %v1497
      %1609 = vst.msk [vmem:[#allocation2 + $0xa0] sm:$0xff] %vm1588, %v1498
      %1610 = vst.msk [vmem:[#allocation2 + $0xa8] sm:$0xff] %vm1588, %v1499
      %1611 = vst.msk [vmem:[#allocation2 + $0xb0] sm:$0xff] %vm1588, %v1500
      %1612 = vst.msk [vmem:[#allocation2 + $0xb8] sm:$0xff] %vm1588, %v1501
      %1613 = vst.msk [vmem:[#allocation2 + $0xc0] sm:$0xff] %vm1588, %v1502
      %1614 = vst.msk [vmem:[#allocation2 + $0xc8] sm:$0xff] %vm1588, %v1503
      %1615 = vst.msk [vmem:[#allocation2 + $0xd0] sm:$0xff] %vm1588, %v1504
      %1616 = vst.msk [vmem:[#allocation2 + $0xd8] sm:$0xff] %vm1588, %v1505
      %1617 = vst.msk [vmem:[#allocation2 + $0xe0] sm:$0xff] %vm1588, %v1506
      %1618 = vst.msk [vmem:[#allocation2 + $0xe8] sm:$0xff] %vm1588, %v1507
      %1619 = vst.msk [vmem:[#allocation2 + $0xf0] sm:$0xff] %vm1588, %v1508
      %1620 = vst.msk [vmem:[#allocation2 + $0xf8] sm:$0xff] %vm1588, %v1509
      %1621 = vst.msk [vmem:[#allocation2 + $0x100] sm:$0xff] %vm1588, %v1510
      %1622 = vst.msk [vmem:[#allocation2 + $0x108] sm:$0xff] %vm1588, %v1511
      %1623 = vst.msk [vmem:[#allocation2 + $0x110] sm:$0xff] %vm1588, %v1512
      %1624 = vst.msk [vmem:[#allocation2 + $0x118] sm:$0xff] %vm1588, %v1513
      %v1625 = vld [vmem:[#allocation2 + $0x20] sm:$0xff]
      %v1626 = vld [vmem:[#allocation2 + $0x28] sm:$0xff]
      %v1627 = vld [vmem:[#allocation2 + $0x30] sm:$0xff]
      %v1628 = vld [vmem:[#allocation2 + $0x38] sm:$0xff]
      %v1629 = vld [vmem:[#allocation2 + $0x40] sm:$0xff]
      %v1630 = vld [vmem:[#allocation2 + $0x48] sm:$0xff]
      %v1631 = vld [vmem:[#allocation2 + $0x50] sm:$0xff]
      %v1632 = vld [vmem:[#allocation2 + $0x58] sm:$0xff]
      %v1633 = vld [vmem:[#allocation2 + $0x60] sm:$0xff]
      %v1634 = vld [vmem:[#allocation2 + $0x68] sm:$0xff]
      %v1635 = vld [vmem:[#allocation2 + $0x70] sm:$0xff]
      %v1636 = vld [vmem:[#allocation2 + $0x78] sm:$0xff]
      %v1637 = vld [vmem:[#allocation2 + $0x80] sm:$0xff]
      %v1638 = vld [vmem:[#allocation2 + $0x88] sm:$0xff]
      %v1639 = vld [vmem:[#allocation2 + $0x90] sm:$0xff]
      %v1640 = vld [vmem:[#allocation2 + $0x98] sm:$0xff]
      %v1641 = vld [vmem:[#allocation2 + $0xa0] sm:$0xff]
      %v1642 = vld [vmem:[#allocation2 + $0xa8] sm:$0xff]
      %v1643 = vld [vmem:[#allocation2 + $0xb0] sm:$0xff]
      %v1644 = vld [vmem:[#allocation2 + $0xb8] sm:$0xff]
      %v1645 = vld [vmem:[#allocation2 + $0xc0] sm:$0xff]
      %v1646 = vld [vmem:[#allocation2 + $0xc8] sm:$0xff]
      %v1647 = vld [vmem:[#allocation2 + $0xd0] sm:$0xff]
      %v1648 = vld [vmem:[#allocation2 + $0xd8] sm:$0xff]
      %v1649 = vld [vmem:[#allocation2 + $0xe0] sm:$0xff]
      %v1650 = vld [vmem:[#allocation2 + $0xe8] sm:$0xff]
      %v1651 = vld [vmem:[#allocation2 + $0xf0] sm:$0xff]
      %v1652 = vld [vmem:[#allocation2 + $0xf8] sm:$0xff]
      %v1653 = vld [vmem:[#allocation2 + $0x100] sm:$0xff]
      %v1654 = vld [vmem:[#allocation2 + $0x108] sm:$0xff]
      %v1655 = vld [vmem:[#allocation2 + $0x110] sm:$0xff]
      %v1656 = vld [vmem:[#allocation2 + $0x118] sm:$0xff]
      %v1657 = vld [vmem:[%s4] sm:$0xff]
      %v1658 = vld [vmem:[%s4 + $0x8] sm:$0xff]
      %v1659 = vld [vmem:[%s4 + $0x10] sm:$0xff]
      %v1660 = vld [vmem:[%s4 + $0x18] sm:$0xff]
      %v1661 = vld [vmem:[%s4 + $0x20] sm:$0xff]
      %v1662 = vld [vmem:[%s4 + $0x28] sm:$0xff]
      %v1663 = vld [vmem:[%s4 + $0x30] sm:$0xff]
      %v1664 = vld [vmem:[%s4 + $0x38] sm:$0xff]
      %v1665 = vld [vmem:[%s4 + $0x40] sm:$0xff]
      %v1666 = vld [vmem:[%s4 + $0x48] sm:$0xff]
      %v1667 = vld [vmem:[%s4 + $0x50] sm:$0xff]
      %v1668 = vld [vmem:[%s4 + $0x58] sm:$0xff]
      %v1681 = vunpack.c.l.b16 %v1657
      %v1682 = vunpack.c.h.b16 %v1657
      %v1683 = vunpack.c.l.b16 %v1658
      %v1684 = vunpack.c.h.b16 %v1658
      %v1685 = vunpack.c.l.b16 %v1659
      %v1686 = vunpack.c.h.b16 %v1659
      %v1687 = vunpack.c.l.b16 %v1660
      %v1688 = vunpack.c.h.b16 %v1660
      %v1689 = vunpack.c.l.b16 %v1661
      %v1690 = vunpack.c.h.b16 %v1661
      %v1691 = vunpack.c.l.b16 %v1662
      %v1692 = vunpack.c.h.b16 %v1662
      %v1693 = vunpack.c.l.b16 %v1663
      %v1694 = vunpack.c.h.b16 %v1663
      %v1695 = vunpack.c.l.b16 %v1664
      %v1696 = vunpack.c.h.b16 %v1664
      %v1697 = vunpack.c.l.b16 %v1665
      %v1698 = vunpack.c.h.b16 %v1665
      %v1699 = vunpack.c.l.b16 %v1666
      %v1700 = vunpack.c.h.b16 %v1666
      %v1701 = vunpack.c.l.b16 %v1667
      %v1702 = vunpack.c.h.b16 %v1667
      %v1703 = vunpack.c.l.b16 %v1668
      %v1704 = vunpack.c.h.b16 %v1668
      %v1705 = vpack.c.b16 %v1683, %v1681
      %v1706 = vpack.c.b16 %v1684, %v1682
      %v1707 = vpack.c.b16 %v1687, %v1685
      %v1708 = vpack.c.b16 %v1688, %v1686
      %v1709 = vpack.c.b16 %v1691, %v1689
      %v1710 = vpack.c.b16 %v1692, %v1690
      %v1711 = vpack.c.b16 %v1695, %v1693
      %v1712 = vpack.c.b16 %v1696, %v1694
      %v1713 = vpack.c.b16 %v1699, %v1697
      %v1714 = vpack.c.b16 %v1700, %v1698
      %v1715 = vpack.c.b16 %v1703, %v1701
      %v1716 = vpack.c.b16 %v1704, %v1702
      %vm1729 = vcmask 785408
      %v1731 = vsel %vm1729, %v1625, 0
      %v1734 = vsel %vm1729, %v1626, 0
      %v1737 = vsel %vm1729, %v1627, 0
      %v1740 = vsel %vm1729, %v1628, 0
      %v1743 = vsel %vm1729, %v1629, 0
      %v1746 = vsel %vm1729, %v1630, 0
      %v1749 = vsel %vm1729, %v1631, 0
      %v1752 = vsel %vm1729, %v1632, 0
      %v1755 = vsel %vm1729, %v1633, 0
      %v1758 = vsel %vm1729, %v1634, 0
      %v1761 = vsel %vm1729, %v1635, 0
      %v1764 = vsel %vm1729, %v1636, 0
      %v1767 = vsel %vm1729, %v1637, 0
      %v1770 = vsel %vm1729, %v1638, 0
      %v1773 = vsel %vm1729, %v1639, 0
      %v1776 = vsel %vm1729, %v1640, 0
      %v1779 = vsel %vm1729, %v1641, 0
      %v1782 = vsel %vm1729, %v1642, 0
      %v1785 = vsel %vm1729, %v1643, 0
      %v1788 = vsel %vm1729, %v1644, 0
      %v1791 = vsel %vm1729, %v1645, 0
      %v1794 = vsel %vm1729, %v1646, 0
      %v1797 = vsel %vm1729, %v1647, 0
      %v1800 = vsel %vm1729, %v1648, 0
      %v1803 = vsel %vm1729, %v1649, 0
      %v1806 = vsel %vm1729, %v1650, 0
      %v1809 = vsel %vm1729, %v1651, 0
      %v1812 = vsel %vm1729, %v1652, 0
      %v1815 = vsel %vm1729, %v1653, 0
      %v1818 = vsel %vm1729, %v1654, 0
      %v1821 = vsel %vm1729, %v1655, 0
      %v1824 = vsel %vm1729, %v1656, 0
      %1826 = vmatprep.subr.bf16.mxu0 %v1706
      %1827 = vmatpush1.bf16.msra.mxu0 %v1705
      %1828 = vmatprep.subr.bf16.mxu0 %v1708
      %1829 = vmatpush1.bf16.msra.mxu0 %v1707
      %1830 = vmatprep.subr.bf16.mxu0 %v1710
      %1831 = vmatpush1.bf16.msra.mxu0 %v1709
      %1832 = vmatprep.subr.bf16.mxu0 %v1712
      %1833 = vmatpush1.bf16.msra.mxu0 %v1711
      %1834 = vmatprep.subr.bf16.mxu0 %v1714
      %1835 = vmatpush1.bf16.msra.mxu0 %v1713
      %1836 = vmatprep.subr.bf16.mxu0 %v1716
      %1837 = vmatpush1.bf16.msra.mxu0 %v1715
      %1838 = vmatprep.subr.bf16.mxu0 0
      %1839 = vmatpush1.bf16.msra.mxu0 0
      %1840 = vmatprep.subr.bf16.mxu0 0
      %1841 = vmatpush1.bf16.msra.mxu0 0
      %1842 = vmatprep.subr.bf16.mxu0 0
      %1843 = vmatpush1.bf16.msra.mxu0 0
      %1844 = vmatprep.subr.bf16.mxu0 0
      %1845 = vmatpush1.bf16.msra.mxu0 0
      %1846 = vmatprep.subr.bf16.mxu0 0
      %1847 = vmatpush1.bf16.msra.mxu0 0
      %1848 = vmatprep.subr.bf16.mxu0 0
      %1849 = vmatpush1.bf16.msra.mxu0 0
      %1850 = vmatprep.subr.bf16.mxu0 0
      %1851 = vmatpush1.bf16.msra.mxu0 0
      %1852 = vmatprep.subr.bf16.mxu0 0
      %1853 = vmatpush1.bf16.msra.mxu0 0
      %1854 = vmatprep.subr.bf16.mxu0 0
      %1855 = vmatpush1.bf16.msra.mxu0 0
      %1856 = vmatprep.subr.bf16.mxu0 0
      %1857 = vmatpush1.bf16.msra.mxu0 0
      %1858 = vmatprep.mubr.bf16.mxu0 0
      %1859 = vmatmul.mubr.bf16.gmra.mrb[0].mxu0 %v1731
      %v1860 = vpop.f32.mrb[0].mxu0
      %v1861 = vadd.f32 0.0, %v1860
      %v1862 = vpop.f32.mrb[0].mxu0
      %v1863 = vadd.f32 0.0, %v1862
      %v1864 = vpop.f32.mrb[0].mxu0
      %v1865 = vadd.f32 0.0, %v1864
      %v1866 = vpop.f32.mrb[0].mxu0
      %v1867 = vadd.f32 0.0, %v1866
      %1868 = vmatprep.mubr.bf16.mxu0 0
      %1869 = vmatmul.mubr.bf16.gmra.mrb[0].mxu0 %v1734
      %v1870 = vpop.f32.mrb[0].mxu0
      %v1871 = vadd.f32 0.0, %v1870
      %v1872 = vpop.f32.mrb[0].mxu0
      %v1873 = vadd.f32 0.0, %v1872
      %v1874 = vpop.f32.mrb[0].mxu0
      %v1875 = vadd.f32 0.0, %v1874
      %v1876 = vpop.f32.mrb[0].mxu0
      %v1877 = vadd.f32 0.0, %v1876
      %1878 = vmatprep.mubr.bf16.mxu0 0
      %1879 = vmatmul.mubr.bf16.gmra.mrb[0].mxu0 %v1737
      %v1880 = vpop.f32.mrb[0].mxu0
      %v1881 = vadd.f32 0.0, %v1880
      %v1882 = vpop.f32.mrb[0].mxu0
      %v1883 = vadd.f32 0.0, %v1882
      %v1884 = vpop.f32.mrb[0].mxu0
      %v1885 = vadd.f32 0.0, %v1884
      %v1886 = vpop.f32.mrb[0].mxu0
      %v1887 = vadd.f32 0.0, %v1886
      %1888 = vmatprep.mubr.bf16.mxu0 0
      %1889 = vmatmul.mubr.bf16.gmra.mrb[0].mxu0 %v1740
      %v1890 = vpop.f32.mrb[0].mxu0
      %v1891 = vadd.f32 0.0, %v1890
      %v1892 = vpop.f32.mrb[0].mxu0
      %v1893 = vadd.f32 0.0, %v1892
      %v1894 = vpop.f32.mrb[0].mxu0
      %v1895 = vadd.f32 0.0, %v1894
      %v1896 = vpop.f32.mrb[0].mxu0
      %v1897 = vadd.f32 0.0, %v1896
      %1898 = vmatprep.mubr.bf16.mxu0 0
      %1899 = vmatmul.mubr.bf16.gmra.mrb[0].mxu0 %v1743
      %v1900 = vpop.f32.mrb[0].mxu0
      %v1901 = vadd.f32 0.0, %v1900
      %v1902 = vpop.f32.mrb[0].mxu0
      %v1903 = vadd.f32 0.0, %v1902
      %v1904 = vpop.f32.mrb[0].mxu0
      %v1905 = vadd.f32 0.0, %v1904
      %v1906 = vpop.f32.mrb[0].mxu0
      %v1907 = vadd.f32 0.0, %v1906
      %1908 = vmatprep.mubr.bf16.mxu0 0
      %1909 = vmatmul.mubr.bf16.gmra.mrb[0].mxu0 %v1746
      %v1910 = vpop.f32.mrb[0].mxu0
      %v1911 = vadd.f32 0.0, %v1910
      %v1912 = vpop.f32.mrb[0].mxu0
      %v1913 = vadd.f32 0.0, %v1912
      %v1914 = vpop.f32.mrb[0].mxu0
      %v1915 = vadd.f32 0.0, %v1914
      %v1916 = vpop.f32.mrb[0].mxu0
      %v1917 = vadd.f32 0.0, %v1916
      %1918 = vmatprep.mubr.bf16.mxu0 0
      %1919 = vmatmul.mubr.bf16.gmra.mrb[0].mxu0 %v1749
      %v1920 = vpop.f32.mrb[0].mxu0
      %v1921 = vadd.f32 0.0, %v1920
      %v1922 = vpop.f32.mrb[0].mxu0
      %v1923 = vadd.f32 0.0, %v1922
      %v1924 = vpop.f32.mrb[0].mxu0
      %v1925 = vadd.f32 0.0, %v1924
      %v1926 = vpop.f32.mrb[0].mxu0
      %v1927 = vadd.f32 0.0, %v1926
      %1928 = vmatprep.mubr.bf16.mxu0 0
      %1929 = vmatmul.mubr.bf16.gmra.mrb[0].mxu0 %v1752
      %v1930 = vpop.f32.mrb[0].mxu0
      %v1931 = vadd.f32 0.0, %v1930
      %v1932 = vpop.f32.mrb[0].mxu0
      %v1933 = vadd.f32 0.0, %v1932
      %v1934 = vpop.f32.mrb[0].mxu0
      %v1935 = vadd.f32 0.0, %v1934
      %v1936 = vpop.f32.mrb[0].mxu0
      %v1937 = vadd.f32 0.0, %v1936
      %1938 = vmatprep.mubr.bf16.mxu0 0
      %1939 = vmatmul.mubr.bf16.gmra.mrb[0].mxu0 %v1755
      %v1940 = vpop.f32.mrb[0].mxu0
      %v1941 = vadd.f32 0.0, %v1940
      %v1942 = vpop.f32.mrb[0].mxu0
      %v1943 = vadd.f32 0.0, %v1942
      %v1944 = vpop.f32.mrb[0].mxu0
      %v1945 = vadd.f32 0.0, %v1944
      %v1946 = vpop.f32.mrb[0].mxu0
      %v1947 = vadd.f32 0.0, %v1946
      %1948 = vmatprep.mubr.bf16.mxu0 0
      %1949 = vmatmul.mubr.bf16.gmra.mrb[0].mxu0 %v1758
      %v1950 = vpop.f32.mrb[0].mxu0
      %v1951 = vadd.f32 0.0, %v1950
      %v1952 = vpop.f32.mrb[0].mxu0
      %v1953 = vadd.f32 0.0, %v1952
      %v1954 = vpop.f32.mrb[0].mxu0
      %v1955 = vadd.f32 0.0, %v1954
      %v1956 = vpop.f32.mrb[0].mxu0
      %v1957 = vadd.f32 0.0, %v1956
      %1958 = vmatprep.mubr.bf16.mxu0 0
      %1959 = vmatmul.mubr.bf16.gmra.mrb[0].mxu0 %v1761
      %v1960 = vpop.f32.mrb[0].mxu0
      %v1961 = vadd.f32 0.0, %v1960
      %v1962 = vpop.f32.mrb[0].mxu0
      %v1963 = vadd.f32 0.0, %v1962
      %v1964 = vpop.f32.mrb[0].mxu0
      %v1965 = vadd.f32 0.0, %v1964
      %v1966 = vpop.f32.mrb[0].mxu0
      %v1967 = vadd.f32 0.0, %v1966
      %1968 = vmatprep.mubr.bf16.mxu0 0
      %1969 = vmatmul.mubr.bf16.gmra.mrb[0].mxu0 %v1764
      %v1970 = vpop.f32.mrb[0].mxu0
      %v1971 = vadd.f32 0.0, %v1970
      %v1972 = vpop.f32.mrb[0].mxu0
      %v1973 = vadd.f32 0.0, %v1972
      %v1974 = vpop.f32.mrb[0].mxu0
      %v1975 = vadd.f32 0.0, %v1974
      %v1976 = vpop.f32.mrb[0].mxu0
      %v1977 = vadd.f32 0.0, %v1976
      %1978 = vmatprep.mubr.bf16.mxu0 0
      %1979 = vmatmul.mubr.bf16.gmra.mrb[0].mxu0 %v1767
      %v1980 = vpop.f32.mrb[0].mxu0
      %v1981 = vadd.f32 0.0, %v1980
      %v1982 = vpop.f32.mrb[0].mxu0
      %v1983 = vadd.f32 0.0, %v1982
      %v1984 = vpop.f32.mrb[0].mxu0
      %v1985 = vadd.f32 0.0, %v1984
      %v1986 = vpop.f32.mrb[0].mxu0
      %v1987 = vadd.f32 0.0, %v1986
      %1988 = vmatprep.mubr.bf16.mxu0 0
      %1989 = vmatmul.mubr.bf16.gmra.mrb[0].mxu0 %v1770
      %v1990 = vpop.f32.mrb[0].mxu0
      %v1991 = vadd.f32 0.0, %v1990
      %v1992 = vpop.f32.mrb[0].mxu0
      %v1993 = vadd.f32 0.0, %v1992
      %v1994 = vpop.f32.mrb[0].mxu0
      %v1995 = vadd.f32 0.0, %v1994
      %v1996 = vpop.f32.mrb[0].mxu0
      %v1997 = vadd.f32 0.0, %v1996
      %1998 = vmatprep.mubr.bf16.mxu0 0
      %1999 = vmatmul.mubr.bf16.gmra.mrb[0].mxu0 %v1773
      %v2000 = vpop.f32.mrb[0].mxu0
      %v2001 = vadd.f32 0.0, %v2000
      %v2002 = vpop.f32.mrb[0].mxu0
      %v2003 = vadd.f32 0.0, %v2002
      %v2004 = vpop.f32.mrb[0].mxu0
      %v2005 = vadd.f32 0.0, %v2004
      %v2006 = vpop.f32.mrb[0].mxu0
      %v2007 = vadd.f32 0.0, %v2006
      %2008 = vmatprep.mubr.bf16.mxu0 0
      %2009 = vmatmul.mubr.bf16.gmra.mrb[0].mxu0 %v1776
      %v2010 = vpop.f32.mrb[0].mxu0
      %v2011 = vadd.f32 0.0, %v2010
      %v2012 = vpop.f32.mrb[0].mxu0
      %v2013 = vadd.f32 0.0, %v2012
      %v2014 = vpop.f32.mrb[0].mxu0
      %v2015 = vadd.f32 0.0, %v2014
      %v2016 = vpop.f32.mrb[0].mxu0
      %v2017 = vadd.f32 0.0, %v2016
      %2018 = vmatprep.mubr.bf16.mxu0 0
      %2019 = vmatmul.mubr.bf16.gmra.mrb[0].mxu0 %v1779
      %v2020 = vpop.f32.mrb[0].mxu0
      %v2021 = vadd.f32 0.0, %v2020
      %v2022 = vpop.f32.mrb[0].mxu0
      %v2023 = vadd.f32 0.0, %v2022
      %v2024 = vpop.f32.mrb[0].mxu0
      %v2025 = vadd.f32 0.0, %v2024
      %v2026 = vpop.f32.mrb[0].mxu0
      %v2027 = vadd.f32 0.0, %v2026
      %2028 = vmatprep.mubr.bf16.mxu0 0
      %2029 = vmatmul.mubr.bf16.gmra.mrb[0].mxu0 %v1782
      %v2030 = vpop.f32.mrb[0].mxu0
      %v2031 = vadd.f32 0.0, %v2030
      %v2032 = vpop.f32.mrb[0].mxu0
      %v2033 = vadd.f32 0.0, %v2032
      %v2034 = vpop.f32.mrb[0].mxu0
      %v2035 = vadd.f32 0.0, %v2034
      %v2036 = vpop.f32.mrb[0].mxu0
      %v2037 = vadd.f32 0.0, %v2036
      %2038 = vmatprep.mubr.bf16.mxu0 0
      %2039 = vmatmul.mubr.bf16.gmra.mrb[0].mxu0 %v1785
      %v2040 = vpop.f32.mrb[0].mxu0
      %v2041 = vadd.f32 0.0, %v2040
      %v2042 = vpop.f32.mrb[0].mxu0
      %v2043 = vadd.f32 0.0, %v2042
      %v2044 = vpop.f32.mrb[0].mxu0
      %v2045 = vadd.f32 0.0, %v2044
      %v2046 = vpop.f32.mrb[0].mxu0
      %v2047 = vadd.f32 0.0, %v2046
      %2048 = vmatprep.mubr.bf16.mxu0 0
      %2049 = vmatmul.mubr.bf16.gmra.mrb[0].mxu0 %v1788
      %v2050 = vpop.f32.mrb[0].mxu0
      %v2051 = vadd.f32 0.0, %v2050
      %v2052 = vpop.f32.mrb[0].mxu0
      %v2053 = vadd.f32 0.0, %v2052
      %v2054 = vpop.f32.mrb[0].mxu0
      %v2055 = vadd.f32 0.0, %v2054
      %v2056 = vpop.f32.mrb[0].mxu0
      %v2057 = vadd.f32 0.0, %v2056
      %2058 = vmatprep.mubr.bf16.mxu0 0
      %2059 = vmatmul.mubr.bf16.gmra.mrb[0].mxu0 %v1791
      %v2060 = vpop.f32.mrb[0].mxu0
      %v2061 = vadd.f32 0.0, %v2060
      %v2062 = vpop.f32.mrb[0].mxu0
      %v2063 = vadd.f32 0.0, %v2062
      %v2064 = vpop.f32.mrb[0].mxu0
      %v2065 = vadd.f32 0.0, %v2064
      %v2066 = vpop.f32.mrb[0].mxu0
      %v2067 = vadd.f32 0.0, %v2066
      %2068 = vmatprep.mubr.bf16.mxu0 0
      %2069 = vmatmul.mubr.bf16.gmra.mrb[0].mxu0 %v1794
      %v2070 = vpop.f32.mrb[0].mxu0
      %v2071 = vadd.f32 0.0, %v2070
      %v2072 = vpop.f32.mrb[0].mxu0
      %v2073 = vadd.f32 0.0, %v2072
      %v2074 = vpop.f32.mrb[0].mxu0
      %v2075 = vadd.f32 0.0, %v2074
      %v2076 = vpop.f32.mrb[0].mxu0
      %v2077 = vadd.f32 0.0, %v2076
      %2078 = vmatprep.mubr.bf16.mxu0 0
      %2079 = vmatmul.mubr.bf16.gmra.mrb[0].mxu0 %v1797
      %v2080 = vpop.f32.mrb[0].mxu0
      %v2081 = vadd.f32 0.0, %v2080
      %v2082 = vpop.f32.mrb[0].mxu0
      %v2083 = vadd.f32 0.0, %v2082
      %v2084 = vpop.f32.mrb[0].mxu0
      %v2085 = vadd.f32 0.0, %v2084
      %v2086 = vpop.f32.mrb[0].mxu0
      %v2087 = vadd.f32 0.0, %v2086
      %2088 = vmatprep.mubr.bf16.mxu0 0
      %2089 = vmatmul.mubr.bf16.gmra.mrb[0].mxu0 %v1800
      %v2090 = vpop.f32.mrb[0].mxu0
      %v2091 = vadd.f32 0.0, %v2090
      %v2092 = vpop.f32.mrb[0].mxu0
      %v2093 = vadd.f32 0.0, %v2092
      %v2094 = vpop.f32.mrb[0].mxu0
      %v2095 = vadd.f32 0.0, %v2094
      %v2096 = vpop.f32.mrb[0].mxu0
      %v2097 = vadd.f32 0.0, %v2096
      %2098 = vmatprep.mubr.bf16.mxu0 0
      %2099 = vmatmul.mubr.bf16.gmra.mrb[0].mxu0 %v1803
      %v2100 = vpop.f32.mrb[0].mxu0
      %v2101 = vadd.f32 0.0, %v2100
      %v2102 = vpop.f32.mrb[0].mxu0
      %v2103 = vadd.f32 0.0, %v2102
      %v2104 = vpop.f32.mrb[0].mxu0
      %v2105 = vadd.f32 0.0, %v2104
      %v2106 = vpop.f32.mrb[0].mxu0
      %v2107 = vadd.f32 0.0, %v2106
      %2108 = vmatprep.mubr.bf16.mxu0 0
      %2109 = vmatmul.mubr.bf16.gmra.mrb[0].mxu0 %v1806
      %v2110 = vpop.f32.mrb[0].mxu0
      %v2111 = vadd.f32 0.0, %v2110
      %v2112 = vpop.f32.mrb[0].mxu0
      %v2113 = vadd.f32 0.0, %v2112
      %v2114 = vpop.f32.mrb[0].mxu0
      %v2115 = vadd.f32 0.0, %v2114
      %v2116 = vpop.f32.mrb[0].mxu0
      %v2117 = vadd.f32 0.0, %v2116
      %2118 = vmatprep.mubr.bf16.mxu0 0
      %2119 = vmatmul.mubr.bf16.gmra.mrb[0].mxu0 %v1809
      %v2120 = vpop.f32.mrb[0].mxu0
      %v2121 = vadd.f32 0.0, %v2120
      %v2122 = vpop.f32.mrb[0].mxu0
      %v2123 = vadd.f32 0.0, %v2122
      %v2124 = vpop.f32.mrb[0].mxu0
      %v2125 = vadd.f32 0.0, %v2124
      %v2126 = vpop.f32.mrb[0].mxu0
      %v2127 = vadd.f32 0.0, %v2126
      %2128 = vmatprep.mubr.bf16.mxu0 0
      %2129 = vmatmul.mubr.bf16.gmra.mrb[0].mxu0 %v1812
      %v2130 = vpop.f32.mrb[0].mxu0
      %v2131 = vadd.f32 0.0, %v2130
      %v2132 = vpop.f32.mrb[0].mxu0
      %v2133 = vadd.f32 0.0, %v2132
      %v2134 = vpop.f32.mrb[0].mxu0
      %v2135 = vadd.f32 0.0, %v2134
      %v2136 = vpop.f32.mrb[0].mxu0
      %v2137 = vadd.f32 0.0, %v2136
      %2138 = vmatprep.mubr.bf16.mxu0 0
      %2139 = vmatmul.mubr.bf16.gmra.mrb[0].mxu0 %v1815
      %v2140 = vpop.f32.mrb[0].mxu0
      %v2141 = vadd.f32 0.0, %v2140
      %v2142 = vpop.f32.mrb[0].mxu0
      %v2143 = vadd.f32 0.0, %v2142
      %v2144 = vpop.f32.mrb[0].mxu0
      %v2145 = vadd.f32 0.0, %v2144
      %v2146 = vpop.f32.mrb[0].mxu0
      %v2147 = vadd.f32 0.0, %v2146
      %2148 = vmatprep.mubr.bf16.mxu0 0
      %2149 = vmatmul.mubr.bf16.gmra.mrb[0].mxu0 %v1818
      %v2150 = vpop.f32.mrb[0].mxu0
      %v2151 = vadd.f32 0.0, %v2150
      %v2152 = vpop.f32.mrb[0].mxu0
      %v2153 = vadd.f32 0.0, %v2152
      %v2154 = vpop.f32.mrb[0].mxu0
      %v2155 = vadd.f32 0.0, %v2154
      %v2156 = vpop.f32.mrb[0].mxu0
      %v2157 = vadd.f32 0.0, %v2156
      %2158 = vmatprep.mubr.bf16.mxu0 0
      %2159 = vmatmul.mubr.bf16.gmra.mrb[0].mxu0 %v1821
      %v2160 = vpop.f32.mrb[0].mxu0
      %v2161 = vadd.f32 0.0, %v2160
      %v2162 = vpop.f32.mrb[0].mxu0
      %v2163 = vadd.f32 0.0, %v2162
      %v2164 = vpop.f32.mrb[0].mxu0
      %v2165 = vadd.f32 0.0, %v2164
      %v2166 = vpop.f32.mrb[0].mxu0
      %v2167 = vadd.f32 0.0, %v2166
      %2168 = vmatprep.mubr.bf16.mxu0 0
      %2169 = vmatmul.mubr.bf16.gmra.mrb[0].mxu0 %v1824
      %v2170 = vpop.f32.mrb[0].mxu0
      %v2171 = vadd.f32 0.0, %v2170
      %v2172 = vpop.f32.mrb[0].mxu0
      %v2173 = vadd.f32 0.0, %v2172
      %v2174 = vpop.f32.mrb[0].mxu0
      %v2175 = vadd.f32 0.0, %v2174
      %v2176 = vpop.f32.mrb[0].mxu0
      %v2177 = vadd.f32 0.0, %v2176
      %2178 = vdwg.mxu0
      %2179 = vst [vmem:[#allocation3 + $0x10] sm:$0xff] %v1861
      %2180 = vst.msk [vmem:[#allocation3 + $0x18] sm:$0xff] %vm400, %v1863
      %2181 = vst [vmem:[#allocation3 + $0x20] sm:$0xff] %v1865
      %2182 = vst.msk [vmem:[#allocation3 + $0x28] sm:$0xff] %vm400, %v1867
      %2183 = vst [vmem:[#allocation3 + $0x30] sm:$0xff] %v1871
      %2184 = vst.msk [vmem:[#allocation3 + $0x38] sm:$0xff] %vm400, %v1873
      %2185 = vst [vmem:[#allocation3 + $0x40] sm:$0xff] %v1875
      %2186 = vst.msk [vmem:[#allocation3 + $0x48] sm:$0xff] %vm400, %v1877
      %2187 = vst [vmem:[#allocation3 + $0x50] sm:$0xff] %v1881
      %2188 = vst.msk [vmem:[#allocation3 + $0x58] sm:$0xff] %vm400, %v1883
      %2189 = vst [vmem:[#allocation3 + $0x60] sm:$0xff] %v1885
      %2190 = vst.msk [vmem:[#allocation3 + $0x68] sm:$0xff] %vm400, %v1887
      %2191 = vst [vmem:[#allocation3 + $0x70] sm:$0xff] %v1891
      %2192 = vst.msk [vmem:[#allocation3 + $0x78] sm:$0xff] %vm400, %v1893
      %2193 = vst [vmem:[#allocation3 + $0x80] sm:$0xff] %v1895
      %2194 = vst.msk [vmem:[#allocation3 + $0x88] sm:$0xff] %vm400, %v1897
      %2195 = vst [vmem:[#allocation3 + $0x90] sm:$0xff] %v1901
      %2196 = vst.msk [vmem:[#allocation3 + $0x98] sm:$0xff] %vm400, %v1903
      %2197 = vst [vmem:[#allocation3 + $0xa0] sm:$0xff] %v1905
      %2198 = vst.msk [vmem:[#allocation3 + $0xa8] sm:$0xff] %vm400, %v1907
      %2199 = vst [vmem:[#allocation3 + $0xb0] sm:$0xff] %v1911
      %2200 = vst.msk [vmem:[#allocation3 + $0xb8] sm:$0xff] %vm400, %v1913
      %2201 = vst [vmem:[#allocation3 + $0xc0] sm:$0xff] %v1915
      %2202 = vst.msk [vmem:[#allocation3 + $0xc8] sm:$0xff] %vm400, %v1917
      %2203 = vst [vmem:[#allocation3 + $0xd0] sm:$0xff] %v1921
      %2204 = vst.msk [vmem:[#allocation3 + $0xd8] sm:$0xff] %vm400, %v1923
      %2205 = vst [vmem:[#allocation3 + $0xe0] sm:$0xff] %v1925
      %2206 = vst.msk [vmem:[#allocation3 + $0xe8] sm:$0xff] %vm400, %v1927
      %2207 = vst [vmem:[#allocation3 + $0xf0] sm:$0xff] %v1931
      %2208 = vst.msk [vmem:[#allocation3 + $0xf8] sm:$0xff] %vm400, %v1933
      %2209 = vst [vmem:[#allocation3 + $0x100] sm:$0xff] %v1935
      %2210 = vst.msk [vmem:[#allocation3 + $0x108] sm:$0xff] %vm400, %v1937
      %2211 = vst [vmem:[#allocation3 + $0x110] sm:$0xff] %v1941
      %2212 = vst.msk [vmem:[#allocation3 + $0x118] sm:$0xff] %vm400, %v1943
      %2213 = vst [vmem:[#allocation3 + $0x120] sm:$0xff] %v1945
      %2214 = vst.msk [vmem:[#allocation3 + $0x128] sm:$0xff] %vm400, %v1947
      %2215 = vst [vmem:[#allocation3 + $0x130] sm:$0xff] %v1951
      %2216 = vst.msk [vmem:[#allocation3 + $0x138] sm:$0xff] %vm400, %v1953
      %2217 = vst [vmem:[#allocation3 + $0x140] sm:$0xff] %v1955
      %2218 = vst.msk [vmem:[#allocation3 + $0x148] sm:$0xff] %vm400, %v1957
      %2219 = vst [vmem:[#allocation3 + $0x150] sm:$0xff] %v1961
      %2220 = vst.msk [vmem:[#allocation3 + $0x158] sm:$0xff] %vm400, %v1963
      %2221 = vst [vmem:[#allocation3 + $0x160] sm:$0xff] %v1965
      %2222 = vst.msk [vmem:[#allocation3 + $0x168] sm:$0xff] %vm400, %v1967
      %2223 = vst [vmem:[#allocation3 + $0x170] sm:$0xff] %v1971
      %2224 = vst.msk [vmem:[#allocation3 + $0x178] sm:$0xff] %vm400, %v1973
      %2225 = vst [vmem:[#allocation3 + $0x180] sm:$0xff] %v1975
      %2226 = vst.msk [vmem:[#allocation3 + $0x188] sm:$0xff] %vm400, %v1977
      %2227 = vst [vmem:[#allocation3 + $0x190] sm:$0xff] %v1981
      %2228 = vst.msk [vmem:[#allocation3 + $0x198] sm:$0xff] %vm400, %v1983
      %2229 = vst [vmem:[#allocation3 + $0x1a0] sm:$0xff] %v1985
      %2230 = vst.msk [vmem:[#allocation3 + $0x1a8] sm:$0xff] %vm400, %v1987
      %2231 = vst [vmem:[#allocation3 + $0x1b0] sm:$0xff] %v1991
      %2232 = vst.msk [vmem:[#allocation3 + $0x1b8] sm:$0xff] %vm400, %v1993
      %2233 = vst [vmem:[#allocation3 + $0x1c0] sm:$0xff] %v1995
      %2234 = vst.msk [vmem:[#allocation3 + $0x1c8] sm:$0xff] %vm400, %v1997
      %2235 = vst [vmem:[#allocation3 + $0x1d0] sm:$0xff] %v2001
      %2236 = vst.msk [vmem:[#allocation3 + $0x1d8] sm:$0xff] %vm400, %v2003
      %2237 = vst [vmem:[#allocation3 + $0x1e0] sm:$0xff] %v2005
      %2238 = vst.msk [vmem:[#allocation3 + $0x1e8] sm:$0xff] %vm400, %v2007
      %2239 = vst [vmem:[#allocation3 + $0x1f0] sm:$0xff] %v2011
      %2240 = vst.msk [vmem:[#allocation3 + $0x1f8] sm:$0xff] %vm400, %v2013
      %2241 = vst [vmem:[#allocation3 + $0x200] sm:$0xff] %v2015
      %2242 = vst.msk [vmem:[#allocation3 + $0x208] sm:$0xff] %vm400, %v2017
      %2243 = vst [vmem:[#allocation3 + $0x210] sm:$0xff] %v2021
      %2244 = vst.msk [vmem:[#allocation3 + $0x218] sm:$0xff] %vm400, %v2023
      %2245 = vst [vmem:[#allocation3 + $0x220] sm:$0xff] %v2025
      %2246 = vst.msk [vmem:[#allocation3 + $0x228] sm:$0xff] %vm400, %v2027
      %2247 = vst [vmem:[#allocation3 + $0x230] sm:$0xff] %v2031
      %2248 = vst.msk [vmem:[#allocation3 + $0x238] sm:$0xff] %vm400, %v2033
      %2249 = vst [vmem:[#allocation3 + $0x240] sm:$0xff] %v2035
      %2250 = vst.msk [vmem:[#allocation3 + $0x248] sm:$0xff] %vm400, %v2037
      %2251 = vst [vmem:[#allocation3 + $0x250] sm:$0xff] %v2041
      %2252 = vst.msk [vmem:[#allocation3 + $0x258] sm:$0xff] %vm400, %v2043
      %2253 = vst [vmem:[#allocation3 + $0x260] sm:$0xff] %v2045
      %2254 = vst.msk [vmem:[#allocation3 + $0x268] sm:$0xff] %vm400, %v2047
      %2255 = vst [vmem:[#allocation3 + $0x270] sm:$0xff] %v2051
      %2256 = vst.msk [vmem:[#allocation3 + $0x278] sm:$0xff] %vm400, %v2053
      %2257 = vst [vmem:[#allocation3 + $0x280] sm:$0xff] %v2055
      %2258 = vst.msk [vmem:[#allocation3 + $0x288] sm:$0xff] %vm400, %v2057
      %2259 = vst [vmem:[#allocation3 + $0x290] sm:$0xff] %v2061
      %2260 = vst.msk [vmem:[#allocation3 + $0x298] sm:$0xff] %vm400, %v2063
      %2261 = vst [vmem:[#allocation3 + $0x2a0] sm:$0xff] %v2065
      %2262 = vst.msk [vmem:[#allocation3 + $0x2a8] sm:$0xff] %vm400, %v2067
      %2263 = vst [vmem:[#allocation3 + $0x2b0] sm:$0xff] %v2071
      %2264 = vst.msk [vmem:[#allocation3 + $0x2b8] sm:$0xff] %vm400, %v2073
      %2265 = vst [vmem:[#allocation3 + $0x2c0] sm:$0xff] %v2075
      %2266 = vst.msk [vmem:[#allocation3 + $0x2c8] sm:$0xff] %vm400, %v2077
      %2267 = vst [vmem:[#allocation3 + $0x2d0] sm:$0xff] %v2081
      %2268 = vst.msk [vmem:[#allocation3 + $0x2d8] sm:$0xff] %vm400, %v2083
      %2269 = vst [vmem:[#allocation3 + $0x2e0] sm:$0xff] %v2085
      %2270 = vst.msk [vmem:[#allocation3 + $0x2e8] sm:$0xff] %vm400, %v2087
      %2271 = vst [vmem:[#allocation3 + $0x2f0] sm:$0xff] %v2091
      %2272 = vst.msk [vmem:[#allocation3 + $0x2f8] sm:$0xff] %vm400, %v2093
      %2273 = vst [vmem:[#allocation3 + $0x300] sm:$0xff] %v2095
      %2274 = vst.msk [vmem:[#allocation3 + $0x308] sm:$0xff] %vm400, %v2097
      %2275 = vst [vmem:[#allocation3 + $0x310] sm:$0xff] %v2101
      %2276 = vst.msk [vmem:[#allocation3 + $0x318] sm:$0xff] %vm400, %v2103
      %2277 = vst [vmem:[#allocation3 + $0x320] sm:$0xff] %v2105
      %2278 = vst.msk [vmem:[#allocation3 + $0x328] sm:$0xff] %vm400, %v2107
      %2279 = vst [vmem:[#allocation3 + $0x330] sm:$0xff] %v2111
      %2280 = vst.msk [vmem:[#allocation3 + $0x338] sm:$0xff] %vm400, %v2113
      %2281 = vst [vmem:[#allocation3 + $0x340] sm:$0xff] %v2115
      %2282 = vst.msk [vmem:[#allocation3 + $0x348] sm:$0xff] %vm400, %v2117
      %2283 = vst [vmem:[#allocation3 + $0x350] sm:$0xff] %v2121
      %2284 = vst.msk [vmem:[#allocation3 + $0x358] sm:$0xff] %vm400, %v2123
      %2285 = vst [vmem:[#allocation3 + $0x360] sm:$0xff] %v2125
      %2286 = vst.msk [vmem:[#allocation3 + $0x368] sm:$0xff] %vm400, %v2127
      %2287 = vst [vmem:[#allocation3 + $0x370] sm:$0xff] %v2131
      %2288 = vst.msk [vmem:[#allocation3 + $0x378] sm:$0xff] %vm400, %v2133
      %2289 = vst [vmem:[#allocation3 + $0x380] sm:$0xff] %v2135
      %2290 = vst.msk [vmem:[#allocation3 + $0x388] sm:$0xff] %vm400, %v2137
      %2291 = vst [vmem:[#allocation3 + $0x390] sm:$0xff] %v2141
      %2292 = vst.msk [vmem:[#allocation3 + $0x398] sm:$0xff] %vm400, %v2143
      %2293 = vst [vmem:[#allocation3 + $0x3a0] sm:$0xff] %v2145
      %2294 = vst.msk [vmem:[#allocation3 + $0x3a8] sm:$0xff] %vm400, %v2147
      %2295 = vst [vmem:[#allocation3 + $0x3b0] sm:$0xff] %v2151
      %2296 = vst.msk [vmem:[#allocation3 + $0x3b8] sm:$0xff] %vm400, %v2153
      %2297 = vst [vmem:[#allocation3 + $0x3c0] sm:$0xff] %v2155
      %2298 = vst.msk [vmem:[#allocation3 + $0x3c8] sm:$0xff] %vm400, %v2157
      %2299 = vst [vmem:[#allocation3 + $0x3d0] sm:$0xff] %v2161
      %2300 = vst.msk [vmem:[#allocation3 + $0x3d8] sm:$0xff] %vm400, %v2163
      %2301 = vst [vmem:[#allocation3 + $0x3e0] sm:$0xff] %v2165
      %2302 = vst.msk [vmem:[#allocation3 + $0x3e8] sm:$0xff] %vm400, %v2167
      %2303 = vst [vmem:[#allocation3 + $0x3f0] sm:$0xff] %v2171
      %2304 = vst.msk [vmem:[#allocation3 + $0x3f8] sm:$0xff] %vm400, %v2173
      %2305 = vst [vmem:[#allocation3 + $0x400] sm:$0xff] %v2175
      %2306 = vst.msk [vmem:[#allocation3 + $0x408] sm:$0xff] %vm400, %v2177
      %2307 = vst [vmem:[#allocation3] sm:$0xff] 0.0
      %2308 = vst.msk [vmem:[#allocation3 + $0x8] sm:$0xff] %vm400, 0.0
      %2309 = vst [vmem:[#allocation3 + $0x410] sm:$0xff] 0.0
      %2310 = vst.msk [vmem:[#allocation3 + $0x418] sm:$0xff] %vm400, 0.0
      %v2311 = vld [vmem:[#allocation3] sm:$0x80]
      %v2312 = vld [vmem:[#allocation3 + $0x10] sm:$0xff]
      %v2313 = vld [vmem:[#allocation3 + $0x20] sm:$0xff]
      %v2314 = vld [vmem:[#allocation3 + $0x30] sm:$0xff]
      %v2315 = vld [vmem:[#allocation3 + $0x40] sm:$0xff]
      %v2316 = vld [vmem:[#allocation3 + $0x50] sm:$0xff]
      %v2317 = vld [vmem:[#allocation3 + $0x60] sm:$0xff]
      %v2318 = vld [vmem:[#allocation3 + $0x70] sm:$0xff]
      %v2319 = vld [vmem:[#allocation3 + $0x80] sm:$0xff]
      %v2320 = vld [vmem:[#allocation3 + $0x90] sm:$0xff]
      %v2321 = vld [vmem:[#allocation3 + $0xa0] sm:$0xff]
      %v2322 = vld [vmem:[#allocation3 + $0xb0] sm:$0xff]
      %v2323 = vld [vmem:[#allocation3 + $0xc0] sm:$0xff]
      %v2324 = vld [vmem:[#allocation3 + $0xd0] sm:$0xff]
      %v2325 = vld [vmem:[#allocation3 + $0xe0] sm:$0xff]
      %v2326 = vld [vmem:[#allocation3 + $0xf0] sm:$0xff]
      %v2327 = vld [vmem:[#allocation3 + $0x100] sm:$0xff]
      %v2328 = vld [vmem:[#allocation3 + $0x110] sm:$0xff]
      %v2329 = vld [vmem:[#allocation3 + $0x120] sm:$0xff]
      %v2330 = vld [vmem:[#allocation3 + $0x130] sm:$0xff]
      %v2331 = vld [vmem:[#allocation3 + $0x140] sm:$0xff]
      %v2332 = vld [vmem:[#allocation3 + $0x150] sm:$0xff]
      %v2333 = vld [vmem:[#allocation3 + $0x160] sm:$0xff]
      %v2334 = vld [vmem:[#allocation3 + $0x170] sm:$0xff]
      %v2335 = vld [vmem:[#allocation3 + $0x180] sm:$0xff]
      %v2336 = vld [vmem:[#allocation3 + $0x190] sm:$0xff]
      %v2337 = vld [vmem:[#allocation3 + $0x1a0] sm:$0xff]
      %v2338 = vld [vmem:[#allocation3 + $0x1b0] sm:$0xff]
      %v2339 = vld [vmem:[#allocation3 + $0x1c0] sm:$0xff]
      %v2340 = vld [vmem:[#allocation3 + $0x1d0] sm:$0xff]
      %v2341 = vld [vmem:[#allocation3 + $0x1e0] sm:$0xff]
      %v2342 = vld [vmem:[#allocation3 + $0x1f0] sm:$0xff]
      %v2343 = vld [vmem:[#allocation3 + $0x200] sm:$0xff]
      %v2344 = vld [vmem:[#allocation3 + $0x210] sm:$0xff]
      %v2345 = vld [vmem:[#allocation3 + $0x220] sm:$0xff]
      %v2346 = vld [vmem:[#allocation3 + $0x230] sm:$0xff]
      %v2347 = vld [vmem:[#allocation3 + $0x240] sm:$0xff]
      %v2348 = vld [vmem:[#allocation3 + $0x250] sm:$0xff]
      %v2349 = vld [vmem:[#allocation3 + $0x260] sm:$0xff]
      %v2350 = vld [vmem:[#allocation3 + $0x270] sm:$0xff]
      %v2351 = vld [vmem:[#allocation3 + $0x280] sm:$0xff]
      %v2352 = vld [vmem:[#allocation3 + $0x290] sm:$0xff]
      %v2353 = vld [vmem:[#allocation3 + $0x2a0] sm:$0xff]
      %v2354 = vld [vmem:[#allocation3 + $0x2b0] sm:$0xff]
      %v2355 = vld [vmem:[#allocation3 + $0x2c0] sm:$0xff]
      %v2356 = vld [vmem:[#allocation3 + $0x2d0] sm:$0xff]
      %v2357 = vld [vmem:[#allocation3 + $0x2e0] sm:$0xff]
      %v2358 = vld [vmem:[#allocation3 + $0x2f0] sm:$0xff]
      %v2359 = vld [vmem:[#allocation3 + $0x300] sm:$0xff]
      %v2360 = vld [vmem:[#allocation3 + $0x310] sm:$0xff]
      %v2361 = vld [vmem:[#allocation3 + $0x320] sm:$0xff]
      %v2362 = vld [vmem:[#allocation3 + $0x330] sm:$0xff]
      %v2363 = vld [vmem:[#allocation3 + $0x340] sm:$0xff]
      %v2364 = vld [vmem:[#allocation3 + $0x350] sm:$0xff]
      %v2365 = vld [vmem:[#allocation3 + $0x360] sm:$0xff]
      %v2366 = vld [vmem:[#allocation3 + $0x370] sm:$0xff]
      %v2367 = vld [vmem:[#allocation3 + $0x380] sm:$0xff]
      %v2368 = vld [vmem:[#allocation3 + $0x390] sm:$0xff]
      %v2369 = vld [vmem:[#allocation3 + $0x3a0] sm:$0xff]
      %v2370 = vld [vmem:[#allocation3 + $0x3b0] sm:$0xff]
      %v2371 = vld [vmem:[#allocation3 + $0x3c0] sm:$0xff]
      %v2372 = vld [vmem:[#allocation3 + $0x3d0] sm:$0xff]
      %v2373 = vld [vmem:[#allocation3 + $0x3e0] sm:$0xff]
      %v2374 = vld [vmem:[#allocation3 + $0x3f0] sm:$0xff]
      %v2375 = vld [vmem:[#allocation3 + $0x400] sm:$0x7f]
      %v2376 = vld [vmem:[#allocation3 + $0x400] sm:$0xff]
      %vm2441 = vcmask 1046528
      %v2442 = vrot.slane %v2312, 1
      %v2443 = vrot.slane %v2313, 1
      %v2444 = vsel %vm2441, %v2442, %v2443
      %v2445 = vrot.slane %v2314, 1
      %v2446 = vsel %vm2441, %v2443, %v2445
      %v2447 = vrot.slane %v2315, 1
      %v2448 = vsel %vm2441, %v2445, %v2447
      %v2449 = vrot.slane %v2316, 1
      %v2450 = vsel %vm2441, %v2447, %v2449
      %v2451 = vrot.slane %v2317, 1
      %v2452 = vsel %vm2441, %v2449, %v2451
      %v2453 = vrot.slane %v2318, 1
      %v2454 = vsel %vm2441, %v2451, %v2453
      %v2455 = vrot.slane %v2319, 1
      %v2456 = vsel %vm2441, %v2453, %v2455
      %v2457 = vrot.slane %v2320, 1
      %v2458 = vsel %vm2441, %v2455, %v2457
      %v2459 = vrot.slane %v2321, 1
      %v2460 = vsel %vm2441, %v2457, %v2459
      %v2461 = vrot.slane %v2322, 1
      %v2462 = vsel %vm2441, %v2459, %v2461
      %v2463 = vrot.slane %v2323, 1
      %v2464 = vsel %vm2441, %v2461, %v2463
      %v2465 = vrot.slane %v2324, 1
      %v2466 = vsel %vm2441, %v2463, %v2465
      %v2467 = vrot.slane %v2325, 1
      %v2468 = vsel %vm2441, %v2465, %v2467
      %v2469 = vrot.slane %v2326, 1
      %v2470 = vsel %vm2441, %v2467, %v2469
      %v2471 = vrot.slane %v2327, 1
      %v2472 = vsel %vm2441, %v2469, %v2471
      %v2473 = vrot.slane %v2328, 1
      %v2474 = vsel %vm2441, %v2471, %v2473
      %v2475 = vrot.slane %v2329, 1
      %v2476 = vsel %vm2441, %v2473, %v2475
      %v2477 = vrot.slane %v2330, 1
      %v2478 = vsel %vm2441, %v2475, %v2477
      %v2479 = vrot.slane %v2331, 1
      %v2480 = vsel %vm2441, %v2477, %v2479
      %v2481 = vrot.slane %v2332, 1
      %v2482 = vsel %vm2441, %v2479, %v2481
      %v2483 = vrot.slane %v2333, 1
      %v2484 = vsel %vm2441, %v2481, %v2483
      %v2485 = vrot.slane %v2334, 1
      %v2486 = vsel %vm2441, %v2483, %v2485
      %v2487 = vrot.slane %v2335, 1
      %v2488 = vsel %vm2441, %v2485, %v2487
      %v2489 = vrot.slane %v2336, 1
      %v2490 = vsel %vm2441, %v2487, %v2489
      %v2491 = vrot.slane %v2337, 1
      %v2492 = vsel %vm2441, %v2489, %v2491
      %v2493 = vrot.slane %v2338, 1
      %v2494 = vsel %vm2441, %v2491, %v2493
      %v2495 = vrot.slane %v2339, 1
      %v2496 = vsel %vm2441, %v2493, %v2495
      %v2497 = vrot.slane %v2340, 1
      %v2498 = vsel %vm2441, %v2495, %v2497
      %v2499 = vrot.slane %v2341, 1
      %v2500 = vsel %vm2441, %v2497, %v2499
      %v2501 = vrot.slane %v2342, 1
      %v2502 = vsel %vm2441, %v2499, %v2501
      %v2503 = vrot.slane %v2343, 1
      %v2504 = vsel %vm2441, %v2501, %v2503
      %v2505 = vrot.slane %v2344, 1
      %v2506 = vsel %vm2441, %v2503, %v2505
      %v2507 = vrot.slane %v2345, 1
      %v2508 = vsel %vm2441, %v2505, %v2507
      %v2509 = vrot.slane %v2346, 1
      %v2510 = vsel %vm2441, %v2507, %v2509
      %v2511 = vrot.slane %v2347, 1
      %v2512 = vsel %vm2441, %v2509, %v2511
      %v2513 = vrot.slane %v2348, 1
      %v2514 = vsel %vm2441, %v2511, %v2513
      %v2515 = vrot.slane %v2349, 1
      %v2516 = vsel %vm2441, %v2513, %v2515
      %v2517 = vrot.slane %v2350, 1
      %v2518 = vsel %vm2441, %v2515, %v2517
      %v2519 = vrot.slane %v2351, 1
      %v2520 = vsel %vm2441, %v2517, %v2519
      %v2521 = vrot.slane %v2352, 1
      %v2522 = vsel %vm2441, %v2519, %v2521
      %v2523 = vrot.slane %v2353, 1
      %v2524 = vsel %vm2441, %v2521, %v2523
      %v2525 = vrot.slane %v2354, 1
      %v2526 = vsel %vm2441, %v2523, %v2525
      %v2527 = vrot.slane %v2355, 1
      %v2528 = vsel %vm2441, %v2525, %v2527
      %v2529 = vrot.slane %v2356, 1
      %v2530 = vsel %vm2441, %v2527, %v2529
      %v2531 = vrot.slane %v2357, 1
      %v2532 = vsel %vm2441, %v2529, %v2531
      %v2533 = vrot.slane %v2358, 1
      %v2534 = vsel %vm2441, %v2531, %v2533
      %v2535 = vrot.slane %v2359, 1
      %v2536 = vsel %vm2441, %v2533, %v2535
      %v2537 = vrot.slane %v2360, 1
      %v2538 = vsel %vm2441, %v2535, %v2537
      %v2539 = vrot.slane %v2361, 1
      %v2540 = vsel %vm2441, %v2537, %v2539
      %v2541 = vrot.slane %v2362, 1
      %v2542 = vsel %vm2441, %v2539, %v2541
      %v2543 = vrot.slane %v2363, 1
      %v2544 = vsel %vm2441, %v2541, %v2543
      %v2545 = vrot.slane %v2364, 1
      %v2546 = vsel %vm2441, %v2543, %v2545
      %v2547 = vrot.slane %v2365, 1
      %v2548 = vsel %vm2441, %v2545, %v2547
      %v2549 = vrot.slane %v2366, 1
      %v2550 = vsel %vm2441, %v2547, %v2549
      %v2551 = vrot.slane %v2367, 1
      %v2552 = vsel %vm2441, %v2549, %v2551
      %v2553 = vrot.slane %v2368, 1
      %v2554 = vsel %vm2441, %v2551, %v2553
      %v2555 = vrot.slane %v2369, 1
      %v2556 = vsel %vm2441, %v2553, %v2555
      %v2557 = vrot.slane %v2370, 1
      %v2558 = vsel %vm2441, %v2555, %v2557
      %v2559 = vrot.slane %v2371, 1
      %v2560 = vsel %vm2441, %v2557, %v2559
      %v2561 = vrot.slane %v2372, 1
      %v2562 = vsel %vm2441, %v2559, %v2561
      %v2563 = vrot.slane %v2373, 1
      %v2564 = vsel %vm2441, %v2561, %v2563
      %v2565 = vrot.slane %v2374, 1
      %v2566 = vsel %vm2441, %v2563, %v2565
      %v2567 = vrot.slane %v2376, 1
      %v2568 = vsel %vm2441, %v2565, %v2567
      %2569 = vrot.lane.b32.xlu0 %v2442, 64
      %v2570 = vpop.permute.xlu0 %2569
      %2571 = vrot.lane.b32.xlu0 %v2444, 64
      %v2572 = vpop.permute.xlu0 %2571
      %2573 = vrot.lane.b32.xlu0 %v2446, 64
      %v2574 = vpop.permute.xlu0 %2573
      %2575 = vrot.lane.b32.xlu0 %v2448, 64
      %v2576 = vpop.permute.xlu0 %2575
      %2577 = vrot.lane.b32.xlu0 %v2450, 64
      %v2578 = vpop.permute.xlu0 %2577
      %2579 = vrot.lane.b32.xlu0 %v2452, 64
      %v2580 = vpop.permute.xlu0 %2579
      %2581 = vrot.lane.b32.xlu0 %v2454, 64
      %v2582 = vpop.permute.xlu0 %2581
      %2583 = vrot.lane.b32.xlu0 %v2456, 64
      %v2584 = vpop.permute.xlu0 %2583
      %2585 = vrot.lane.b32.xlu0 %v2458, 64
      %v2586 = vpop.permute.xlu0 %2585
      %2587 = vrot.lane.b32.xlu0 %v2460, 64
      %v2588 = vpop.permute.xlu0 %2587
      %2589 = vrot.lane.b32.xlu0 %v2462, 64
      %v2590 = vpop.permute.xlu0 %2589
      %2591 = vrot.lane.b32.xlu0 %v2464, 64
      %v2592 = vpop.permute.xlu0 %2591
      %2593 = vrot.lane.b32.xlu0 %v2466, 64
      %v2594 = vpop.permute.xlu0 %2593
      %2595 = vrot.lane.b32.xlu0 %v2468, 64
      %v2596 = vpop.permute.xlu0 %2595
      %2597 = vrot.lane.b32.xlu0 %v2470, 64
      %v2598 = vpop.permute.xlu0 %2597
      %2599 = vrot.lane.b32.xlu0 %v2472, 64
      %v2600 = vpop.permute.xlu0 %2599
      %2601 = vrot.lane.b32.xlu0 %v2474, 64
      %v2602 = vpop.permute.xlu0 %2601
      %2603 = vrot.lane.b32.xlu0 %v2476, 64
      %v2604 = vpop.permute.xlu0 %2603
      %2605 = vrot.lane.b32.xlu0 %v2478, 64
      %v2606 = vpop.permute.xlu0 %2605
      %2607 = vrot.lane.b32.xlu0 %v2480, 64
      %v2608 = vpop.permute.xlu0 %2607
      %2609 = vrot.lane.b32.xlu0 %v2482, 64
      %v2610 = vpop.permute.xlu0 %2609
      %2611 = vrot.lane.b32.xlu0 %v2484, 64
      %v2612 = vpop.permute.xlu0 %2611
      %2613 = vrot.lane.b32.xlu0 %v2486, 64
      %v2614 = vpop.permute.xlu0 %2613
      %2615 = vrot.lane.b32.xlu0 %v2488, 64
      %v2616 = vpop.permute.xlu0 %2615
      %2617 = vrot.lane.b32.xlu0 %v2490, 64
      %v2618 = vpop.permute.xlu0 %2617
      %2619 = vrot.lane.b32.xlu0 %v2492, 64
      %v2620 = vpop.permute.xlu0 %2619
      %2621 = vrot.lane.b32.xlu0 %v2494, 64
      %v2622 = vpop.permute.xlu0 %2621
      %2623 = vrot.lane.b32.xlu0 %v2496, 64
      %v2624 = vpop.permute.xlu0 %2623
      %2625 = vrot.lane.b32.xlu0 %v2498, 64
      %v2626 = vpop.permute.xlu0 %2625
      %2627 = vrot.lane.b32.xlu0 %v2500, 64
      %v2628 = vpop.permute.xlu0 %2627
      %2629 = vrot.lane.b32.xlu0 %v2502, 64
      %v2630 = vpop.permute.xlu0 %2629
      %2631 = vrot.lane.b32.xlu0 %v2504, 64
      %v2632 = vpop.permute.xlu0 %2631
      %2633 = vrot.lane.b32.xlu0 %v2506, 64
      %v2634 = vpop.permute.xlu0 %2633
      %2635 = vrot.lane.b32.xlu0 %v2508, 64
      %v2636 = vpop.permute.xlu0 %2635
      %2637 = vrot.lane.b32.xlu0 %v2510, 64
      %v2638 = vpop.permute.xlu0 %2637
      %2639 = vrot.lane.b32.xlu0 %v2512, 64
      %v2640 = vpop.permute.xlu0 %2639
      %2641 = vrot.lane.b32.xlu0 %v2514, 64
      %v2642 = vpop.permute.xlu0 %2641
      %2643 = vrot.lane.b32.xlu0 %v2516, 64
      %v2644 = vpop.permute.xlu0 %2643
      %2645 = vrot.lane.b32.xlu0 %v2518, 64
      %v2646 = vpop.permute.xlu0 %2645
      %2647 = vrot.lane.b32.xlu0 %v2520, 64
      %v2648 = vpop.permute.xlu0 %2647
      %2649 = vrot.lane.b32.xlu0 %v2522, 64
      %v2650 = vpop.permute.xlu0 %2649
      %2651 = vrot.lane.b32.xlu0 %v2524, 64
      %v2652 = vpop.permute.xlu0 %2651
      %2653 = vrot.lane.b32.xlu0 %v2526, 64
      %v2654 = vpop.permute.xlu0 %2653
      %2655 = vrot.lane.b32.xlu0 %v2528, 64
      %v2656 = vpop.permute.xlu0 %2655
      %2657 = vrot.lane.b32.xlu0 %v2530, 64
      %v2658 = vpop.permute.xlu0 %2657
      %2659 = vrot.lane.b32.xlu0 %v2532, 64
      %v2660 = vpop.permute.xlu0 %2659
      %2661 = vrot.lane.b32.xlu0 %v2534, 64
      %v2662 = vpop.permute.xlu0 %2661
      %2663 = vrot.lane.b32.xlu0 %v2536, 64
      %v2664 = vpop.permute.xlu0 %2663
      %2665 = vrot.lane.b32.xlu0 %v2538, 64
      %v2666 = vpop.permute.xlu0 %2665
      %2667 = vrot.lane.b32.xlu0 %v2540, 64
      %v2668 = vpop.permute.xlu0 %2667
      %2669 = vrot.lane.b32.xlu0 %v2542, 64
      %v2670 = vpop.permute.xlu0 %2669
      %2671 = vrot.lane.b32.xlu0 %v2544, 64
      %v2672 = vpop.permute.xlu0 %2671
      %2673 = vrot.lane.b32.xlu0 %v2546, 64
      %v2674 = vpop.permute.xlu0 %2673
      %2675 = vrot.lane.b32.xlu0 %v2548, 64
      %v2676 = vpop.permute.xlu0 %2675
      %2677 = vrot.lane.b32.xlu0 %v2550, 64
      %v2678 = vpop.permute.xlu0 %2677
      %2679 = vrot.lane.b32.xlu0 %v2552, 64
      %v2680 = vpop.permute.xlu0 %2679
      %2681 = vrot.lane.b32.xlu0 %v2554, 64
      %v2682 = vpop.permute.xlu0 %2681
      %2683 = vrot.lane.b32.xlu0 %v2556, 64
      %v2684 = vpop.permute.xlu0 %2683
      %2685 = vrot.lane.b32.xlu0 %v2558, 64
      %v2686 = vpop.permute.xlu0 %2685
      %2687 = vrot.lane.b32.xlu0 %v2560, 64
      %v2688 = vpop.permute.xlu0 %2687
      %2689 = vrot.lane.b32.xlu0 %v2562, 64
      %v2690 = vpop.permute.xlu0 %2689
      %2691 = vrot.lane.b32.xlu0 %v2564, 64
      %v2692 = vpop.permute.xlu0 %2691
      %2693 = vrot.lane.b32.xlu0 %v2566, 64
      %v2694 = vpop.permute.xlu0 %2693
      %2695 = vrot.lane.b32.xlu0 %v2568, 64
      %v2696 = vpop.permute.xlu0 %2695
      %2697 = vrot.lane.b32.xlu0 %v2567, 64
      %v2698 = vpop.permute.xlu0 %2697
      %v2764 = vadd.f32 %v2311, %v2570
      %v2765 = vadd.f32 %v2312, %v2572
      %v2766 = vadd.f32 %v2313, %v2574
      %v2767 = vadd.f32 %v2314, %v2576
      %v2768 = vadd.f32 %v2315, %v2578
      %v2769 = vadd.f32 %v2316, %v2580
      %v2770 = vadd.f32 %v2317, %v2582
      %v2771 = vadd.f32 %v2318, %v2584
      %v2772 = vadd.f32 %v2319, %v2586
      %v2773 = vadd.f32 %v2320, %v2588
      %v2774 = vadd.f32 %v2321, %v2590
      %v2775 = vadd.f32 %v2322, %v2592
      %v2776 = vadd.f32 %v2323, %v2594
      %v2777 = vadd.f32 %v2324, %v2596
      %v2778 = vadd.f32 %v2325, %v2598
      %v2779 = vadd.f32 %v2326, %v2600
      %v2780 = vadd.f32 %v2327, %v2602
      %v2781 = vadd.f32 %v2328, %v2604
      %v2782 = vadd.f32 %v2329, %v2606
      %v2783 = vadd.f32 %v2330, %v2608
      %v2784 = vadd.f32 %v2331, %v2610
      %v2785 = vadd.f32 %v2332, %v2612
      %v2786 = vadd.f32 %v2333, %v2614
      %v2787 = vadd.f32 %v2334, %v2616
      %v2788 = vadd.f32 %v2335, %v2618
      %v2789 = vadd.f32 %v2336, %v2620
      %v2790 = vadd.f32 %v2337, %v2622
      %v2791 = vadd.f32 %v2338, %v2624
      %v2792 = vadd.f32 %v2339, %v2626
      %v2793 = vadd.f32 %v2340, %v2628
      %v2794 = vadd.f32 %v2341, %v2630
      %v2795 = vadd.f32 %v2342, %v2632
      %v2796 = vadd.f32 %v2343, %v2634
      %v2797 = vadd.f32 %v2344, %v2636
      %v2798 = vadd.f32 %v2345, %v2638
      %v2799 = vadd.f32 %v2346, %v2640
      %v2800 = vadd.f32 %v2347, %v2642
      %v2801 = vadd.f32 %v2348, %v2644
      %v2802 = vadd.f32 %v2349, %v2646
      %v2803 = vadd.f32 %v2350, %v2648
      %v2804 = vadd.f32 %v2351, %v2650
      %v2805 = vadd.f32 %v2352, %v2652
      %v2806 = vadd.f32 %v2353, %v2654
      %v2807 = vadd.f32 %v2354, %v2656
      %v2808 = vadd.f32 %v2355, %v2658
      %v2809 = vadd.f32 %v2356, %v2660
      %v2810 = vadd.f32 %v2357, %v2662
      %v2811 = vadd.f32 %v2358, %v2664
      %v2812 = vadd.f32 %v2359, %v2666
      %v2813 = vadd.f32 %v2360, %v2668
      %v2814 = vadd.f32 %v2361, %v2670
      %v2815 = vadd.f32 %v2362, %v2672
      %v2816 = vadd.f32 %v2363, %v2674
      %v2817 = vadd.f32 %v2364, %v2676
      %v2818 = vadd.f32 %v2365, %v2678
      %v2819 = vadd.f32 %v2366, %v2680
      %v2820 = vadd.f32 %v2367, %v2682
      %v2821 = vadd.f32 %v2368, %v2684
      %v2822 = vadd.f32 %v2369, %v2686
      %v2823 = vadd.f32 %v2370, %v2688
      %v2824 = vadd.f32 %v2371, %v2690
      %v2825 = vadd.f32 %v2372, %v2692
      %v2826 = vadd.f32 %v2373, %v2694
      %v2827 = vadd.f32 %v2374, %v2696
      %v2828 = vadd.f32 %v2375, %v2698
      %v2829 = vld [vmem:[#allocation3 + $0x18] sm:$0xfe]
      %v2830 = vld [vmem:[#allocation3 + $0x28] sm:$0xff]
      %v2831 = vld [vmem:[#allocation3 + $0x38] sm:$0xff]
      %v2832 = vld [vmem:[#allocation3 + $0x48] sm:$0xff]
      %v2833 = vld [vmem:[#allocation3 + $0x58] sm:$0xff]
      %v2834 = vld [vmem:[#allocation3 + $0x68] sm:$0xff]
      %v2835 = vld [vmem:[#allocation3 + $0x78] sm:$0xff]
      %v2836 = vld [vmem:[#allocation3 + $0x88] sm:$0xff]
      %v2837 = vld [vmem:[#allocation3 + $0x98] sm:$0xff]
      %v2838 = vld [vmem:[#allocation3 + $0xa8] sm:$0xff]
      %v2839 = vld [vmem:[#allocation3 + $0xb8] sm:$0xff]
      %v2840 = vld [vmem:[#allocation3 + $0xc8] sm:$0xff]
      %v2841 = vld [vmem:[#allocation3 + $0xd8] sm:$0xff]
      %v2842 = vld [vmem:[#allocation3 + $0xe8] sm:$0xff]
      %v2843 = vld [vmem:[#allocation3 + $0xf8] sm:$0xff]
      %v2844 = vld [vmem:[#allocation3 + $0x108] sm:$0xff]
      %v2845 = vld [vmem:[#allocation3 + $0x118] sm:$0xff]
      %v2846 = vld [vmem:[#allocation3 + $0x128] sm:$0xff]
      %v2847 = vld [vmem:[#allocation3 + $0x138] sm:$0xff]
      %v2848 = vld [vmem:[#allocation3 + $0x148] sm:$0xff]
      %v2849 = vld [vmem:[#allocation3 + $0x158] sm:$0xff]
      %v2850 = vld [vmem:[#allocation3 + $0x168] sm:$0xff]
      %v2851 = vld [vmem:[#allocation3 + $0x178] sm:$0xff]
      %v2852 = vld [vmem:[#allocation3 + $0x188] sm:$0xff]
      %v2853 = vld [vmem:[#allocation3 + $0x198] sm:$0xff]
      %v2854 = vld [vmem:[#allocation3 + $0x1a8] sm:$0xff]
      %v2855 = vld [vmem:[#allocation3 + $0x1b8] sm:$0xff]
      %v2856 = vld [vmem:[#allocation3 + $0x1c8] sm:$0xff]
      %v2857 = vld [vmem:[#allocation3 + $0x1d8] sm:$0xff]
      %v2858 = vld [vmem:[#allocation3 + $0x1e8] sm:$0xff]
      %v2859 = vld [vmem:[#allocation3 + $0x1f8] sm:$0xff]
      %v2860 = vld [vmem:[#allocation3 + $0x208] sm:$0xff]
      %v2861 = vld [vmem:[#allocation3 + $0x218] sm:$0xff]
      %v2862 = vld [vmem:[#allocation3 + $0x228] sm:$0xff]
      %v2863 = vld [vmem:[#allocation3 + $0x238] sm:$0xff]
      %v2864 = vld [vmem:[#allocation3 + $0x248] sm:$0xff]
      %v2865 = vld [vmem:[#allocation3 + $0x258] sm:$0xff]
      %v2866 = vld [vmem:[#allocation3 + $0x268] sm:$0xff]
      %v2867 = vld [vmem:[#allocation3 + $0x278] sm:$0xff]
      %v2868 = vld [vmem:[#allocation3 + $0x288] sm:$0xff]
      %v2869 = vld [vmem:[#allocation3 + $0x298] sm:$0xff]
      %v2870 = vld [vmem:[#allocation3 + $0x2a8] sm:$0xff]
      %v2871 = vld [vmem:[#allocation3 + $0x2b8] sm:$0xff]
      %v2872 = vld [vmem:[#allocation3 + $0x2c8] sm:$0xff]
      %v2873 = vld [vmem:[#allocation3 + $0x2d8] sm:$0xff]
      %v2874 = vld [vmem:[#allocation3 + $0x2e8] sm:$0xff]
      %v2875 = vld [vmem:[#allocation3 + $0x2f8] sm:$0xff]
      %v2876 = vld [vmem:[#allocation3 + $0x308] sm:$0xff]
      %v2877 = vld [vmem:[#allocation3 + $0x318] sm:$0xff]
      %v2878 = vld [vmem:[#allocation3 + $0x328] sm:$0xff]
      %v2879 = vld [vmem:[#allocation3 + $0x338] sm:$0xff]
      %v2880 = vld [vmem:[#allocation3 + $0x348] sm:$0xff]
      %v2881 = vld [vmem:[#allocation3 + $0x358] sm:$0xff]
      %v2882 = vld [vmem:[#allocation3 + $0x368] sm:$0xff]
      %v2883 = vld [vmem:[#allocation3 + $0x378] sm:$0xff]
      %v2884 = vld [vmem:[#allocation3 + $0x388] sm:$0xff]
      %v2885 = vld [vmem:[#allocation3 + $0x398] sm:$0xff]
      %v2886 = vld [vmem:[#allocation3 + $0x3a8] sm:$0xff]
      %v2887 = vld [vmem:[#allocation3 + $0x3b8] sm:$0xff]
      %v2888 = vld [vmem:[#allocation3 + $0x3c8] sm:$0xff]
      %v2889 = vld [vmem:[#allocation3 + $0x3d8] sm:$0xff]
      %v2890 = vld [vmem:[#allocation3 + $0x3e8] sm:$0xff]
      %v2891 = vld [vmem:[#allocation3 + $0x3f8] sm:$0xff]
      %v2892 = vld [vmem:[#allocation3 + $0x408] sm:$0xff]
      %v2893 = vld [vmem:[#allocation3 + $0x418] sm:$0x1]
      %vm2959 = vcmask 1045504
      %v2960 = vrot.slane %v2829, 2
      %v2961 = vrot.slane %v2830, 2
      %v2962 = vsel %vm2959, %v2960, %v2961
      %v2963 = vrot.slane %v2831, 2
      %v2964 = vsel %vm2959, %v2961, %v2963
      %v2965 = vrot.slane %v2832, 2
      %v2966 = vsel %vm2959, %v2963, %v2965
      %v2967 = vrot.slane %v2833, 2
      %v2968 = vsel %vm2959, %v2965, %v2967
      %v2969 = vrot.slane %v2834, 2
      %v2970 = vsel %vm2959, %v2967, %v2969
      %v2971 = vrot.slane %v2835, 2
      %v2972 = vsel %vm2959, %v2969, %v2971
      %v2973 = vrot.slane %v2836, 2
      %v2974 = vsel %vm2959, %v2971, %v2973
      %v2975 = vrot.slane %v2837, 2
      %v2976 = vsel %vm2959, %v2973, %v2975
      %v2977 = vrot.slane %v2838, 2
      %v2978 = vsel %vm2959, %v2975, %v2977
      %v2979 = vrot.slane %v2839, 2
      %v2980 = vsel %vm2959, %v2977, %v2979
      %v2981 = vrot.slane %v2840, 2
      %v2982 = vsel %vm2959, %v2979, %v2981
      %v2983 = vrot.slane %v2841, 2
      %v2984 = vsel %vm2959, %v2981, %v2983
      %v2985 = vrot.slane %v2842, 2
      %v2986 = vsel %vm2959, %v2983, %v2985
      %v2987 = vrot.slane %v2843, 2
      %v2988 = vsel %vm2959, %v2985, %v2987
      %v2989 = vrot.slane %v2844, 2
      %v2990 = vsel %vm2959, %v2987, %v2989
      %v2991 = vrot.slane %v2845, 2
      %v2992 = vsel %vm2959, %v2989, %v2991
      %v2993 = vrot.slane %v2846, 2
      %v2994 = vsel %vm2959, %v2991, %v2993
      %v2995 = vrot.slane %v2847, 2
      %v2996 = vsel %vm2959, %v2993, %v2995
      %v2997 = vrot.slane %v2848, 2
      %v2998 = vsel %vm2959, %v2995, %v2997
      %v2999 = vrot.slane %v2849, 2
      %v3000 = vsel %vm2959, %v2997, %v2999
      %v3001 = vrot.slane %v2850, 2
      %v3002 = vsel %vm2959, %v2999, %v3001
      %v3003 = vrot.slane %v2851, 2
      %v3004 = vsel %vm2959, %v3001, %v3003
      %v3005 = vrot.slane %v2852, 2
      %v3006 = vsel %vm2959, %v3003, %v3005
      %v3007 = vrot.slane %v2853, 2
      %v3008 = vsel %vm2959, %v3005, %v3007
      %v3009 = vrot.slane %v2854, 2
      %v3010 = vsel %vm2959, %v3007, %v3009
      %v3011 = vrot.slane %v2855, 2
      %v3012 = vsel %vm2959, %v3009, %v3011
      %v3013 = vrot.slane %v2856, 2
      %v3014 = vsel %vm2959, %v3011, %v3013
      %v3015 = vrot.slane %v2857, 2
      %v3016 = vsel %vm2959, %v3013, %v3015
      %v3017 = vrot.slane %v2858, 2
      %v3018 = vsel %vm2959, %v3015, %v3017
      %v3019 = vrot.slane %v2859, 2
      %v3020 = vsel %vm2959, %v3017, %v3019
      %v3021 = vrot.slane %v2860, 2
      %v3022 = vsel %vm2959, %v3019, %v3021
      %v3023 = vrot.slane %v2861, 2
      %v3024 = vsel %vm2959, %v3021, %v3023
      %v3025 = vrot.slane %v2862, 2
      %v3026 = vsel %vm2959, %v3023, %v3025
      %v3027 = vrot.slane %v2863, 2
      %v3028 = vsel %vm2959, %v3025, %v3027
      %v3029 = vrot.slane %v2864, 2
      %v3030 = vsel %vm2959, %v3027, %v3029
      %v3031 = vrot.slane %v2865, 2
      %v3032 = vsel %vm2959, %v3029, %v3031
      %v3033 = vrot.slane %v2866, 2
      %v3034 = vsel %vm2959, %v3031, %v3033
      %v3035 = vrot.slane %v2867, 2
      %v3036 = vsel %vm2959, %v3033, %v3035
      %v3037 = vrot.slane %v2868, 2
      %v3038 = vsel %vm2959, %v3035, %v3037
      %v3039 = vrot.slane %v2869, 2
      %v3040 = vsel %vm2959, %v3037, %v3039
      %v3041 = vrot.slane %v2870, 2
      %v3042 = vsel %vm2959, %v3039, %v3041
      %v3043 = vrot.slane %v2871, 2
      %v3044 = vsel %vm2959, %v3041, %v3043
      %v3045 = vrot.slane %v2872, 2
      %v3046 = vsel %vm2959, %v3043, %v3045
      %v3047 = vrot.slane %v2873, 2
      %v3048 = vsel %vm2959, %v3045, %v3047
      %v3049 = vrot.slane %v2874, 2
      %v3050 = vsel %vm2959, %v3047, %v3049
      %v3051 = vrot.slane %v2875, 2
      %v3052 = vsel %vm2959, %v3049, %v3051
      %v3053 = vrot.slane %v2876, 2
      %v3054 = vsel %vm2959, %v3051, %v3053
      %v3055 = vrot.slane %v2877, 2
      %v3056 = vsel %vm2959, %v3053, %v3055
      %v3057 = vrot.slane %v2878, 2
      %v3058 = vsel %vm2959, %v3055, %v3057
      %v3059 = vrot.slane %v2879, 2
      %v3060 = vsel %vm2959, %v3057, %v3059
      %v3061 = vrot.slane %v2880, 2
      %v3062 = vsel %vm2959, %v3059, %v3061
      %v3063 = vrot.slane %v2881, 2
      %v3064 = vsel %vm2959, %v3061, %v3063
      %v3065 = vrot.slane %v2882, 2
      %v3066 = vsel %vm2959, %v3063, %v3065
      %v3067 = vrot.slane %v2883, 2
      %v3068 = vsel %vm2959, %v3065, %v3067
      %v3069 = vrot.slane %v2884, 2
      %v3070 = vsel %vm2959, %v3067, %v3069
      %v3071 = vrot.slane %v2885, 2
      %v3072 = vsel %vm2959, %v3069, %v3071
      %v3073 = vrot.slane %v2886, 2
      %v3074 = vsel %vm2959, %v3071, %v3073
      %v3075 = vrot.slane %v2887, 2
      %v3076 = vsel %vm2959, %v3073, %v3075
      %v3077 = vrot.slane %v2888, 2
      %v3078 = vsel %vm2959, %v3075, %v3077
      %v3079 = vrot.slane %v2889, 2
      %v3080 = vsel %vm2959, %v3077, %v3079
      %v3081 = vrot.slane %v2890, 2
      %v3082 = vsel %vm2959, %v3079, %v3081
      %v3083 = vrot.slane %v2891, 2
      %v3084 = vsel %vm2959, %v3081, %v3083
      %v3085 = vrot.slane %v2892, 2
      %v3086 = vsel %vm2959, %v3083, %v3085
      %v3087 = vrot.slane %v2893, 2
      %v3088 = vsel %vm2959, %v3085, %v3087
      %v3154 = vadd.f32 %v2764, %v2960
      %v3155 = vadd.f32 %v2765, %v2962
      %v3156 = vadd.f32 %v2766, %v2964
      %v3157 = vadd.f32 %v2767, %v2966
      %v3158 = vadd.f32 %v2768, %v2968
      %v3159 = vadd.f32 %v2769, %v2970
      %v3160 = vadd.f32 %v2770, %v2972
      %v3161 = vadd.f32 %v2771, %v2974
      %v3162 = vadd.f32 %v2772, %v2976
      %v3163 = vadd.f32 %v2773, %v2978
      %v3164 = vadd.f32 %v2774, %v2980
      %v3165 = vadd.f32 %v2775, %v2982
      %v3166 = vadd.f32 %v2776, %v2984
      %v3167 = vadd.f32 %v2777, %v2986
      %v3168 = vadd.f32 %v2778, %v2988
      %v3169 = vadd.f32 %v2779, %v2990
      %v3170 = vadd.f32 %v2780, %v2992
      %v3171 = vadd.f32 %v2781, %v2994
      %v3172 = vadd.f32 %v2782, %v2996
      %v3173 = vadd.f32 %v2783, %v2998
      %v3174 = vadd.f32 %v2784, %v3000
      %v3175 = vadd.f32 %v2785, %v3002
      %v3176 = vadd.f32 %v2786, %v3004
      %v3177 = vadd.f32 %v2787, %v3006
      %v3178 = vadd.f32 %v2788, %v3008
      %v3179 = vadd.f32 %v2789, %v3010
      %v3180 = vadd.f32 %v2790, %v3012
      %v3181 = vadd.f32 %v2791, %v3014
      %v3182 = vadd.f32 %v2792, %v3016
      %v3183 = vadd.f32 %v2793, %v3018
      %v3184 = vadd.f32 %v2794, %v3020
      %v3185 = vadd.f32 %v2795, %v3022
      %v3186 = vadd.f32 %v2796, %v3024
      %v3187 = vadd.f32 %v2797, %v3026
      %v3188 = vadd.f32 %v2798, %v3028
      %v3189 = vadd.f32 %v2799, %v3030
      %v3190 = vadd.f32 %v2800, %v3032
      %v3191 = vadd.f32 %v2801, %v3034
      %v3192 = vadd.f32 %v2802, %v3036
      %v3193 = vadd.f32 %v2803, %v3038
      %v3194 = vadd.f32 %v2804, %v3040
      %v3195 = vadd.f32 %v2805, %v3042
      %v3196 = vadd.f32 %v2806, %v3044
      %v3197 = vadd.f32 %v2807, %v3046
      %v3198 = vadd.f32 %v2808, %v3048
      %v3199 = vadd.f32 %v2809, %v3050
      %v3200 = vadd.f32 %v2810, %v3052
      %v3201 = vadd.f32 %v2811, %v3054
      %v3202 = vadd.f32 %v2812, %v3056
      %v3203 = vadd.f32 %v2813, %v3058
      %v3204 = vadd.f32 %v2814, %v3060
      %v3205 = vadd.f32 %v2815, %v3062
      %v3206 = vadd.f32 %v2816, %v3064
      %v3207 = vadd.f32 %v2817, %v3066
      %v3208 = vadd.f32 %v2818, %v3068
      %v3209 = vadd.f32 %v2819, %v3070
      %v3210 = vadd.f32 %v2820, %v3072
      %v3211 = vadd.f32 %v2821, %v3074
      %v3212 = vadd.f32 %v2822, %v3076
      %v3213 = vadd.f32 %v2823, %v3078
      %v3214 = vadd.f32 %v2824, %v3080
      %v3215 = vadd.f32 %v2825, %v3082
      %v3216 = vadd.f32 %v2826, %v3084
      %v3217 = vadd.f32 %v2827, %v3086
      %v3218 = vadd.f32 %v2828, %v3088
      %v3219 = vld [vmem:[%s5] sm:$0x1]
      %v3221 = vlaneseq
      %v3222 = vshrl.u32 %v3221, 7
      %v3223 = vsub.s32 0, %v3222
      %v3224 = vrot.slane %v3219, %v3223
      %v3226 = vadd.f32 %v3154, %v3224
      %v3227 = vadd.f32 %v3155, %v3224
      %v3228 = vadd.f32 %v3156, %v3224
      %v3229 = vadd.f32 %v3157, %v3224
      %v3230 = vadd.f32 %v3158, %v3224
      %v3231 = vadd.f32 %v3159, %v3224
      %v3232 = vadd.f32 %v3160, %v3224
      %v3233 = vadd.f32 %v3161, %v3224
      %v3234 = vadd.f32 %v3162, %v3224
      %v3235 = vadd.f32 %v3163, %v3224
      %v3236 = vadd.f32 %v3164, %v3224
      %v3237 = vadd.f32 %v3165, %v3224
      %v3238 = vadd.f32 %v3166, %v3224
      %v3239 = vadd.f32 %v3167, %v3224
      %v3240 = vadd.f32 %v3168, %v3224
      %v3241 = vadd.f32 %v3169, %v3224
      %v3242 = vadd.f32 %v3170, %v3224
      %v3243 = vadd.f32 %v3171, %v3224
      %v3244 = vadd.f32 %v3172, %v3224
      %v3245 = vadd.f32 %v3173, %v3224
      %v3246 = vadd.f32 %v3174, %v3224
      %v3247 = vadd.f32 %v3175, %v3224
      %v3248 = vadd.f32 %v3176, %v3224
      %v3249 = vadd.f32 %v3177, %v3224
      %v3250 = vadd.f32 %v3178, %v3224
      %v3251 = vadd.f32 %v3179, %v3224
      %v3252 = vadd.f32 %v3180, %v3224
      %v3253 = vadd.f32 %v3181, %v3224
      %v3254 = vadd.f32 %v3182, %v3224
      %v3255 = vadd.f32 %v3183, %v3224
      %v3256 = vadd.f32 %v3184, %v3224
      %v3257 = vadd.f32 %v3185, %v3224
      %v3258 = vadd.f32 %v3186, %v3224
      %v3259 = vadd.f32 %v3187, %v3224
      %v3260 = vadd.f32 %v3188, %v3224
      %v3261 = vadd.f32 %v3189, %v3224
      %v3262 = vadd.f32 %v3190, %v3224
      %v3263 = vadd.f32 %v3191, %v3224
      %v3264 = vadd.f32 %v3192, %v3224
      %v3265 = vadd.f32 %v3193, %v3224
      %v3266 = vadd.f32 %v3194, %v3224
      %v3267 = vadd.f32 %v3195, %v3224
      %v3268 = vadd.f32 %v3196, %v3224
      %v3269 = vadd.f32 %v3197, %v3224
      %v3270 = vadd.f32 %v3198, %v3224
      %v3271 = vadd.f32 %v3199, %v3224
      %v3272 = vadd.f32 %v3200, %v3224
      %v3273 = vadd.f32 %v3201, %v3224
      %v3274 = vadd.f32 %v3202, %v3224
      %v3275 = vadd.f32 %v3203, %v3224
      %v3276 = vadd.f32 %v3204, %v3224
      %v3277 = vadd.f32 %v3205, %v3224
      %v3278 = vadd.f32 %v3206, %v3224
      %v3279 = vadd.f32 %v3207, %v3224
      %v3280 = vadd.f32 %v3208, %v3224
      %v3281 = vadd.f32 %v3209, %v3224
      %v3282 = vadd.f32 %v3210, %v3224
      %v3283 = vadd.f32 %v3211, %v3224
      %v3284 = vadd.f32 %v3212, %v3224
      %v3285 = vadd.f32 %v3213, %v3224
      %v3286 = vadd.f32 %v3214, %v3224
      %v3287 = vadd.f32 %v3215, %v3224
      %v3288 = vadd.f32 %v3216, %v3224
      %v3289 = vadd.f32 %v3217, %v3224
      %v3290 = vadd.f32 %v3218, %v3224
      %v3291 = vmul.f32 %v3226, 0.1
      %v3292 = vmul.f32 %v3227, 0.1
      %v3293 = vmul.f32 %v3228, 0.1
      %v3294 = vmul.f32 %v3229, 0.1
      %v3295 = vmul.f32 %v3230, 0.1
      %v3296 = vmul.f32 %v3231, 0.1
      %v3297 = vmul.f32 %v3232, 0.1
      %v3298 = vmul.f32 %v3233, 0.1
      %v3299 = vmul.f32 %v3234, 0.1
      %v3300 = vmul.f32 %v3235, 0.1
      %v3301 = vmul.f32 %v3236, 0.1
      %v3302 = vmul.f32 %v3237, 0.1
      %v3303 = vmul.f32 %v3238, 0.1
      %v3304 = vmul.f32 %v3239, 0.1
      %v3305 = vmul.f32 %v3240, 0.1
      %v3306 = vmul.f32 %v3241, 0.1
      %v3307 = vmul.f32 %v3242, 0.1
      %v3308 = vmul.f32 %v3243, 0.1
      %v3309 = vmul.f32 %v3244, 0.1
      %v3310 = vmul.f32 %v3245, 0.1
      %v3311 = vmul.f32 %v3246, 0.1
      %v3312 = vmul.f32 %v3247, 0.1
      %v3313 = vmul.f32 %v3248, 0.1
      %v3314 = vmul.f32 %v3249, 0.1
      %v3315 = vmul.f32 %v3250, 0.1
      %v3316 = vmul.f32 %v3251, 0.1
      %v3317 = vmul.f32 %v3252, 0.1
      %v3318 = vmul.f32 %v3253, 0.1
      %v3319 = vmul.f32 %v3254, 0.1
      %v3320 = vmul.f32 %v3255, 0.1
      %v3321 = vmul.f32 %v3256, 0.1
      %v3322 = vmul.f32 %v3257, 0.1
      %v3323 = vmul.f32 %v3258, 0.1
      %v3324 = vmul.f32 %v3259, 0.1
      %v3325 = vmul.f32 %v3260, 0.1
      %v3326 = vmul.f32 %v3261, 0.1
      %v3327 = vmul.f32 %v3262, 0.1
      %v3328 = vmul.f32 %v3263, 0.1
      %v3329 = vmul.f32 %v3264, 0.1
      %v3330 = vmul.f32 %v3265, 0.1
      %v3331 = vmul.f32 %v3266, 0.1
      %v3332 = vmul.f32 %v3267, 0.1
      %v3333 = vmul.f32 %v3268, 0.1
      %v3334 = vmul.f32 %v3269, 0.1
      %v3335 = vmul.f32 %v3270, 0.1
      %v3336 = vmul.f32 %v3271, 0.1
      %v3337 = vmul.f32 %v3272, 0.1
      %v3338 = vmul.f32 %v3273, 0.1
      %v3339 = vmul.f32 %v3274, 0.1
      %v3340 = vmul.f32 %v3275, 0.1
      %v3341 = vmul.f32 %v3276, 0.1
      %v3342 = vmul.f32 %v3277, 0.1
      %v3343 = vmul.f32 %v3278, 0.1
      %v3344 = vmul.f32 %v3279, 0.1
      %v3345 = vmul.f32 %v3280, 0.1
      %v3346 = vmul.f32 %v3281, 0.1
      %v3347 = vmul.f32 %v3282, 0.1
      %v3348 = vmul.f32 %v3283, 0.1
      %v3349 = vmul.f32 %v3284, 0.1
      %v3350 = vmul.f32 %v3285, 0.1
      %v3351 = vmul.f32 %v3286, 0.1
      %v3352 = vmul.f32 %v3287, 0.1
      %v3353 = vmul.f32 %v3288, 0.1
      %v3354 = vmul.f32 %v3289, 0.1
      %v3355 = vmul.f32 %v3290, 0.1
      %v3356 = vmax.f32 %v3226, %v3291
      %v3357 = vmax.f32 %v3227, %v3292
      %v3358 = vmax.f32 %v3228, %v3293
      %v3359 = vmax.f32 %v3229, %v3294
      %v3360 = vmax.f32 %v3230, %v3295
      %v3361 = vmax.f32 %v3231, %v3296
      %v3362 = vmax.f32 %v3232, %v3297
      %v3363 = vmax.f32 %v3233, %v3298
      %v3364 = vmax.f32 %v3234, %v3299
      %v3365 = vmax.f32 %v3235, %v3300
      %v3366 = vmax.f32 %v3236, %v3301
      %v3367 = vmax.f32 %v3237, %v3302
      %v3368 = vmax.f32 %v3238, %v3303
      %v3369 = vmax.f32 %v3239, %v3304
      %v3370 = vmax.f32 %v3240, %v3305
      %v3371 = vmax.f32 %v3241, %v3306
      %v3372 = vmax.f32 %v3242, %v3307
      %v3373 = vmax.f32 %v3243, %v3308
      %v3374 = vmax.f32 %v3244, %v3309
      %v3375 = vmax.f32 %v3245, %v3310
      %v3376 = vmax.f32 %v3246, %v3311
      %v3377 = vmax.f32 %v3247, %v3312
      %v3378 = vmax.f32 %v3248, %v3313
      %v3379 = vmax.f32 %v3249, %v3314
      %v3380 = vmax.f32 %v3250, %v3315
      %v3381 = vmax.f32 %v3251, %v3316
      %v3382 = vmax.f32 %v3252, %v3317
      %v3383 = vmax.f32 %v3253, %v3318
      %v3384 = vmax.f32 %v3254, %v3319
      %v3385 = vmax.f32 %v3255, %v3320
      %v3386 = vmax.f32 %v3256, %v3321
      %v3387 = vmax.f32 %v3257, %v3322
      %v3388 = vmax.f32 %v3258, %v3323
      %v3389 = vmax.f32 %v3259, %v3324
      %v3390 = vmax.f32 %v3260, %v3325
      %v3391 = vmax.f32 %v3261, %v3326
      %v3392 = vmax.f32 %v3262, %v3327
      %v3393 = vmax.f32 %v3263, %v3328
      %v3394 = vmax.f32 %v3264, %v3329
      %v3395 = vmax.f32 %v3265, %v3330
      %v3396 = vmax.f32 %v3266, %v3331
      %v3397 = vmax.f32 %v3267, %v3332
      %v3398 = vmax.f32 %v3268, %v3333
      %v3399 = vmax.f32 %v3269, %v3334
      %v3400 = vmax.f32 %v3270, %v3335
      %v3401 = vmax.f32 %v3271, %v3336
      %v3402 = vmax.f32 %v3272, %v3337
      %v3403 = vmax.f32 %v3273, %v3338
      %v3404 = vmax.f32 %v3274, %v3339
      %v3405 = vmax.f32 %v3275, %v3340
      %v3406 = vmax.f32 %v3276, %v3341
      %v3407 = vmax.f32 %v3277, %v3342
      %v3408 = vmax.f32 %v3278, %v3343
      %v3409 = vmax.f32 %v3279, %v3344
      %v3410 = vmax.f32 %v3280, %v3345
      %v3411 = vmax.f32 %v3281, %v3346
      %v3412 = vmax.f32 %v3282, %v3347
      %v3413 = vmax.f32 %v3283, %v3348
      %v3414 = vmax.f32 %v3284, %v3349
      %v3415 = vmax.f32 %v3285, %v3350
      %v3416 = vmax.f32 %v3286, %v3351
      %v3417 = vmax.f32 %v3287, %v3352
      %v3418 = vmax.f32 %v3288, %v3353
      %v3419 = vmax.f32 %v3289, %v3354
      %v3420 = vmax.f32 %v3290, %v3355
      %v3485 = vrot.slane %v257, 1
      %v3486 = vrot.slane %v258, 1
      %v3487 = vsel %vm2441, %v3485, %v3486
      %v3488 = vrot.slane %v259, 1
      %v3489 = vsel %vm2441, %v3486, %v3488
      %v3490 = vrot.slane %v260, 1
      %v3491 = vsel %vm2441, %v3488, %v3490
      %v3492 = vrot.slane %v261, 1
      %v3493 = vsel %vm2441, %v3490, %v3492
      %v3494 = vrot.slane %v262, 1
      %v3495 = vsel %vm2441, %v3492, %v3494
      %v3496 = vrot.slane %v263, 1
      %v3497 = vsel %vm2441, %v3494, %v3496
      %v3498 = vrot.slane %v264, 1
      %v3499 = vsel %vm2441, %v3496, %v3498
      %v3500 = vrot.slane %v265, 1
      %v3501 = vsel %vm2441, %v3498, %v3500
      %v3502 = vrot.slane %v266, 1
      %v3503 = vsel %vm2441, %v3500, %v3502
      %v3504 = vrot.slane %v267, 1
      %v3505 = vsel %vm2441, %v3502, %v3504
      %v3506 = vrot.slane %v268, 1
      %v3507 = vsel %vm2441, %v3504, %v3506
      %v3508 = vrot.slane %v269, 1
      %v3509 = vsel %vm2441, %v3506, %v3508
      %v3510 = vrot.slane %v270, 1
      %v3511 = vsel %vm2441, %v3508, %v3510
      %v3512 = vrot.slane %v271, 1
      %v3513 = vsel %vm2441, %v3510, %v3512
      %v3514 = vrot.slane %v272, 1
      %v3515 = vsel %vm2441, %v3512, %v3514
      %v3516 = vrot.slane %v273, 1
      %v3517 = vsel %vm2441, %v3514, %v3516
      %v3518 = vrot.slane %v274, 1
      %v3519 = vsel %vm2441, %v3516, %v3518
      %v3520 = vrot.slane %v275, 1
      %v3521 = vsel %vm2441, %v3518, %v3520
      %v3522 = vrot.slane %v276, 1
      %v3523 = vsel %vm2441, %v3520, %v3522
      %v3524 = vrot.slane %v277, 1
      %v3525 = vsel %vm2441, %v3522, %v3524
      %v3526 = vrot.slane %v278, 1
      %v3527 = vsel %vm2441, %v3524, %v3526
      %v3528 = vrot.slane %v279, 1
      %v3529 = vsel %vm2441, %v3526, %v3528
      %v3530 = vrot.slane %v280, 1
      %v3531 = vsel %vm2441, %v3528, %v3530
      %v3532 = vrot.slane %v281, 1
      %v3533 = vsel %vm2441, %v3530, %v3532
      %v3534 = vrot.slane %v282, 1
      %v3535 = vsel %vm2441, %v3532, %v3534
      %v3536 = vrot.slane %v283, 1
      %v3537 = vsel %vm2441, %v3534, %v3536
      %v3538 = vrot.slane %v284, 1
      %v3539 = vsel %vm2441, %v3536, %v3538
      %v3540 = vrot.slane %v285, 1
      %v3541 = vsel %vm2441, %v3538, %v3540
      %v3542 = vrot.slane %v286, 1
      %v3543 = vsel %vm2441, %v3540, %v3542
      %v3544 = vrot.slane %v287, 1
      %v3545 = vsel %vm2441, %v3542, %v3544
      %v3546 = vrot.slane %v288, 1
      %v3547 = vsel %vm2441, %v3544, %v3546
      %v3548 = vrot.slane %v289, 1
      %v3549 = vsel %vm2441, %v3546, %v3548
      %v3550 = vrot.slane %v290, 1
      %v3551 = vsel %vm2441, %v3548, %v3550
      %v3552 = vrot.slane %v291, 1
      %v3553 = vsel %vm2441, %v3550, %v3552
      %v3554 = vrot.slane %v292, 1
      %v3555 = vsel %vm2441, %v3552, %v3554
      %v3556 = vrot.slane %v293, 1
      %v3557 = vsel %vm2441, %v3554, %v3556
      %v3558 = vrot.slane %v294, 1
      %v3559 = vsel %vm2441, %v3556, %v3558
      %v3560 = vrot.slane %v295, 1
      %v3561 = vsel %vm2441, %v3558, %v3560
      %v3562 = vrot.slane %v296, 1
      %v3563 = vsel %vm2441, %v3560, %v3562
      %v3564 = vrot.slane %v297, 1
      %v3565 = vsel %vm2441, %v3562, %v3564
      %v3566 = vrot.slane %v298, 1
      %v3567 = vsel %vm2441, %v3564, %v3566
      %v3568 = vrot.slane %v299, 1
      %v3569 = vsel %vm2441, %v3566, %v3568
      %v3570 = vrot.slane %v300, 1
      %v3571 = vsel %vm2441, %v3568, %v3570
      %v3572 = vrot.slane %v301, 1
      %v3573 = vsel %vm2441, %v3570, %v3572
      %v3574 = vrot.slane %v302, 1
      %v3575 = vsel %vm2441, %v3572, %v3574
      %v3576 = vrot.slane %v303, 1
      %v3577 = vsel %vm2441, %v3574, %v3576
      %v3578 = vrot.slane %v304, 1
      %v3579 = vsel %vm2441, %v3576, %v3578
      %v3580 = vrot.slane %v305, 1
      %v3581 = vsel %vm2441, %v3578, %v3580
      %v3582 = vrot.slane %v306, 1
      %v3583 = vsel %vm2441, %v3580, %v3582
      %v3584 = vrot.slane %v307, 1
      %v3585 = vsel %vm2441, %v3582, %v3584
      %v3586 = vrot.slane %v308, 1
      %v3587 = vsel %vm2441, %v3584, %v3586
      %v3588 = vrot.slane %v309, 1
      %v3589 = vsel %vm2441, %v3586, %v3588
      %v3590 = vrot.slane %v310, 1
      %v3591 = vsel %vm2441, %v3588, %v3590
      %v3592 = vrot.slane %v311, 1
      %v3593 = vsel %vm2441, %v3590, %v3592
      %v3594 = vrot.slane %v312, 1
      %v3595 = vsel %vm2441, %v3592, %v3594
      %v3596 = vrot.slane %v313, 1
      %v3597 = vsel %vm2441, %v3594, %v3596
      %v3598 = vrot.slane %v314, 1
      %v3599 = vsel %vm2441, %v3596, %v3598
      %v3600 = vrot.slane %v315, 1
      %v3601 = vsel %vm2441, %v3598, %v3600
      %v3602 = vrot.slane %v316, 1
      %v3603 = vsel %vm2441, %v3600, %v3602
      %v3604 = vrot.slane %v317, 1
      %v3605 = vsel %vm2441, %v3602, %v3604
      %v3606 = vrot.slane %v318, 1
      %v3607 = vsel %vm2441, %v3604, %v3606
      %v3608 = vrot.slane %v319, 1
      %v3609 = vsel %vm2441, %v3606, %v3608
      %v3610 = vrot.slane %v320, 1
      %v3611 = vsel %vm2441, %v3608, %v3610
      %v3677 = vadd.f32 %v3356, %v3485
      %v3678 = vadd.f32 %v3357, %v3487
      %v3679 = vadd.f32 %v3358, %v3489
      %v3680 = vadd.f32 %v3359, %v3491
      %v3681 = vadd.f32 %v3360, %v3493
      %v3682 = vadd.f32 %v3361, %v3495
      %v3683 = vadd.f32 %v3362, %v3497
      %v3684 = vadd.f32 %v3363, %v3499
      %v3685 = vadd.f32 %v3364, %v3501
      %v3686 = vadd.f32 %v3365, %v3503
      %v3687 = vadd.f32 %v3366, %v3505
      %v3688 = vadd.f32 %v3367, %v3507
      %v3689 = vadd.f32 %v3368, %v3509
      %v3690 = vadd.f32 %v3369, %v3511
      %v3691 = vadd.f32 %v3370, %v3513
      %v3692 = vadd.f32 %v3371, %v3515
      %v3693 = vadd.f32 %v3372, %v3517
      %v3694 = vadd.f32 %v3373, %v3519
      %v3695 = vadd.f32 %v3374, %v3521
      %v3696 = vadd.f32 %v3375, %v3523
      %v3697 = vadd.f32 %v3376, %v3525
      %v3698 = vadd.f32 %v3377, %v3527
      %v3699 = vadd.f32 %v3378, %v3529
      %v3700 = vadd.f32 %v3379, %v3531
      %v3701 = vadd.f32 %v3380, %v3533
      %v3702 = vadd.f32 %v3381, %v3535
      %v3703 = vadd.f32 %v3382, %v3537
      %v3704 = vadd.f32 %v3383, %v3539
      %v3705 = vadd.f32 %v3384, %v3541
      %v3706 = vadd.f32 %v3385, %v3543
      %v3707 = vadd.f32 %v3386, %v3545
      %v3708 = vadd.f32 %v3387, %v3547
      %v3709 = vadd.f32 %v3388, %v3549
      %v3710 = vadd.f32 %v3389, %v3551
      %v3711 = vadd.f32 %v3390, %v3553
      %v3712 = vadd.f32 %v3391, %v3555
      %v3713 = vadd.f32 %v3392, %v3557
      %v3714 = vadd.f32 %v3393, %v3559
      %v3715 = vadd.f32 %v3394, %v3561
      %v3716 = vadd.f32 %v3395, %v3563
      %v3717 = vadd.f32 %v3396, %v3565
      %v3718 = vadd.f32 %v3397, %v3567
      %v3719 = vadd.f32 %v3398, %v3569
      %v3720 = vadd.f32 %v3399, %v3571
      %v3721 = vadd.f32 %v3400, %v3573
      %v3722 = vadd.f32 %v3401, %v3575
      %v3723 = vadd.f32 %v3402, %v3577
      %v3724 = vadd.f32 %v3403, %v3579
      %v3725 = vadd.f32 %v3404, %v3581
      %v3726 = vadd.f32 %v3405, %v3583
      %v3727 = vadd.f32 %v3406, %v3585
      %v3728 = vadd.f32 %v3407, %v3587
      %v3729 = vadd.f32 %v3408, %v3589
      %v3730 = vadd.f32 %v3409, %v3591
      %v3731 = vadd.f32 %v3410, %v3593
      %v3732 = vadd.f32 %v3411, %v3595
      %v3733 = vadd.f32 %v3412, %v3597
      %v3734 = vadd.f32 %v3413, %v3599
      %v3735 = vadd.f32 %v3414, %v3601
      %v3736 = vadd.f32 %v3415, %v3603
      %v3737 = vadd.f32 %v3416, %v3605
      %v3738 = vadd.f32 %v3417, %v3607
      %v3739 = vadd.f32 %v3418, %v3609
      %v3740 = vadd.f32 %v3419, %v3611
      %v3741 = vadd.f32 %v3420, %v3610
      %v3742 = vpack.c.bf16 %v3678, %v3677
      %v3743 = vpack.c.bf16 %v3680, %v3679
      %v3744 = vpack.c.bf16 %v3682, %v3681
      %v3745 = vpack.c.bf16 %v3684, %v3683
      %v3746 = vpack.c.bf16 %v3686, %v3685
      %v3747 = vpack.c.bf16 %v3688, %v3687
      %v3748 = vpack.c.bf16 %v3690, %v3689
      %v3749 = vpack.c.bf16 %v3692, %v3691
      %v3750 = vpack.c.bf16 %v3694, %v3693
      %v3751 = vpack.c.bf16 %v3696, %v3695
      %v3752 = vpack.c.bf16 %v3698, %v3697
      %v3753 = vpack.c.bf16 %v3700, %v3699
      %v3754 = vpack.c.bf16 %v3702, %v3701
      %v3755 = vpack.c.bf16 %v3704, %v3703
      %v3756 = vpack.c.bf16 %v3706, %v3705
      %v3757 = vpack.c.bf16 %v3708, %v3707
      %v3758 = vpack.c.bf16 %v3710, %v3709
      %v3759 = vpack.c.bf16 %v3712, %v3711
      %v3760 = vpack.c.bf16 %v3714, %v3713
      %v3761 = vpack.c.bf16 %v3716, %v3715
      %v3762 = vpack.c.bf16 %v3718, %v3717
      %v3763 = vpack.c.bf16 %v3720, %v3719
      %v3764 = vpack.c.bf16 %v3722, %v3721
      %v3765 = vpack.c.bf16 %v3724, %v3723
      %v3766 = vpack.c.bf16 %v3726, %v3725
      %v3767 = vpack.c.bf16 %v3728, %v3727
      %v3768 = vpack.c.bf16 %v3730, %v3729
      %v3769 = vpack.c.bf16 %v3732, %v3731
      %v3770 = vpack.c.bf16 %v3734, %v3733
      %v3771 = vpack.c.bf16 %v3736, %v3735
      %v3772 = vpack.c.bf16 %v3738, %v3737
      %v3773 = vpack.c.bf16 %v3740, %v3739
      %v3774 = vpack.c.bf16 %v3741, %v3741
      %v3808 = vunpack.c.l.b16 %v3742
      %v3809 = vunpack.c.h.b16 %v3742
      %v3810 = vunpack.c.l.b16 %v3743
      %v3811 = vunpack.c.h.b16 %v3743
      %v3812 = vunpack.c.l.b16 %v3744
      %v3813 = vunpack.c.h.b16 %v3744
      %v3814 = vunpack.c.l.b16 %v3745
      %v3815 = vunpack.c.h.b16 %v3745
      %v3816 = vunpack.c.l.b16 %v3746
      %v3817 = vunpack.c.h.b16 %v3746
      %v3818 = vunpack.c.l.b16 %v3747
      %v3819 = vunpack.c.h.b16 %v3747
      %v3820 = vunpack.c.l.b16 %v3748
      %v3821 = vunpack.c.h.b16 %v3748
      %v3822 = vunpack.c.l.b16 %v3749
      %v3823 = vunpack.c.h.b16 %v3749
      %v3824 = vunpack.c.l.b16 %v3750
      %v3825 = vunpack.c.h.b16 %v3750
      %v3826 = vunpack.c.l.b16 %v3751
      %v3827 = vunpack.c.h.b16 %v3751
      %v3828 = vunpack.c.l.b16 %v3752
      %v3829 = vunpack.c.h.b16 %v3752
      %v3830 = vunpack.c.l.b16 %v3753
      %v3831 = vunpack.c.h.b16 %v3753
      %v3832 = vunpack.c.l.b16 %v3754
      %v3833 = vunpack.c.h.b16 %v3754
      %v3834 = vunpack.c.l.b16 %v3755
      %v3835 = vunpack.c.h.b16 %v3755
      %v3836 = vunpack.c.l.b16 %v3756
      %v3837 = vunpack.c.h.b16 %v3756
      %v3838 = vunpack.c.l.b16 %v3757
      %v3839 = vunpack.c.h.b16 %v3757
      %v3840 = vunpack.c.l.b16 %v3758
      %v3841 = vunpack.c.h.b16 %v3758
      %v3842 = vunpack.c.l.b16 %v3759
      %v3843 = vunpack.c.h.b16 %v3759
      %v3844 = vunpack.c.l.b16 %v3760
      %v3845 = vunpack.c.h.b16 %v3760
      %v3846 = vunpack.c.l.b16 %v3761
      %v3847 = vunpack.c.h.b16 %v3761
      %v3848 = vunpack.c.l.b16 %v3762
      %v3849 = vunpack.c.h.b16 %v3762
      %v3850 = vunpack.c.l.b16 %v3763
      %v3851 = vunpack.c.h.b16 %v3763
      %v3852 = vunpack.c.l.b16 %v3764
      %v3853 = vunpack.c.h.b16 %v3764
      %v3854 = vunpack.c.l.b16 %v3765
      %v3855 = vunpack.c.h.b16 %v3765
      %v3856 = vunpack.c.l.b16 %v3766
      %v3857 = vunpack.c.h.b16 %v3766
      %v3858 = vunpack.c.l.b16 %v3767
      %v3859 = vunpack.c.h.b16 %v3767
      %v3860 = vunpack.c.l.b16 %v3768
      %v3861 = vunpack.c.h.b16 %v3768
      %v3862 = vunpack.c.l.b16 %v3769
      %v3863 = vunpack.c.h.b16 %v3769
      %v3864 = vunpack.c.l.b16 %v3770
      %v3865 = vunpack.c.h.b16 %v3770
      %v3866 = vunpack.c.l.b16 %v3771
      %v3867 = vunpack.c.h.b16 %v3771
      %v3868 = vunpack.c.l.b16 %v3772
      %v3869 = vunpack.c.h.b16 %v3772
      %v3870 = vunpack.c.l.b16 %v3773
      %v3871 = vunpack.c.h.b16 %v3773
      %v3872 = vunpack.c.l.b16 %v3774
      %v3873 = vpack.c.b16 %v3808, %v3808
      %v3874 = vpack.c.b16 %v3809, %v3809
      %v3875 = vpack.c.b16 %v3810, %v3810
      %v3876 = vpack.c.b16 %v3811, %v3811
      %v3877 = vpack.c.b16 %v3812, %v3812
      %v3878 = vpack.c.b16 %v3813, %v3813
      %v3879 = vpack.c.b16 %v3814, %v3814
      %v3880 = vpack.c.b16 %v3815, %v3815
      %v3881 = vpack.c.b16 %v3816, %v3816
      %v3882 = vpack.c.b16 %v3817, %v3817
      %v3883 = vpack.c.b16 %v3818, %v3818
      %v3884 = vpack.c.b16 %v3819, %v3819
      %v3885 = vpack.c.b16 %v3820, %v3820
      %v3886 = vpack.c.b16 %v3821, %v3821
      %v3887 = vpack.c.b16 %v3822, %v3822
      %v3888 = vpack.c.b16 %v3823, %v3823
      %v3889 = vpack.c.b16 %v3824, %v3824
      %v3890 = vpack.c.b16 %v3825, %v3825
      %v3891 = vpack.c.b16 %v3826, %v3826
      %v3892 = vpack.c.b16 %v3827, %v3827
      %v3893 = vpack.c.b16 %v3828, %v3828
      %v3894 = vpack.c.b16 %v3829, %v3829
      %v3895 = vpack.c.b16 %v3830, %v3830
      %v3896 = vpack.c.b16 %v3831, %v3831
      %v3897 = vpack.c.b16 %v3832, %v3832
      %v3898 = vpack.c.b16 %v3833, %v3833
      %v3899 = vpack.c.b16 %v3834, %v3834
      %v3900 = vpack.c.b16 %v3835, %v3835
      %v3901 = vpack.c.b16 %v3836, %v3836
      %v3902 = vpack.c.b16 %v3837, %v3837
      %v3903 = vpack.c.b16 %v3838, %v3838
      %v3904 = vpack.c.b16 %v3839, %v3839
      %v3905 = vpack.c.b16 %v3840, %v3840
      %v3906 = vpack.c.b16 %v3841, %v3841
      %v3907 = vpack.c.b16 %v3842, %v3842
      %v3908 = vpack.c.b16 %v3843, %v3843
      %v3909 = vpack.c.b16 %v3844, %v3844
      %v3910 = vpack.c.b16 %v3845, %v3845
      %v3911 = vpack.c.b16 %v3846, %v3846
      %v3912 = vpack.c.b16 %v3847, %v3847
      %v3913 = vpack.c.b16 %v3848, %v3848
      %v3914 = vpack.c.b16 %v3849, %v3849
      %v3915 = vpack.c.b16 %v3850, %v3850
      %v3916 = vpack.c.b16 %v3851, %v3851
      %v3917 = vpack.c.b16 %v3852, %v3852
      %v3918 = vpack.c.b16 %v3853, %v3853
      %v3919 = vpack.c.b16 %v3854, %v3854
      %v3920 = vpack.c.b16 %v3855, %v3855
      %v3921 = vpack.c.b16 %v3856, %v3856
      %v3922 = vpack.c.b16 %v3857, %v3857
      %v3923 = vpack.c.b16 %v3858, %v3858
      %v3924 = vpack.c.b16 %v3859, %v3859
      %v3925 = vpack.c.b16 %v3860, %v3860
      %v3926 = vpack.c.b16 %v3861, %v3861
      %v3927 = vpack.c.b16 %v3862, %v3862
      %v3928 = vpack.c.b16 %v3863, %v3863
      %v3929 = vpack.c.b16 %v3864, %v3864
      %v3930 = vpack.c.b16 %v3865, %v3865
      %v3931 = vpack.c.b16 %v3866, %v3866
      %v3932 = vpack.c.b16 %v3867, %v3867
      %v3933 = vpack.c.b16 %v3868, %v3868
      %v3934 = vpack.c.b16 %v3869, %v3869
      %v3935 = vpack.c.b16 %v3870, %v3870
      %v3936 = vpack.c.b16 %v3871, %v3871
      %v3937 = vpack.c.b16 %v3872, %v3872
      %vm3938 = vsmask.f32 256
      %vm3939 = vsmask.f32 4368
      %vm3940 = vmor %vm3938, %vm3939
      %v3942 = vshrl.u32 %v3873, 16
      %v3944 = vrot.slane %v3942, 7
      %v3945 = vrot.slane %v3944, 4
      %v3947 = vshrl.u32 %v3874, 16
      %v3949 = vrot.slane %v3947, 7
      %v3950 = vshll.u32 %v3874, 16
      %v3952 = vor.u32 %v3949, %v3950
      %v3953 = vsel %vm3940, %v3945, %v3952
      %v3954 = vrot.slane %v3949, 4
      %v3956 = vshrl.u32 %v3875, 16
      %v3958 = vrot.slane %v3956, 7
      %v3959 = vshll.u32 %v3875, 16
      %v3961 = vor.u32 %v3958, %v3959
      %v3962 = vsel %vm3940, %v3954, %v3961
      %v3963 = vrot.slane %v3958, 4
      %v3965 = vshrl.u32 %v3876, 16
      %v3967 = vrot.slane %v3965, 7
      %v3968 = vshll.u32 %v3876, 16
      %v3970 = vor.u32 %v3967, %v3968
      %v3971 = vsel %vm3940, %v3963, %v3970
      %v3972 = vrot.slane %v3967, 4
      %v3974 = vshrl.u32 %v3877, 16
      %v3976 = vrot.slane %v3974, 7
      %v3977 = vshll.u32 %v3877, 16
      %v3979 = vor.u32 %v3976, %v3977
      %v3980 = vsel %vm3940, %v3972, %v3979
      %v3981 = vrot.slane %v3976, 4
      %v3983 = vshrl.u32 %v3878, 16
      %v3985 = vrot.slane %v3983, 7
      %v3986 = vshll.u32 %v3878, 16
      %v3988 = vor.u32 %v3985, %v3986
      %v3989 = vsel %vm3940, %v3981, %v3988
      %v3990 = vrot.slane %v3985, 4
      %v3992 = vshrl.u32 %v3879, 16
      %v3994 = vrot.slane %v3992, 7
      %v3995 = vshll.u32 %v3879, 16
      %v3997 = vor.u32 %v3994, %v3995
      %v3998 = vsel %vm3940, %v3990, %v3997
      %v3999 = vrot.slane %v3994, 4
      %v4001 = vshrl.u32 %v3880, 16
      %v4003 = vrot.slane %v4001, 7
      %v4004 = vshll.u32 %v3880, 16
      %v4006 = vor.u32 %v4003, %v4004
      %v4007 = vsel %vm3940, %v3999, %v4006
      %v4008 = vrot.slane %v4003, 4
      %v4010 = vshrl.u32 %v3881, 16
      %v4012 = vrot.slane %v4010, 7
      %v4013 = vshll.u32 %v3881, 16
      %v4015 = vor.u32 %v4012, %v4013
      %v4016 = vsel %vm3940, %v4008, %v4015
      %v4017 = vrot.slane %v4012, 4
      %v4019 = vshrl.u32 %v3882, 16
      %v4021 = vrot.slane %v4019, 7
      %v4022 = vshll.u32 %v3882, 16
      %v4024 = vor.u32 %v4021, %v4022
      %v4025 = vsel %vm3940, %v4017, %v4024
      %v4026 = vrot.slane %v4021, 4
      %v4028 = vshrl.u32 %v3883, 16
      %v4030 = vrot.slane %v4028, 7
      %v4031 = vshll.u32 %v3883, 16
      %v4033 = vor.u32 %v4030, %v4031
      %v4034 = vsel %vm3940, %v4026, %v4033
      %v4035 = vrot.slane %v4030, 4
      %v4037 = vshrl.u32 %v3884, 16
      %v4039 = vrot.slane %v4037, 7
      %v4040 = vshll.u32 %v3884, 16
      %v4042 = vor.u32 %v4039, %v4040
      %v4043 = vsel %vm3940, %v4035, %v4042
      %v4044 = vrot.slane %v4039, 4
      %v4046 = vshrl.u32 %v3885, 16
      %v4048 = vrot.slane %v4046, 7
      %v4049 = vshll.u32 %v3885, 16
      %v4051 = vor.u32 %v4048, %v4049
      %v4052 = vsel %vm3940, %v4044, %v4051
      %v4053 = vrot.slane %v4048, 4
      %v4055 = vshrl.u32 %v3886, 16
      %v4057 = vrot.slane %v4055, 7
      %v4058 = vshll.u32 %v3886, 16
      %v4060 = vor.u32 %v4057, %v4058
      %v4061 = vsel %vm3940, %v4053, %v4060
      %v4062 = vrot.slane %v4057, 4
      %v4064 = vshrl.u32 %v3887, 16
      %v4066 = vrot.slane %v4064, 7
      %v4067 = vshll.u32 %v3887, 16
      %v4069 = vor.u32 %v4066, %v4067
      %v4070 = vsel %vm3940, %v4062, %v4069
      %v4071 = vrot.slane %v4066, 4
      %v4073 = vshrl.u32 %v3888, 16
      %v4075 = vrot.slane %v4073, 7
      %v4076 = vshll.u32 %v3888, 16
      %v4078 = vor.u32 %v4075, %v4076
      %v4079 = vsel %vm3940, %v4071, %v4078
      %v4080 = vrot.slane %v4075, 4
      %v4082 = vshrl.u32 %v3889, 16
      %v4084 = vrot.slane %v4082, 7
      %v4085 = vshll.u32 %v3889, 16
      %v4087 = vor.u32 %v4084, %v4085
      %v4088 = vsel %vm3940, %v4080, %v4087
      %v4089 = vrot.slane %v4084, 4
      %v4091 = vshrl.u32 %v3890, 16
      %v4093 = vrot.slane %v4091, 7
      %v4094 = vshll.u32 %v3890, 16
      %v4096 = vor.u32 %v4093, %v4094
      %v4097 = vsel %vm3940, %v4089, %v4096
      %v4098 = vrot.slane %v4093, 4
      %v4100 = vshrl.u32 %v3891, 16
      %v4102 = vrot.slane %v4100, 7
      %v4103 = vshll.u32 %v3891, 16
      %v4105 = vor.u32 %v4102, %v4103
      %v4106 = vsel %vm3940, %v4098, %v4105
      %v4107 = vrot.slane %v4102, 4
      %v4109 = vshrl.u32 %v3892, 16
      %v4111 = vrot.slane %v4109, 7
      %v4112 = vshll.u32 %v3892, 16
      %v4114 = vor.u32 %v4111, %v4112
      %v4115 = vsel %vm3940, %v4107, %v4114
      %v4116 = vrot.slane %v4111, 4
      %v4118 = vshrl.u32 %v3893, 16
      %v4120 = vrot.slane %v4118, 7
      %v4121 = vshll.u32 %v3893, 16
      %v4123 = vor.u32 %v4120, %v4121
      %v4124 = vsel %vm3940, %v4116, %v4123
      %v4125 = vrot.slane %v4120, 4
      %v4127 = vshrl.u32 %v3894, 16
      %v4129 = vrot.slane %v4127, 7
      %v4130 = vshll.u32 %v3894, 16
      %v4132 = vor.u32 %v4129, %v4130
      %v4133 = vsel %vm3940, %v4125, %v4132
      %v4134 = vrot.slane %v4129, 4
      %v4136 = vshrl.u32 %v3895, 16
      %v4138 = vrot.slane %v4136, 7
      %v4139 = vshll.u32 %v3895, 16
      %v4141 = vor.u32 %v4138, %v4139
      %v4142 = vsel %vm3940, %v4134, %v4141
      %v4143 = vrot.slane %v4138, 4
      %v4145 = vshrl.u32 %v3896, 16
      %v4147 = vrot.slane %v4145, 7
      %v4148 = vshll.u32 %v3896, 16
      %v4150 = vor.u32 %v4147, %v4148
      %v4151 = vsel %vm3940, %v4143, %v4150
      %v4152 = vrot.slane %v4147, 4
      %v4154 = vshrl.u32 %v3897, 16
      %v4156 = vrot.slane %v4154, 7
      %v4157 = vshll.u32 %v3897, 16
      %v4159 = vor.u32 %v4156, %v4157
      %v4160 = vsel %vm3940, %v4152, %v4159
      %v4161 = vrot.slane %v4156, 4
      %v4163 = vshrl.u32 %v3898, 16
      %v4165 = vrot.slane %v4163, 7
      %v4166 = vshll.u32 %v3898, 16
      %v4168 = vor.u32 %v4165, %v4166
      %v4169 = vsel %vm3940, %v4161, %v4168
      %v4170 = vrot.slane %v4165, 4
      %v4172 = vshrl.u32 %v3899, 16
      %v4174 = vrot.slane %v4172, 7
      %v4175 = vshll.u32 %v3899, 16
      %v4177 = vor.u32 %v4174, %v4175
      %v4178 = vsel %vm3940, %v4170, %v4177
      %v4179 = vrot.slane %v4174, 4
      %v4181 = vshrl.u32 %v3900, 16
      %v4183 = vrot.slane %v4181, 7
      %v4184 = vshll.u32 %v3900, 16
      %v4186 = vor.u32 %v4183, %v4184
      %v4187 = vsel %vm3940, %v4179, %v4186
      %v4188 = vrot.slane %v4183, 4
      %v4190 = vshrl.u32 %v3901, 16
      %v4192 = vrot.slane %v4190, 7
      %v4193 = vshll.u32 %v3901, 16
      %v4195 = vor.u32 %v4192, %v4193
      %v4196 = vsel %vm3940, %v4188, %v4195
      %v4197 = vrot.slane %v4192, 4
      %v4199 = vshrl.u32 %v3902, 16
      %v4201 = vrot.slane %v4199, 7
      %v4202 = vshll.u32 %v3902, 16
      %v4204 = vor.u32 %v4201, %v4202
      %v4205 = vsel %vm3940, %v4197, %v4204
      %v4206 = vrot.slane %v4201, 4
      %v4208 = vshrl.u32 %v3903, 16
      %v4210 = vrot.slane %v4208, 7
      %v4211 = vshll.u32 %v3903, 16
      %v4213 = vor.u32 %v4210, %v4211
      %v4214 = vsel %vm3940, %v4206, %v4213
      %v4215 = vrot.slane %v4210, 4
      %v4217 = vshrl.u32 %v3904, 16
      %v4219 = vrot.slane %v4217, 7
      %v4220 = vshll.u32 %v3904, 16
      %v4222 = vor.u32 %v4219, %v4220
      %v4223 = vsel %vm3940, %v4215, %v4222
      %v4224 = vrot.slane %v4219, 4
      %v4226 = vshrl.u32 %v3905, 16
      %v4228 = vrot.slane %v4226, 7
      %v4229 = vshll.u32 %v3905, 16
      %v4231 = vor.u32 %v4228, %v4229
      %v4232 = vsel %vm3940, %v4224, %v4231
      %v4233 = vrot.slane %v4228, 4
      %v4235 = vshrl.u32 %v3906, 16
      %v4237 = vrot.slane %v4235, 7
      %v4238 = vshll.u32 %v3906, 16
      %v4240 = vor.u32 %v4237, %v4238
      %v4241 = vsel %vm3940, %v4233, %v4240
      %v4242 = vrot.slane %v4237, 4
      %v4244 = vshrl.u32 %v3907, 16
      %v4246 = vrot.slane %v4244, 7
      %v4247 = vshll.u32 %v3907, 16
      %v4249 = vor.u32 %v4246, %v4247
      %v4250 = vsel %vm3940, %v4242, %v4249
      %v4251 = vrot.slane %v4246, 4
      %v4253 = vshrl.u32 %v3908, 16
      %v4255 = vrot.slane %v4253, 7
      %v4256 = vshll.u32 %v3908, 16
      %v4258 = vor.u32 %v4255, %v4256
      %v4259 = vsel %vm3940, %v4251, %v4258
      %v4260 = vrot.slane %v4255, 4
      %v4262 = vshrl.u32 %v3909, 16
      %v4264 = vrot.slane %v4262, 7
      %v4265 = vshll.u32 %v3909, 16
      %v4267 = vor.u32 %v4264, %v4265
      %v4268 = vsel %vm3940, %v4260, %v4267
      %v4269 = vrot.slane %v4264, 4
      %v4271 = vshrl.u32 %v3910, 16
      %v4273 = vrot.slane %v4271, 7
      %v4274 = vshll.u32 %v3910, 16
      %v4276 = vor.u32 %v4273, %v4274
      %v4277 = vsel %vm3940, %v4269, %v4276
      %v4278 = vrot.slane %v4273, 4
      %v4280 = vshrl.u32 %v3911, 16
      %v4282 = vrot.slane %v4280, 7
      %v4283 = vshll.u32 %v3911, 16
      %v4285 = vor.u32 %v4282, %v4283
      %v4286 = vsel %vm3940, %v4278, %v4285
      %v4287 = vrot.slane %v4282, 4
      %v4289 = vshrl.u32 %v3912, 16
      %v4291 = vrot.slane %v4289, 7
      %v4292 = vshll.u32 %v3912, 16
      %v4294 = vor.u32 %v4291, %v4292
      %v4295 = vsel %vm3940, %v4287, %v4294
      %v4296 = vrot.slane %v4291, 4
      %v4298 = vshrl.u32 %v3913, 16
      %v4300 = vrot.slane %v4298, 7
      %v4301 = vshll.u32 %v3913, 16
      %v4303 = vor.u32 %v4300, %v4301
      %v4304 = vsel %vm3940, %v4296, %v4303
      %v4305 = vrot.slane %v4300, 4
      %v4307 = vshrl.u32 %v3914, 16
      %v4309 = vrot.slane %v4307, 7
      %v4310 = vshll.u32 %v3914, 16
      %v4312 = vor.u32 %v4309, %v4310
      %v4313 = vsel %vm3940, %v4305, %v4312
      %v4314 = vrot.slane %v4309, 4
      %v4316 = vshrl.u32 %v3915, 16
      %v4318 = vrot.slane %v4316, 7
      %v4319 = vshll.u32 %v3915, 16
      %v4321 = vor.u32 %v4318, %v4319
      %v4322 = vsel %vm3940, %v4314, %v4321
      %v4323 = vrot.slane %v4318, 4
      %v4325 = vshrl.u32 %v3916, 16
      %v4327 = vrot.slane %v4325, 7
      %v4328 = vshll.u32 %v3916, 16
      %v4330 = vor.u32 %v4327, %v4328
      %v4331 = vsel %vm3940, %v4323, %v4330
      %v4332 = vrot.slane %v4327, 4
      %v4334 = vshrl.u32 %v3917, 16
      %v4336 = vrot.slane %v4334, 7
      %v4337 = vshll.u32 %v3917, 16
      %v4339 = vor.u32 %v4336, %v4337
      %v4340 = vsel %vm3940, %v4332, %v4339
      %v4341 = vrot.slane %v4336, 4
      %v4343 = vshrl.u32 %v3918, 16
      %v4345 = vrot.slane %v4343, 7
      %v4346 = vshll.u32 %v3918, 16
      %v4348 = vor.u32 %v4345, %v4346
      %v4349 = vsel %vm3940, %v4341, %v4348
      %v4350 = vrot.slane %v4345, 4
      %v4352 = vshrl.u32 %v3919, 16
      %v4354 = vrot.slane %v4352, 7
      %v4355 = vshll.u32 %v3919, 16
      %v4357 = vor.u32 %v4354, %v4355
      %v4358 = vsel %vm3940, %v4350, %v4357
      %v4359 = vrot.slane %v4354, 4
      %v4361 = vshrl.u32 %v3920, 16
      %v4363 = vrot.slane %v4361, 7
      %v4364 = vshll.u32 %v3920, 16
      %v4366 = vor.u32 %v4363, %v4364
      %v4367 = vsel %vm3940, %v4359, %v4366
      %v4368 = vrot.slane %v4363, 4
      %v4370 = vshrl.u32 %v3921, 16
      %v4372 = vrot.slane %v4370, 7
      %v4373 = vshll.u32 %v3921, 16
      %v4375 = vor.u32 %v4372, %v4373
      %v4376 = vsel %vm3940, %v4368, %v4375
      %v4377 = vrot.slane %v4372, 4
      %v4379 = vshrl.u32 %v3922, 16
      %v4381 = vrot.slane %v4379, 7
      %v4382 = vshll.u32 %v3922, 16
      %v4384 = vor.u32 %v4381, %v4382
      %v4385 = vsel %vm3940, %v4377, %v4384
      %v4386 = vrot.slane %v4381, 4
      %v4388 = vshrl.u32 %v3923, 16
      %v4390 = vrot.slane %v4388, 7
      %v4391 = vshll.u32 %v3923, 16
      %v4393 = vor.u32 %v4390, %v4391
      %v4394 = vsel %vm3940, %v4386, %v4393
      %v4395 = vrot.slane %v4390, 4
      %v4397 = vshrl.u32 %v3924, 16
      %v4399 = vrot.slane %v4397, 7
      %v4400 = vshll.u32 %v3924, 16
      %v4402 = vor.u32 %v4399, %v4400
      %v4403 = vsel %vm3940, %v4395, %v4402
      %v4404 = vrot.slane %v4399, 4
      %v4406 = vshrl.u32 %v3925, 16
      %v4408 = vrot.slane %v4406, 7
      %v4409 = vshll.u32 %v3925, 16
      %v4411 = vor.u32 %v4408, %v4409
      %v4412 = vsel %vm3940, %v4404, %v4411
      %v4413 = vrot.slane %v4408, 4
      %v4415 = vshrl.u32 %v3926, 16
      %v4417 = vrot.slane %v4415, 7
      %v4418 = vshll.u32 %v3926, 16
      %v4420 = vor.u32 %v4417, %v4418
      %v4421 = vsel %vm3940, %v4413, %v4420
      %v4422 = vrot.slane %v4417, 4
      %v4424 = vshrl.u32 %v3927, 16
      %v4426 = vrot.slane %v4424, 7
      %v4427 = vshll.u32 %v3927, 16
      %v4429 = vor.u32 %v4426, %v4427
      %v4430 = vsel %vm3940, %v4422, %v4429
      %v4431 = vrot.slane %v4426, 4
      %v4433 = vshrl.u32 %v3928, 16
      %v4435 = vrot.slane %v4433, 7
      %v4436 = vshll.u32 %v3928, 16
      %v4438 = vor.u32 %v4435, %v4436
      %v4439 = vsel %vm3940, %v4431, %v4438
      %v4440 = vrot.slane %v4435, 4
      %v4442 = vshrl.u32 %v3929, 16
      %v4444 = vrot.slane %v4442, 7
      %v4445 = vshll.u32 %v3929, 16
      %v4447 = vor.u32 %v4444, %v4445
      %v4448 = vsel %vm3940, %v4440, %v4447
      %v4449 = vrot.slane %v4444, 4
      %v4451 = vshrl.u32 %v3930, 16
      %v4453 = vrot.slane %v4451, 7
      %v4454 = vshll.u32 %v3930, 16
      %v4456 = vor.u32 %v4453, %v4454
      %v4457 = vsel %vm3940, %v4449, %v4456
      %v4458 = vrot.slane %v4453, 4
      %v4460 = vshrl.u32 %v3931, 16
      %v4462 = vrot.slane %v4460, 7
      %v4463 = vshll.u32 %v3931, 16
      %v4465 = vor.u32 %v4462, %v4463
      %v4466 = vsel %vm3940, %v4458, %v4465
      %v4467 = vrot.slane %v4462, 4
      %v4469 = vshrl.u32 %v3932, 16
      %v4471 = vrot.slane %v4469, 7
      %v4472 = vshll.u32 %v3932, 16
      %v4474 = vor.u32 %v4471, %v4472
      %v4475 = vsel %vm3940, %v4467, %v4474
      %v4476 = vrot.slane %v4471, 4
      %v4478 = vshrl.u32 %v3933, 16
      %v4480 = vrot.slane %v4478, 7
      %v4481 = vshll.u32 %v3933, 16
      %v4483 = vor.u32 %v4480, %v4481
      %v4484 = vsel %vm3940, %v4476, %v4483
      %v4485 = vrot.slane %v4480, 4
      %v4487 = vshrl.u32 %v3934, 16
      %v4489 = vrot.slane %v4487, 7
      %v4490 = vshll.u32 %v3934, 16
      %v4492 = vor.u32 %v4489, %v4490
      %v4493 = vsel %vm3940, %v4485, %v4492
      %v4494 = vrot.slane %v4489, 4
      %v4496 = vshrl.u32 %v3935, 16
      %v4498 = vrot.slane %v4496, 7
      %v4499 = vshll.u32 %v3935, 16
      %v4501 = vor.u32 %v4498, %v4499
      %v4502 = vsel %vm3940, %v4494, %v4501
      %v4503 = vrot.slane %v4498, 4
      %v4505 = vshrl.u32 %v3936, 16
      %v4507 = vrot.slane %v4505, 7
      %v4508 = vshll.u32 %v3936, 16
      %v4510 = vor.u32 %v4507, %v4508
      %v4511 = vsel %vm3940, %v4503, %v4510
      %v4512 = vrot.slane %v4507, 4
      %v4514 = vshrl.u32 %v3937, 16
      %v4516 = vrot.slane %v4514, 7
      %v4517 = vshll.u32 %v3937, 16
      %v4519 = vor.u32 %v4516, %v4517
      %v4520 = vsel %vm3940, %v4512, %v4519
      %vm4585 = vcmask 519168
      %4586 = vst.msk [vmem:[%s251] sm:$0xf] %vm4585, %v3953
      %4587 = vst.msk [vmem:[%s251 + $0x4] sm:$0xf] %vm4585, %v3962
      %4588 = vst.msk [vmem:[%s251 + $0x8] sm:$0xf] %vm4585, %v3971
      %4589 = vst.msk [vmem:[%s251 + $0xc] sm:$0xf] %vm4585, %v3980
      %4590 = vst.msk [vmem:[%s251 + $0x10] sm:$0xf] %vm4585, %v3989
      %4591 = vst.msk [vmem:[%s251 + $0x14] sm:$0xf] %vm4585, %v3998
      %4592 = vst.msk [vmem:[%s251 + $0x18] sm:$0xf] %vm4585, %v4007
      %4593 = vst.msk [vmem:[%s251 + $0x1c] sm:$0xf] %vm4585, %v4016
      %4594 = vst.msk [vmem:[%s251 + $0x20] sm:$0xf] %vm4585, %v4025
      %4595 = vst.msk [vmem:[%s251 + $0x24] sm:$0xf] %vm4585, %v4034
      %4596 = vst.msk [vmem:[%s251 + $0x28] sm:$0xf] %vm4585, %v4043
      %4597 = vst.msk [vmem:[%s251 + $0x2c] sm:$0xf] %vm4585, %v4052
      %4598 = vst.msk [vmem:[%s251 + $0x30] sm:$0xf] %vm4585, %v4061
      %4599 = vst.msk [vmem:[%s251 + $0x34] sm:$0xf] %vm4585, %v4070
      %4600 = vst.msk [vmem:[%s251 + $0x38] sm:$0xf] %vm4585, %v4079
      %4601 = vst.msk [vmem:[%s251 + $0x3c] sm:$0xf] %vm4585, %v4088
      %4602 = vst.msk [vmem:[%s251 + $0x40] sm:$0xf] %vm4585, %v4097
      %4603 = vst.msk [vmem:[%s251 + $0x44] sm:$0xf] %vm4585, %v4106
      %4604 = vst.msk [vmem:[%s251 + $0x48] sm:$0xf] %vm4585, %v4115
      %4605 = vst.msk [vmem:[%s251 + $0x4c] sm:$0xf] %vm4585, %v4124
      %4606 = vst.msk [vmem:[%s251 + $0x50] sm:$0xf] %vm4585, %v4133
      %4607 = vst.msk [vmem:[%s251 + $0x54] sm:$0xf] %vm4585, %v4142
      %4608 = vst.msk [vmem:[%s251 + $0x58] sm:$0xf] %vm4585, %v4151
      %4609 = vst.msk [vmem:[%s251 + $0x5c] sm:$0xf] %vm4585, %v4160
      %4610 = vst.msk [vmem:[%s251 + $0x60] sm:$0xf] %vm4585, %v4169
      %4611 = vst.msk [vmem:[%s251 + $0x64] sm:$0xf] %vm4585, %v4178
      %4612 = vst.msk [vmem:[%s251 + $0x68] sm:$0xf] %vm4585, %v4187
      %4613 = vst.msk [vmem:[%s251 + $0x6c] sm:$0xf] %vm4585, %v4196
      %4614 = vst.msk [vmem:[%s251 + $0x70] sm:$0xf] %vm4585, %v4205
      %4615 = vst.msk [vmem:[%s251 + $0x74] sm:$0xf] %vm4585, %v4214
      %4616 = vst.msk [vmem:[%s251 + $0x78] sm:$0xf] %vm4585, %v4223
      %4617 = vst.msk [vmem:[%s251 + $0x7c] sm:$0xf] %vm4585, %v4232
      %4618 = vst.msk [vmem:[%s251 + $0x80] sm:$0xf] %vm4585, %v4241
      %4619 = vst.msk [vmem:[%s251 + $0x84] sm:$0xf] %vm4585, %v4250
      %4620 = vst.msk [vmem:[%s251 + $0x88] sm:$0xf] %vm4585, %v4259
      %4621 = vst.msk [vmem:[%s251 + $0x8c] sm:$0xf] %vm4585, %v4268
      %4622 = vst.msk [vmem:[%s251 + $0x90] sm:$0xf] %vm4585, %v4277
      %4623 = vst.msk [vmem:[%s251 + $0x94] sm:$0xf] %vm4585, %v4286
      %4624 = vst.msk [vmem:[%s251 + $0x98] sm:$0xf] %vm4585, %v4295
      %4625 = vst.msk [vmem:[%s251 + $0x9c] sm:$0xf] %vm4585, %v4304
      %4626 = vst.msk [vmem:[%s251 + $0xa0] sm:$0xf] %vm4585, %v4313
      %4627 = vst.msk [vmem:[%s251 + $0xa4] sm:$0xf] %vm4585, %v4322
      %4628 = vst.msk [vmem:[%s251 + $0xa8] sm:$0xf] %vm4585, %v4331
      %4629 = vst.msk [vmem:[%s251 + $0xac] sm:$0xf] %vm4585, %v4340
      %4630 = vst.msk [vmem:[%s251 + $0xb0] sm:$0xf] %vm4585, %v4349
      %4631 = vst.msk [vmem:[%s251 + $0xb4] sm:$0xf] %vm4585, %v4358
      %4632 = vst.msk [vmem:[%s251 + $0xb8] sm:$0xf] %vm4585, %v4367
      %4633 = vst.msk [vmem:[%s251 + $0xbc] sm:$0xf] %vm4585, %v4376
      %4634 = vst.msk [vmem:[%s251 + $0xc0] sm:$0xf] %vm4585, %v4385
      %4635 = vst.msk [vmem:[%s251 + $0xc4] sm:$0xf] %vm4585, %v4394
      %4636 = vst.msk [vmem:[%s251 + $0xc8] sm:$0xf] %vm4585, %v4403
      %4637 = vst.msk [vmem:[%s251 + $0xcc] sm:$0xf] %vm4585, %v4412
      %4638 = vst.msk [vmem:[%s251 + $0xd0] sm:$0xf] %vm4585, %v4421
      %4639 = vst.msk [vmem:[%s251 + $0xd4] sm:$0xf] %vm4585, %v4430
      %4640 = vst.msk [vmem:[%s251 + $0xd8] sm:$0xf] %vm4585, %v4439
      %4641 = vst.msk [vmem:[%s251 + $0xdc] sm:$0xf] %vm4585, %v4448
      %4642 = vst.msk [vmem:[%s251 + $0xe0] sm:$0xf] %vm4585, %v4457
      %4643 = vst.msk [vmem:[%s251 + $0xe4] sm:$0xf] %vm4585, %v4466
      %4644 = vst.msk [vmem:[%s251 + $0xe8] sm:$0xf] %vm4585, %v4475
      %4645 = vst.msk [vmem:[%s251 + $0xec] sm:$0xf] %vm4585, %v4484
      %4646 = vst.msk [vmem:[%s251 + $0xf0] sm:$0xf] %vm4585, %v4493
      %4647 = vst.msk [vmem:[%s251 + $0xf4] sm:$0xf] %vm4585, %v4502
      %4648 = vst.msk [vmem:[%s251 + $0xf8] sm:$0xf] %vm4585, %v4511
      %4649 = vst.msk [vmem:[%s251 + $0xfc] sm:$0xf] %vm4585, %v4520
      %p4650 = scmp.lt.s32.totalorder %s17, 1
      %s4651 = scalar_select %p4650, %s17, 1
      %s4652 = smul.addr %s4651, 64
      %s4653 = smul.addr %s4652, 4
      %s4654 = scalar_lea.vmem %s6, %s4653
      // Predicated region
      $region45: #{dark_unit_forward.1} parent=43 // pred_check
        %p4655 = pneg %p166
      $region46: #{dark_unit_forward.1} parent=43 // pred_check_branch
        %4657 = sbr.rel (%p4655) target = $region48
      $region47: #{dark_unit_forward.1} parent=43 // pred_region
        _
      $region48: #{dark_unit_forward.1} parent=43 // pred_fallthru
        _
    $region44: #{dark_unit_forward.1} parent=5 // pred_fallthru
      _
    %p4658 = scmp.le.s32.totalorder 2, %s12
    // Predicated region
    $region49: #{dark_unit_forward.1} parent=5 // pred_check
      %p4659 = pneg %p4658
    $region50: #{dark_unit_forward.1} parent=5 // pred_check_branch
      %4661 = sbr.rel (%p4659) target = $region52
    $region51: #{dark_unit_forward.1} parent=5 // pred_region
      %s4662 = ssub.s32 %s12, 2
      // Predicated region
      $region53: #{dark_unit_forward.1} parent=51 // pred_check
        %p4663 = pneg %p172
      $region54: #{dark_unit_forward.1} parent=51 // pred_check_branch
        %4665 = sbr.rel (%p4663) target = $region56
      $region55: #{dark_unit_forward.1} parent=51 // pred_region
        %p4666 = scmp.lt.s32.totalorder %s18, 1
        %s4667 = scalar_select %p4666, %s18, 1
        %s4668 = smul.addr %s4667, 64
        %s4669 = smul.addr %s4668, 4
        %s4670 = scalar_lea.vmem %s6, %s4669
      $region56: #{dark_unit_forward.1} parent=51 // pred_fallthru
        _
    $region52: #{dark_unit_forward.1} parent=5 // pred_fallthru
      _
  $region6: #{dark_unit_forward.1} parent=0 // loop_footer
    %s16 = sadd.s32 1, %s12
  $region7: #{dark_unit_forward.1} parent=0 // loop_footer_branch
    %11 = sbr.rel target = $region3
  $region8: #{dark_unit_forward.1} parent=0 // loop_exit
    _

</llo_original>
